<compile_context>
chip_gen: v7x
topology: tpu7x:2x2x1
jax: 0.10.0
libtpu: 0.0.40
codegen_flags: <defaults>
</compile_context>

<pallas_src>
import functools

import jax
import jax.numpy as jnp
import numpy as np
from jax.experimental import pallas as pl
from jax.experimental.pallas import tpu as pltpu


def _round_up(x, m):
    return ((x + m - 1) // m) * m


def _pad2d(x, rows, cols):
    return jnp.pad(x, ((0, rows - x.shape[0]), (0, cols - x.shape[1])))


def _feature_conv_node_kernel(a_ref, f_ref, f_self_ref, loop_rel_ref,
                              w_stack_ref, o_ref, acc_ref):
    """Grid = (node tiles [parallel], aggregation-K tiles [arbitrary]).

    a_ref       : (2, tile_n, tile_k) bf16   stacked [A_out ; A_in] block
    f_ref       : (tile_k, D_pad)     bf16   [n_in ; r_full ; 0] K-block
    f_self_ref  : (tile_n, D_pad)     bf16   n_in rows of this node tile
    loop_rel_ref: (8, D_pad)          f32    loop_rel broadcast
    w_stack_ref : (3*D_pad, D_pad)    bf16   [W_O.T ; W_I.T ; W_S.T]
    o_ref       : (tile_n, D_pad)     f32    output block
    acc_ref     : (2*tile_n, D_pad)   f32    [X_out ; X_in] accumulator
    """
    k = pl.program_id(1)

    @pl.when(k == 0)
    def _init():
        acc_ref[...] = jnp.zeros_like(acc_ref)

    _, tn, tk = a_ref.shape
    # Collapse the direction axis into M: (2, tn, tk) -> (2*tn, tk).  tn is a
    # multiple of 8, so this is a sublane-aligned no-op relayout; one MXU dot
    # covers both the out-edge and in-edge aggregations (RHS pushed once).
    a_blk = a_ref[...].reshape(2 * tn, tk)
    acc_ref[...] += jnp.dot(a_blk, f_ref[...],
                            preferred_element_type=jnp.float32)

    @pl.when(k == pl.num_programs(1) - 1)
    def _finalize():
        d = w_stack_ref.shape[1]
        # Split the accumulator on a static, 8-aligned boundary (free slices).
        x_out = acc_ref[0:tn, :].astype(jnp.bfloat16)
        x_in = acc_ref[tn:2 * tn, :].astype(jnp.bfloat16)
        # Self-loop compose ('sub') in f32, cast only for the MXU.
        x_s = (f_self_ref[...].astype(jnp.float32)
               - loop_rel_ref[0:1, :]).astype(jnp.bfloat16)
        # Concat-free fused projection: three dots against static 128-aligned
        # slices of the stacked weight, summed into y (f32).
        y = jnp.dot(x_out, w_stack_ref[0:d, :],
                    preferred_element_type=jnp.float32)
        y += jnp.dot(x_in, w_stack_ref[d:2 * d, :],
                     preferred_element_type=jnp.float32)
        y += jnp.dot(x_s, w_stack_ref[2 * d:3 * d, :],
                     preferred_element_type=jnp.float32)
        # dropout(p=0) is identity; no batchnorm.  Epilogue stays f32.
        o_ref[...] = jnp.tanh(y * (1.0 / 3.0))


@functools.partial(jax.jit, static_argnames=("tile_n", "tile_k"))
def feature_conv_forward(params, graph, n_in_feats, r_feats,
                         *, tile_n=256, tile_k=1024):
    """comp_fn='sub', batchnorm=False, dropout=0.0 (eval/identity).

    Tiling (kernel is HBM-bound, AI ~= D_pad flops/byte on the A stream):
      * tile_n multiple of 8, tile_k multiple of 128.
      * v5e/v6e (128 MiB VMEM): tile_n 256-512, tile_k 1024-2048 (v5e can push
        tile_k to 4096); v7x (64 MiB VMEM): tile_n 256, tile_k 512-1024.
      * On v7x keep N_pad/tile_n an even count >= 2 so the "parallel" node axis
        load-balances across its 2 TensorCores.
      * If a trace shows exposed DMA between K steps, add
        pipeline_mode=pl.Buffered(3) to the A/f BlockSpecs.
    """
    W_O, W_I, W_S, W_R = params["W_O"], params["W_I"], params["W_S"], params["W_R"]
    loop_rel = params["loop_rel"]                            # (1, D)
    src, dst = graph["src"], graph["dst"]                    # (E,), (E,)
    etype, norm = graph["etype"], graph["norm"]              # (E,), (E, 1)
    in_mask, out_mask = graph["in_mask"], graph["out_mask"]  # (E, 1) float

    N, D = n_in_feats.shape
    R = r_feats.shape[0]
    R1 = R + 1
    f32, bf16 = jnp.float32, jnp.bfloat16

    D_pad = _round_up(D, 128)                 # lane-dense feature dim
    N_pad = _round_up(N, tile_n)
    K_agg = _round_up(N_pad + R1, tile_k)     # aggregation (reduction) dim
    pad_cols = K_agg - (N_pad + R1)

    # r_feats <- cat(r_feats, loop_rel)
    r_full = jnp.concatenate([r_feats, loop_rel], axis=0)    # (R1, D)

    # --- glue: sparse-to-dense aggregation operands (masks + norm folded,
    #     f32 scatter for exact multigraph accumulation, single bf16 cast).
    #     comp_h = n_in[src] - norm * r_full[etype]  =>  relation block enters
    #     with a minus sign.  NOTE: bf16 quantizes norms / multiplicities>256.
    om, im, nm = out_mask[:, 0], in_mask[:, 0], norm[:, 0]
    a_out_nodes = jnp.zeros((N_pad, N_pad), f32).at[dst, src].add(om)
    a_in_nodes = jnp.zeros((N_pad, N_pad), f32).at[dst, src].add(im)
    a_out_rel = jnp.zeros((N_pad, R1), f32).at[dst, etype].add(om * nm)
    a_in_rel = jnp.zeros((N_pad, R1), f32).at[dst, etype].add(im * nm)
    zcols = jnp.zeros((N_pad, pad_cols), f32)
    a_out = jnp.concatenate([a_out_nodes, -a_out_rel, zcols], axis=1)
    a_in = jnp.concatenate([a_in_nodes, -a_in_rel, zcols], axis=1)
    a_stack = jnp.stack([a_out, a_in], axis=0).astype(bf16)  # (2, N_pad, K_agg)

    # Combined feature operand [n_in ; r_full ; 0], lane-padded to D_pad.
    # Its first N_pad rows double as the per-node-tile self block (passed twice
    # with different BlockSpecs), so no separate n_in array is materialized.
    f_mat = jnp.concatenate(
        [_pad2d(n_in_feats, N_pad, D_pad),
         _pad2d(r_full, R1, D_pad),
         jnp.zeros((pad_cols, D_pad), f32)], axis=0).astype(bf16)  # (K_agg, Dp)

    # Pre-transposed, stacked projection weights: [W_O.T ; W_I.T ; W_S.T].
    def _wt(W):
        return _pad2d(W.T, D_pad, D_pad)
    w_stack = jnp.concatenate([_wt(W_O), _wt(W_I), _wt(W_S)],
                              axis=0).astype(bf16)                 # (3*Dp, Dp)

    loop_rel_b = jnp.broadcast_to(_pad2d(loop_rel, 1, D_pad), (8, D_pad))

    grid = (N_pad // tile_n, K_agg // tile_k)

    n_out_pad = pl.pallas_call(
        _feature_conv_node_kernel,
        out_shape=jax.ShapeDtypeStruct((N_pad, D_pad), jnp.float32),
        grid_spec=pltpu.PrefetchScalarGridSpec(
            num_scalar_prefetch=0,
            grid=grid,
            in_specs=[
                # Stacked [A_out ; A_in] block -> one fused M=2*tile_n dot.
                pl.BlockSpec((2, tile_n, tile_k), lambda i, k: (0, i, k)),
                pl.BlockSpec((tile_k, D_pad), lambda i, k: (k, 0)),     # [n_in;r_full]
                pl.BlockSpec((tile_n, D_pad), lambda i, k: (i, 0)),     # self block
                pl.BlockSpec((8, D_pad), lambda i, k: (0, 0)),          # loop_rel
                pl.BlockSpec((3 * D_pad, D_pad), lambda i, k: (0, 0)),  # W stack
            ],
            out_specs=pl.BlockSpec((tile_n, D_pad), lambda i, k: (i, 0)),
            scratch_shapes=[pltpu.VMEM((2 * tile_n, D_pad), jnp.float32)],
        ),
        compiler_params=pltpu.CompilerParams(
            dimension_semantics=("parallel", "arbitrary"),
            # <= ~48 MiB is safe on v7x (64 MiB physical) and ample for the
            # default tiles (~3 MiB); raise to 64-96 MiB on v5e/v6e only if
            # pushing tile_k to 2048-4096.
            vmem_limit_bytes=48 * 1024 * 1024,
        ),
    )(a_stack, f_mat, f_mat, loop_rel_b, w_stack)

    n_out_feats = n_out_pad[:N, :D]

    # W_R(cat(r_feats, loop_rel))[:-1] == W_R(r_feats): tiny [R,D]@[D,D] matmul,
    # deferred to XLA instead of paying a second pallas_call launch.
    r_out_feats = r_feats @ W_R.T

    return n_out_feats, r_out_feats


def feature_conv_reference(params, graph, n_in_feats, r_feats):
    """Pure-JAX f32 reference mirroring the PyTorch forward (comp_fn='sub')."""
    W_O, W_I, W_S, W_R = params["W_O"], params["W_I"], params["W_S"], params["W_R"]
    loop_rel = params["loop_rel"]
    src, dst = graph["src"], graph["dst"]
    etype, norm = graph["etype"], graph["norm"]
    in_mask, out_mask = graph["in_mask"], graph["out_mask"]
    N, D = n_in_feats.shape

    r_full = jnp.concatenate([r_feats, loop_rel], axis=0)
    e_h = r_full[etype] * norm
    comp_h = n_in_feats[src] - e_h
    h_o = comp_h @ W_O.T
    h_i = comp_h @ W_I.T
    new_comp_h = out_mask * h_o + in_mask * h_i   # masks disjoint (CompGCN)
    comp_edge = jax.ops.segment_sum(new_comp_h, dst, num_segments=N)
    comp_h_s = n_in_feats - r_full[-1]
    n_out = jnp.tanh((comp_h_s @ W_S.T + comp_edge) * (1.0 / 3.0))
    r_out = (r_full @ W_R.T)[:-1]
    return n_out, r_out


def _make_problem(seed, N, E, R, D):
    key = jax.random.PRNGKey(seed)
    keys = jax.random.split(key, 12)

    def linear_w(k):
        bound = 1.0 / np.sqrt(D)
        return jax.random.uniform(k, (D, D), jnp.float32, -bound, bound)

    params = {
        "W_O": linear_w(keys[0]),
        "W_I": linear_w(keys[1]),
        "W_S": linear_w(keys[2]),
        "W_R": linear_w(keys[3]),
        # xavier_normal_ for (1, D): std = sqrt(2 / (1 + D))
        "loop_rel": jax.random.normal(keys[4], (1, D), jnp.float32)
                    * np.sqrt(2.0 / (1.0 + D)),
    }
    src = jax.random.randint(keys[5], (E,), 0, N)
    dst = jax.random.randint(keys[6], (E,), 0, N)
    etype = jax.random.randint(keys[7], (E,), 0, R)
    norm = jax.random.uniform(keys[8], (E, 1), jnp.float32, 0.1, 1.0)
    eid = jnp.arange(E)
    in_mask = (eid % 2 == 0).astype(jnp.float32)[:, None]   # disjoint masks,
    out_mask = (eid % 2 == 1).astype(jnp.float32)[:, None]  # as in CompGCN
    graph = {"src": src, "dst": dst, "etype": etype, "norm": norm,
             "in_mask": in_mask, "out_mask": out_mask}
    n_in_feats = jax.random.normal(keys[9], (N, D), jnp.float32)
    r_feats = jax.random.normal(keys[10], (R, D), jnp.float32)
    return params, graph, n_in_feats, r_feats


def _run_and_check(params, graph, n_in_feats, r_feats, **tiles):
    n_out, r_out = feature_conv_forward(params, graph, n_in_feats, r_feats,
                                        **tiles)
    jax.block_until_ready((n_out, r_out))
    n_ref, r_ref = feature_conv_reference(params, graph, n_in_feats, r_feats)
    # bf16 MXU operands (f32 accumulation) -> loosened tolerance on node output.
    np.testing.assert_allclose(np.asarray(n_out), np.asarray(n_ref),
                               rtol=3e-2, atol=3e-2)
    np.testing.assert_allclose(np.asarray(r_out), np.asarray(r_ref),
                               rtol=1e-4, atol=1e-4)


if __name__ == "__main__":
    # Test 1: tiny problem, production-default tiles (single-block grid).
    params, graph, n_in_feats, r_feats = _make_problem(0, N=16, E=32, R=4, D=32)
    _run_and_check(params, graph, n_in_feats, r_feats)

    # Test 2: moderate problem with explicit small tiles so both grid axes have
    # multiple steps (exercises the accumulator init/finalize and the parallel
    # node-tile axis).
    params2, graph2, n_in2, r_feats2 = _make_problem(1, N=200, E=600, R=6, D=48)
    _run_and_check(params2, graph2, n_in2, r_feats2, tile_n=64, tile_k=128)

    print("KERNEL_OK")
</pallas_src>

<mosaic_0001>
module attributes {stable_mosaic.version = 11 : i64} {
  func.func private @main(%arg0: i32) attributes {dimension_semantics = [#tpu.dimension_semantics<core_parallel>], iteration_bounds = array<i64: 2>, tpu.core_type = #tpu.core_type<sc_scalar_subcore>, window_params = []} {
    return
  }
}

module attributes {stable_mosaic.version = 11 : i64} {
  func.func private @main(%arg0: i32) attributes {dimension_semantics = [#tpu.dimension_semantics<core_parallel>], iteration_bounds = array<i64: 2>, tpu.core_type = #tpu.core_type<sc_scalar_subcore>, window_params = []} {
    return
  }
}

module attributes {stable_mosaic.version = 11 : i64} {
  func.func @_feature_conv_node_kernel(%arg0: i32, %arg1: i32, %arg2: memref<2x256x1024xbf16, #tpu.memory_space<vmem>>, %arg3: memref<1024x128xbf16, #tpu.memory_space<vmem>>, %arg4: memref<256x128xbf16, #tpu.memory_space<vmem>>, %arg5: memref<8x128xf32, #tpu.memory_space<vmem>>, %arg6: memref<384x128xbf16, #tpu.memory_space<vmem>>, %arg7: memref<256x128xf32, #tpu.memory_space<vmem>>, %arg8: memref<512x128xf32, #tpu.memory_space<vmem>>) attributes {dimension_semantics = [#tpu.dimension_semantics<parallel>, #tpu.dimension_semantics<arbitrary>], iteration_bounds = array<i64: 1, 1>, scalar_prefetch = 0 : i64, scratch_operands = 1 : i64, tpu.core_type = #tpu.core_type<tc>, window_params = [{transform_indices = @transform_0, window_bounds = array<i64: 2, 256, 1024>}, {transform_indices = @transform_1, window_bounds = array<i64: 1024, 128>}, {transform_indices = @transform_2, window_bounds = array<i64: 256, 128>}, {pipeline_mode = #tpu.pipeline_mode<synchronous>, transform_indices = @transform_3, window_bounds = array<i64: 8, 128>}, {pipeline_mode = #tpu.pipeline_mode<synchronous>, transform_indices = @transform_4, window_bounds = array<i64: 384, 128>}, {transform_indices = @transform_5, window_bounds = array<i64: 256, 128>}]} {
    %c0_i32 = arith.constant 0 : i32
    %0 = arith.cmpi eq, %arg1, %c0_i32 : i32
    %1 = arith.extui %0 : i1 to i32
    %c0_i32_0 = arith.constant 0 : i32
    %2 = arith.cmpi ne, %1, %c0_i32_0 : i32
    scf.if %2 {
      %cst_11 = arith.constant 0.000000e+00 : f32
      %13 = vector.broadcast %cst_11 : f32 to vector<512x128xf32>
      %c0_12 = arith.constant 0 : index
      %c0_13 = arith.constant 0 : index
      %14 = vector.load %arg8[%c0_12, %c0_13] : memref<512x128xf32, #tpu.memory_space<vmem>>, vector<512x128xf32>
      tpu.vector_store %arg8[%c0_12, %c0_13], %13 {strides = array<i32>} : memref<512x128xf32, #tpu.memory_space<vmem>>, vector<512x128xf32>,
    } else {
    }
    %c0 = arith.constant 0 : index
    %c0_1 = arith.constant 0 : index
    %c0_2 = arith.constant 0 : index
    %3 = vector.load %arg2[%c0, %c0_1, %c0_2] : memref<2x256x1024xbf16, #tpu.memory_space<vmem>>, vector<2x256x1024xbf16>
    %4 = vector.shape_cast %3 : vector<2x256x1024xbf16> to vector<512x1024xbf16>
    %c0_3 = arith.constant 0 : index
    %c0_4 = arith.constant 0 : index
    %5 = vector.load %arg8[%c0_3, %c0_4] : memref<512x128xf32, #tpu.memory_space<vmem>>, vector<512x128xf32>
    %c0_5 = arith.constant 0 : index
    %c0_6 = arith.constant 0 : index
    %6 = vector.load %arg3[%c0_5, %c0_6] : memref<1024x128xbf16, #tpu.memory_space<vmem>>, vector<1024x128xbf16>
    %cst = arith.constant dense<0.000000e+00> : vector<512x128xf32>
    %7 = tpu.matmul %4, %6, %cst {dimension_numbers = #tpu.dot_dimension_numbers<[1], [0], [0], [1], [0, 0, 1, 1], [], []>} : vector<512x1024xbf16>, vector<1024x128xbf16>, vector<512x128xf32> -> vector<512x128xf32>
    %8 = arith.addf %5, %7 : vector<512x128xf32>
    %c0_7 = arith.constant 0 : index
    %c0_8 = arith.constant 0 : index
    %9 = vector.load %arg8[%c0_7, %c0_8] : memref<512x128xf32, #tpu.memory_space<vmem>>, vector<512x128xf32>
    tpu.vector_store %arg8[%c0_7, %c0_8], %8 {strides = array<i32>} : memref<512x128xf32, #tpu.memory_space<vmem>>, vector<512x128xf32>,
    %c0_i32_9 = arith.constant 0 : i32
    %10 = arith.cmpi eq, %arg1, %c0_i32_9 : i32
    %11 = arith.extui %10 : i1 to i32
    %c0_i32_10 = arith.constant 0 : i32
    %12 = arith.cmpi ne, %11, %c0_i32_10 : i32
    scf.if %12 {
      %c0_11 = arith.constant 0 : index
      %c0_12 = arith.constant 0 : index
      %13 = vector.load %arg8[%c0_11, %c0_12] : memref<512x128xf32, #tpu.memory_space<vmem>>, vector<256x128xf32>
      %14 = arith.truncf %13 : vector<256x128xf32> to vector<256x128xbf16>
      %c256 = arith.constant 256 : index
      %c0_13 = arith.constant 0 : index
      %15 = vector.load %arg8[%c256, %c0_13] : memref<512x128xf32, #tpu.memory_space<vmem>>, vector<256x128xf32>
      %16 = arith.truncf %15 : vector<256x128xf32> to vector<256x128xbf16>
      %c0_14 = arith.constant 0 : index
      %c0_15 = arith.constant 0 : index
      %17 = vector.load %arg4[%c0_14, %c0_15] : memref<256x128xbf16, #tpu.memory_space<vmem>>, vector<256x128xbf16>
      %18 = arith.extf %17 : vector<256x128xbf16> to vector<256x128xf32>
      %c0_16 = arith.constant 0 : index
      %c0_17 = arith.constant 0 : index
      %19 = vector.load %arg5[%c0_16, %c0_17] : memref<8x128xf32, #tpu.memory_space<vmem>>, vector<1x128xf32>
      %20 = vector.broadcast %19 : vector<1x128xf32> to vector<256x128xf32>
      %21 = arith.subf %18, %20 : vector<256x128xf32>
      %22 = arith.truncf %21 : vector<256x128xf32> to vector<256x128xbf16>
      %c0_18 = arith.constant 0 : index
      %c0_19 = arith.constant 0 : index
      %23 = vector.load %arg6[%c0_18, %c0_19] : memref<384x128xbf16, #tpu.memory_space<vmem>>, vector<128x128xbf16>
      %cst_20 = arith.constant dense<0.000000e+00> : vector<256x128xf32>
      %24 = tpu.matmul %14, %23, %cst_20 {dimension_numbers = #tpu.dot_dimension_numbers<[1], [0], [0], [1], [0, 0, 1, 1], [], []>} : vector<256x128xbf16>, vector<128x128xbf16>, vector<256x128xf32> -> vector<256x128xf32>
      %c128 = arith.constant 128 : index
      %c0_21 = arith.constant 0 : index
      %25 = vector.load %arg6[%c128, %c0_21] : memref<384x128xbf16, #tpu.memory_space<vmem>>, vector<128x128xbf16>
      %cst_22 = arith.constant dense<0.000000e+00> : vector<256x128xf32>
      %26 = tpu.matmul %16, %25, %cst_22 {dimension_numbers = #tpu.dot_dimension_numbers<[1], [0], [0], [1], [0, 0, 1, 1], [], []>} : vector<256x128xbf16>, vector<128x128xbf16>, vector<256x128xf32> -> vector<256x128xf32>
      %27 = arith.addf %24, %26 : vector<256x128xf32>
      %c256_23 = arith.constant 256 : index
      %c0_24 = arith.constant 0 : index
      %28 = vector.load %arg6[%c256_23, %c0_24] : memref<384x128xbf16, #tpu.memory_space<vmem>>, vector<128x128xbf16>
      %cst_25 = arith.constant dense<0.000000e+00> : vector<256x128xf32>
      %29 = tpu.matmul %22, %28, %cst_25 {dimension_numbers = #tpu.dot_dimension_numbers<[1], [0], [0], [1], [0, 0, 1, 1], [], []>} : vector<256x128xbf16>, vector<128x128xbf16>, vector<256x128xf32> -> vector<256x128xf32>
      %30 = arith.addf %27, %29 : vector<256x128xf32>
      %cst_26 = arith.constant 0.333333343 : f32
      %31 = vector.broadcast %cst_26 : f32 to vector<256x128xf32>
      %32 = arith.mulf %30, %31 : vector<256x128xf32>
      %33 = math.tanh %32 : vector<256x128xf32>
      %c0_27 = arith.constant 0 : index
      %c0_28 = arith.constant 0 : index
      %34 = vector.load %arg7[%c0_27, %c0_28] : memref<256x128xf32, #tpu.memory_space<vmem>>, vector<256x128xf32>
      tpu.vector_store %arg7[%c0_27, %c0_28], %33 {strides = array<i32>} : memref<256x128xf32, #tpu.memory_space<vmem>>, vector<256x128xf32>,
    } else {
    }
    return
  }
  func.func @transform_0(%arg0: i32, %arg1: i32) -> (i32, i32, i32) {
    %c0_i32 = arith.constant 0 : i32
    %c0_i32_0 = arith.constant 0 : i32
    return %c0_i32, %arg0, %arg1 : i32, i32, i32
  }
  func.func @transform_1(%arg0: i32, %arg1: i32) -> (i32, i32) {
    %c0_i32 = arith.constant 0 : i32
    %c0_i32_0 = arith.constant 0 : i32
    return %arg1, %c0_i32 : i32, i32
  }
  func.func @transform_2(%arg0: i32, %arg1: i32) -> (i32, i32) {
    %c0_i32 = arith.constant 0 : i32
    %c0_i32_0 = arith.constant 0 : i32
    return %arg0, %c0_i32 : i32, i32
  }
  func.func @transform_3(%arg0: i32, %arg1: i32) -> (i32, i32) {
    %c0_i32 = arith.constant 0 : i32
    %c0_i32_0 = arith.constant 0 : i32
    %c0_i32_1 = arith.constant 0 : i32
    return %c0_i32, %c0_i32_0 : i32, i32
  }
  func.func @transform_4(%arg0: i32, %arg1: i32) -> (i32, i32) {
    %c0_i32 = arith.constant 0 : i32
    %c0_i32_0 = arith.constant 0 : i32
    %c0_i32_1 = arith.constant 0 : i32
    return %c0_i32, %c0_i32_0 : i32, i32
  }
  func.func @transform_5(%arg0: i32, %arg1: i32) -> (i32, i32) {
    %c0_i32 = arith.constant 0 : i32
    %c0_i32_0 = arith.constant 0 : i32
    return %arg0, %c0_i32 : i32, i32
  }
}

</mosaic_0001>

<llo_original>
// kernel: feature_conv_forward.1
$region0: #{feature_conv_forward.1}
  #allocation0 [shape = 'u32[]', space=smem, size = 0x4, offset = 0x4, fixed_abs, tag = 'smem constant byte address 0x4 - core index']
  #allocation1 [shape = 'u32[144,128]{1,0:T(1,128)}', space=vmem, size = 0x12000, scoped, tag = 'internal scratch']
  #allocation2 [shape = 'f32[512,128]{1,0:T(8,128)}', space=vmem, size = 0x40000, scoped, tag = 'scratch operand']
  %s0 = inlined_call_operand.vmem [shape: bf16[2,256,1024], index: 0, kind: input, shape index: {}]
  %s1 = inlined_call_operand.vmem [shape: bf16[1024,128], index: 1, kind: input, shape index: {}, may-alias: {1,2}]
  %s2 = inlined_call_operand.vmem [shape: bf16[1024,128], index: 2, kind: input, shape index: {}, may-alias: {1,2}]
  %s3 = inlined_call_operand.vmem [shape: f32[8,128], index: 3, kind: input, shape index: {}]
  %s4 = inlined_call_operand.vmem [shape: bf16[384,128], index: 4, kind: input, shape index: {}]
  %s5 = inlined_call_operand.vmem [shape: f32[256,128], index: 5, kind: output, shape index: {}]
  %s6 = sld [smem:[#allocation0]]
  $region38: #{feature_conv_forward.1} parent=0
    _
  %s8 = ssub.s32 1, %s6
  %s9 = scalar_select 0, %s8, %s6
  // Predicated region
  $region2: #{feature_conv_forward.1} parent=0 // pred_check
    _
  $region3: #{feature_conv_forward.1} parent=0 // pred_check_branch
    %11 = sbr.rel (0) target = $region5
  $region4: #{feature_conv_forward.1} parent=0 // pred_region
    _
  $region5: #{feature_conv_forward.1} parent=0 // pred_fallthru
    _
  // Predicated region
  $region6: #{feature_conv_forward.1} parent=0 // pred_check
    _
  $region7: #{feature_conv_forward.1} parent=0 // pred_check_branch
    %13 = sbr.rel (0) target = $region9
  $region8: #{feature_conv_forward.1} parent=0 // pred_region
    _
  $region9: #{feature_conv_forward.1} parent=0 // pred_fallthru
    _
  // Predicated region
  $region10: #{feature_conv_forward.1} parent=0 // pred_check
    _
  $region11: #{feature_conv_forward.1} parent=0 // pred_check_branch
    %15 = sbr.rel (0) target = $region13
  $region12: #{feature_conv_forward.1} parent=0 // pred_region
    _
  $region13: #{feature_conv_forward.1} parent=0 // pred_fallthru
    _
  // Predicated region
  $region14: #{feature_conv_forward.1} parent=0 // pred_check
    _
  $region15: #{feature_conv_forward.1} parent=0 // pred_check_branch
    %17 = sbr.rel (0) target = $region17
  $region16: #{feature_conv_forward.1} parent=0 // pred_region
    _
  $region17: #{feature_conv_forward.1} parent=0 // pred_fallthru
    _
  // Predicated region
  $region18: #{feature_conv_forward.1} parent=0 // pred_check
    _
  $region19: #{feature_conv_forward.1} parent=0 // pred_check_branch
    %19 = sbr.rel (0) target = $region21
  $region20: #{feature_conv_forward.1} parent=0 // pred_region
    _
  $region21: #{feature_conv_forward.1} parent=0 // pred_fallthru
    _
  %p21 = scmp.eq.s32.totalorder 0, 0
  // Predicated region
  $region22: #{feature_conv_forward.1} parent=0 // pred_check
    %p22 = pneg %p21
  $region23: #{feature_conv_forward.1} parent=0 // pred_check_branch
    %24 = sbr.rel (%p22) target = $region25
  $region24: #{feature_conv_forward.1} parent=0 // pred_region
    %25 = vst [vmem:[#allocation2] sm:$0xff] 0.0
    %26 = vst [vmem:[#allocation2 + $0x8] sm:$0xff] 0.0
    %27 = vst [vmem:[#allocation2 + $0x10] sm:$0xff] 0.0
    %28 = vst [vmem:[#allocation2 + $0x18] sm:$0xff] 0.0
    %29 = vst [vmem:[#allocation2 + $0x20] sm:$0xff] 0.0
    %30 = vst [vmem:[#allocation2 + $0x28] sm:$0xff] 0.0
    %31 = vst [vmem:[#allocation2 + $0x30] sm:$0xff] 0.0
    %32 = vst [vmem:[#allocation2 + $0x38] sm:$0xff] 0.0
    %33 = vst [vmem:[#allocation2 + $0x40] sm:$0xff] 0.0
    %34 = vst [vmem:[#allocation2 + $0x48] sm:$0xff] 0.0
    %35 = vst [vmem:[#allocation2 + $0x50] sm:$0xff] 0.0
    %36 = vst [vmem:[#allocation2 + $0x58] sm:$0xff] 0.0
    %37 = vst [vmem:[#allocation2 + $0x60] sm:$0xff] 0.0
    %38 = vst [vmem:[#allocation2 + $0x68] sm:$0xff] 0.0
    %39 = vst [vmem:[#allocation2 + $0x70] sm:$0xff] 0.0
    %40 = vst [vmem:[#allocation2 + $0x78] sm:$0xff] 0.0
    %41 = vst [vmem:[#allocation2 + $0x80] sm:$0xff] 0.0
    %42 = vst [vmem:[#allocation2 + $0x88] sm:$0xff] 0.0
    %43 = vst [vmem:[#allocation2 + $0x90] sm:$0xff] 0.0
    %44 = vst [vmem:[#allocation2 + $0x98] sm:$0xff] 0.0
    %45 = vst [vmem:[#allocation2 + $0xa0] sm:$0xff] 0.0
    %46 = vst [vmem:[#allocation2 + $0xa8] sm:$0xff] 0.0
    %47 = vst [vmem:[#allocation2 + $0xb0] sm:$0xff] 0.0
    %48 = vst [vmem:[#allocation2 + $0xb8] sm:$0xff] 0.0
    %49 = vst [vmem:[#allocation2 + $0xc0] sm:$0xff] 0.0
    %50 = vst [vmem:[#allocation2 + $0xc8] sm:$0xff] 0.0
    %51 = vst [vmem:[#allocation2 + $0xd0] sm:$0xff] 0.0
    %52 = vst [vmem:[#allocation2 + $0xd8] sm:$0xff] 0.0
    %53 = vst [vmem:[#allocation2 + $0xe0] sm:$0xff] 0.0
    %54 = vst [vmem:[#allocation2 + $0xe8] sm:$0xff] 0.0
    %55 = vst [vmem:[#allocation2 + $0xf0] sm:$0xff] 0.0
    %56 = vst [vmem:[#allocation2 + $0xf8] sm:$0xff] 0.0
    %57 = vst [vmem:[#allocation2 + $0x100] sm:$0xff] 0.0
    %58 = vst [vmem:[#allocation2 + $0x108] sm:$0xff] 0.0
    %59 = vst [vmem:[#allocation2 + $0x110] sm:$0xff] 0.0
    %60 = vst [vmem:[#allocation2 + $0x118] sm:$0xff] 0.0
    %61 = vst [vmem:[#allocation2 + $0x120] sm:$0xff] 0.0
    %62 = vst [vmem:[#allocation2 + $0x128] sm:$0xff] 0.0
    %63 = vst [vmem:[#allocation2 + $0x130] sm:$0xff] 0.0
    %64 = vst [vmem:[#allocation2 + $0x138] sm:$0xff] 0.0
    %65 = vst [vmem:[#allocation2 + $0x140] sm:$0xff] 0.0
    %66 = vst [vmem:[#allocation2 + $0x148] sm:$0xff] 0.0
    %67 = vst [vmem:[#allocation2 + $0x150] sm:$0xff] 0.0
    %68 = vst [vmem:[#allocation2 + $0x158] sm:$0xff] 0.0
    %69 = vst [vmem:[#allocation2 + $0x160] sm:$0xff] 0.0
    %70 = vst [vmem:[#allocation2 + $0x168] sm:$0xff] 0.0
    %71 = vst [vmem:[#allocation2 + $0x170] sm:$0xff] 0.0
    %72 = vst [vmem:[#allocation2 + $0x178] sm:$0xff] 0.0
    %73 = vst [vmem:[#allocation2 + $0x180] sm:$0xff] 0.0
    %74 = vst [vmem:[#allocation2 + $0x188] sm:$0xff] 0.0
    %75 = vst [vmem:[#allocation2 + $0x190] sm:$0xff] 0.0
    %76 = vst [vmem:[#allocation2 + $0x198] sm:$0xff] 0.0
    %77 = vst [vmem:[#allocation2 + $0x1a0] sm:$0xff] 0.0
    %78 = vst [vmem:[#allocation2 + $0x1a8] sm:$0xff] 0.0
    %79 = vst [vmem:[#allocation2 + $0x1b0] sm:$0xff] 0.0
    %80 = vst [vmem:[#allocation2 + $0x1b8] sm:$0xff] 0.0
    %81 = vst [vmem:[#allocation2 + $0x1c0] sm:$0xff] 0.0
    %82 = vst [vmem:[#allocation2 + $0x1c8] sm:$0xff] 0.0
    %83 = vst [vmem:[#allocation2 + $0x1d0] sm:$0xff] 0.0
    %84 = vst [vmem:[#allocation2 + $0x1d8] sm:$0xff] 0.0
    %85 = vst [vmem:[#allocation2 + $0x1e0] sm:$0xff] 0.0
    %86 = vst [vmem:[#allocation2 + $0x1e8] sm:$0xff] 0.0
    %87 = vst [vmem:[#allocation2 + $0x1f0] sm:$0xff] 0.0
    %88 = vst [vmem:[#allocation2 + $0x1f8] sm:$0xff] 0.0
  $region25: #{feature_conv_forward.1} parent=0 // pred_fallthru
    _
  %v89 = vld [vmem:[%s0] sm:$0xff]
  %v90 = vld [vmem:[%s0 + $0x8] sm:$0xff]
  %v91 = vld [vmem:[%s0 + $0x10] sm:$0xff]
  %v92 = vld [vmem:[%s0 + $0x18] sm:$0xff]
  %v93 = vld [vmem:[%s0 + $0x20] sm:$0xff]
  %v94 = vld [vmem:[%s0 + $0x28] sm:$0xff]
  %v95 = vld [vmem:[%s0 + $0x30] sm:$0xff]
  %v96 = vld [vmem:[%s0 + $0x38] sm:$0xff]
  %v97 = vld [vmem:[%s0 + $0x40] sm:$0xff]
  %v98 = vld [vmem:[%s0 + $0x48] sm:$0xff]
  %v99 = vld [vmem:[%s0 + $0x50] sm:$0xff]
  %v100 = vld [vmem:[%s0 + $0x58] sm:$0xff]
  %v101 = vld [vmem:[%s0 + $0x60] sm:$0xff]
  %v102 = vld [vmem:[%s0 + $0x68] sm:$0xff]
  %v103 = vld [vmem:[%s0 + $0x70] sm:$0xff]
  %v104 = vld [vmem:[%s0 + $0x78] sm:$0xff]
  %v105 = vld [vmem:[%s0 + $0x80] sm:$0xff]
  %v106 = vld [vmem:[%s0 + $0x88] sm:$0xff]
  %v107 = vld [vmem:[%s0 + $0x90] sm:$0xff]
  %v108 = vld [vmem:[%s0 + $0x98] sm:$0xff]
  %v109 = vld [vmem:[%s0 + $0xa0] sm:$0xff]
  %v110 = vld [vmem:[%s0 + $0xa8] sm:$0xff]
  %v111 = vld [vmem:[%s0 + $0xb0] sm:$0xff]
  %v112 = vld [vmem:[%s0 + $0xb8] sm:$0xff]
  %v113 = vld [vmem:[%s0 + $0xc0] sm:$0xff]
  %v114 = vld [vmem:[%s0 + $0xc8] sm:$0xff]
  %v115 = vld [vmem:[%s0 + $0xd0] sm:$0xff]
  %v116 = vld [vmem:[%s0 + $0xd8] sm:$0xff]
  %v117 = vld [vmem:[%s0 + $0xe0] sm:$0xff]
  %v118 = vld [vmem:[%s0 + $0xe8] sm:$0xff]
  %v119 = vld [vmem:[%s0 + $0xf0] sm:$0xff]
  %v120 = vld [vmem:[%s0 + $0xf8] sm:$0xff]
  %v121 = vld [vmem:[%s0 + $0x100] sm:$0xff]
  %v122 = vld [vmem:[%s0 + $0x108] sm:$0xff]
  %v123 = vld [vmem:[%s0 + $0x110] sm:$0xff]
  %v124 = vld [vmem:[%s0 + $0x118] sm:$0xff]
  %v125 = vld [vmem:[%s0 + $0x120] sm:$0xff]
  %v126 = vld [vmem:[%s0 + $0x128] sm:$0xff]
  %v127 = vld [vmem:[%s0 + $0x130] sm:$0xff]
  %v128 = vld [vmem:[%s0 + $0x138] sm:$0xff]
  %v129 = vld [vmem:[%s0 + $0x140] sm:$0xff]
  %v130 = vld [vmem:[%s0 + $0x148] sm:$0xff]
  %v131 = vld [vmem:[%s0 + $0x150] sm:$0xff]
  %v132 = vld [vmem:[%s0 + $0x158] sm:$0xff]
  %v133 = vld [vmem:[%s0 + $0x160] sm:$0xff]
  %v134 = vld [vmem:[%s0 + $0x168] sm:$0xff]
  %v135 = vld [vmem:[%s0 + $0x170] sm:$0xff]
  %v136 = vld [vmem:[%s0 + $0x178] sm:$0xff]
  %v137 = vld [vmem:[%s0 + $0x180] sm:$0xff]
  %v138 = vld [vmem:[%s0 + $0x188] sm:$0xff]
  %v139 = vld [vmem:[%s0 + $0x190] sm:$0xff]
  %v140 = vld [vmem:[%s0 + $0x198] sm:$0xff]
  %v141 = vld [vmem:[%s0 + $0x1a0] sm:$0xff]
  %v142 = vld [vmem:[%s0 + $0x1a8] sm:$0xff]
  %v143 = vld [vmem:[%s0 + $0x1b0] sm:$0xff]
  %v144 = vld [vmem:[%s0 + $0x1b8] sm:$0xff]
  %v145 = vld [vmem:[%s0 + $0x1c0] sm:$0xff]
  %v146 = vld [vmem:[%s0 + $0x1c8] sm:$0xff]
  %v147 = vld [vmem:[%s0 + $0x1d0] sm:$0xff]
  %v148 = vld [vmem:[%s0 + $0x1d8] sm:$0xff]
  %v149 = vld [vmem:[%s0 + $0x1e0] sm:$0xff]
  %v150 = vld [vmem:[%s0 + $0x1e8] sm:$0xff]
  %v151 = vld [vmem:[%s0 + $0x1f0] sm:$0xff]
  %v152 = vld [vmem:[%s0 + $0x1f8] sm:$0xff]
  %v153 = vld [vmem:[%s0 + $0x200] sm:$0xff]
  %v154 = vld [vmem:[%s0 + $0x208] sm:$0xff]
  %v155 = vld [vmem:[%s0 + $0x210] sm:$0xff]
  %v156 = vld [vmem:[%s0 + $0x218] sm:$0xff]
  %v157 = vld [vmem:[%s0 + $0x220] sm:$0xff]
  %v158 = vld [vmem:[%s0 + $0x228] sm:$0xff]
  %v159 = vld [vmem:[%s0 + $0x230] sm:$0xff]
  %v160 = vld [vmem:[%s0 + $0x238] sm:$0xff]
  %v161 = vld [vmem:[%s0 + $0x240] sm:$0xff]
  %v162 = vld [vmem:[%s0 + $0x248] sm:$0xff]
  %v163 = vld [vmem:[%s0 + $0x250] sm:$0xff]
  %v164 = vld [vmem:[%s0 + $0x258] sm:$0xff]
  %v165 = vld [vmem:[%s0 + $0x260] sm:$0xff]
  %v166 = vld [vmem:[%s0 + $0x268] sm:$0xff]
  %v167 = vld [vmem:[%s0 + $0x270] sm:$0xff]
  %v168 = vld [vmem:[%s0 + $0x278] sm:$0xff]
  %v169 = vld [vmem:[%s0 + $0x280] sm:$0xff]
  %v170 = vld [vmem:[%s0 + $0x288] sm:$0xff]
  %v171 = vld [vmem:[%s0 + $0x290] sm:$0xff]
  %v172 = vld [vmem:[%s0 + $0x298] sm:$0xff]
  %v173 = vld [vmem:[%s0 + $0x2a0] sm:$0xff]
  %v174 = vld [vmem:[%s0 + $0x2a8] sm:$0xff]
  %v175 = vld [vmem:[%s0 + $0x2b0] sm:$0xff]
  %v176 = vld [vmem:[%s0 + $0x2b8] sm:$0xff]
  %v177 = vld [vmem:[%s0 + $0x2c0] sm:$0xff]
  %v178 = vld [vmem:[%s0 + $0x2c8] sm:$0xff]
  %v179 = vld [vmem:[%s0 + $0x2d0] sm:$0xff]
  %v180 = vld [vmem:[%s0 + $0x2d8] sm:$0xff]
  %v181 = vld [vmem:[%s0 + $0x2e0] sm:$0xff]
  %v182 = vld [vmem:[%s0 + $0x2e8] sm:$0xff]
  %v183 = vld [vmem:[%s0 + $0x2f0] sm:$0xff]
  %v184 = vld [vmem:[%s0 + $0x2f8] sm:$0xff]
  %v185 = vld [vmem:[%s0 + $0x300] sm:$0xff]
  %v186 = vld [vmem:[%s0 + $0x308] sm:$0xff]
  %v187 = vld [vmem:[%s0 + $0x310] sm:$0xff]
  %v188 = vld [vmem:[%s0 + $0x318] sm:$0xff]
  %v189 = vld [vmem:[%s0 + $0x320] sm:$0xff]
  %v190 = vld [vmem:[%s0 + $0x328] sm:$0xff]
  %v191 = vld [vmem:[%s0 + $0x330] sm:$0xff]
  %v192 = vld [vmem:[%s0 + $0x338] sm:$0xff]
  %v193 = vld [vmem:[%s0 + $0x340] sm:$0xff]
  %v194 = vld [vmem:[%s0 + $0x348] sm:$0xff]
  %v195 = vld [vmem:[%s0 + $0x350] sm:$0xff]
  %v196 = vld [vmem:[%s0 + $0x358] sm:$0xff]
  %v197 = vld [vmem:[%s0 + $0x360] sm:$0xff]
  %v198 = vld [vmem:[%s0 + $0x368] sm:$0xff]
  %v199 = vld [vmem:[%s0 + $0x370] sm:$0xff]
  %v200 = vld [vmem:[%s0 + $0x378] sm:$0xff]
  %v201 = vld [vmem:[%s0 + $0x380] sm:$0xff]
  %v202 = vld [vmem:[%s0 + $0x388] sm:$0xff]
  %v203 = vld [vmem:[%s0 + $0x390] sm:$0xff]
  %v204 = vld [vmem:[%s0 + $0x398] sm:$0xff]
  %v205 = vld [vmem:[%s0 + $0x3a0] sm:$0xff]
  %v206 = vld [vmem:[%s0 + $0x3a8] sm:$0xff]
  %v207 = vld [vmem:[%s0 + $0x3b0] sm:$0xff]
  %v208 = vld [vmem:[%s0 + $0x3b8] sm:$0xff]
  %v209 = vld [vmem:[%s0 + $0x3c0] sm:$0xff]
  %v210 = vld [vmem:[%s0 + $0x3c8] sm:$0xff]
  %v211 = vld [vmem:[%s0 + $0x3d0] sm:$0xff]
  %v212 = vld [vmem:[%s0 + $0x3d8] sm:$0xff]
  %v213 = vld [vmem:[%s0 + $0x3e0] sm:$0xff]
  %v214 = vld [vmem:[%s0 + $0x3e8] sm:$0xff]
  %v215 = vld [vmem:[%s0 + $0x3f0] sm:$0xff]
  %v216 = vld [vmem:[%s0 + $0x3f8] sm:$0xff]
  %v217 = vld [vmem:[%s0 + $0x400] sm:$0xff]
  %v218 = vld [vmem:[%s0 + $0x408] sm:$0xff]
  %v219 = vld [vmem:[%s0 + $0x410] sm:$0xff]
  %v220 = vld [vmem:[%s0 + $0x418] sm:$0xff]
  %v221 = vld [vmem:[%s0 + $0x420] sm:$0xff]
  %v222 = vld [vmem:[%s0 + $0x428] sm:$0xff]
  %v223 = vld [vmem:[%s0 + $0x430] sm:$0xff]
  %v224 = vld [vmem:[%s0 + $0x438] sm:$0xff]
  %v225 = vld [vmem:[%s0 + $0x440] sm:$0xff]
  %v226 = vld [vmem:[%s0 + $0x448] sm:$0xff]
  %v227 = vld [vmem:[%s0 + $0x450] sm:$0xff]
  %v228 = vld [vmem:[%s0 + $0x458] sm:$0xff]
  %v229 = vld [vmem:[%s0 + $0x460] sm:$0xff]
  %v230 = vld [vmem:[%s0 + $0x468] sm:$0xff]
  %v231 = vld [vmem:[%s0 + $0x470] sm:$0xff]
  %v232 = vld [vmem:[%s0 + $0x478] sm:$0xff]
  %v233 = vld [vmem:[%s0 + $0x480] sm:$0xff]
  %v234 = vld [vmem:[%s0 + $0x488] sm:$0xff]
  %v235 = vld [vmem:[%s0 + $0x490] sm:$0xff]
  %v236 = vld [vmem:[%s0 + $0x498] sm:$0xff]
  %v237 = vld [vmem:[%s0 + $0x4a0] sm:$0xff]
  %v238 = vld [vmem:[%s0 + $0x4a8] sm:$0xff]
  %v239 = vld [vmem:[%s0 + $0x4b0] sm:$0xff]
  %v240 = vld [vmem:[%s0 + $0x4b8] sm:$0xff]
  %v241 = vld [vmem:[%s0 + $0x4c0] sm:$0xff]
  %v242 = vld [vmem:[%s0 + $0x4c8] sm:$0xff]
  %v243 = vld [vmem:[%s0 + $0x4d0] sm:$0xff]
  %v244 = vld [vmem:[%s0 + $0x4d8] sm:$0xff]
  %v245 = vld [vmem:[%s0 + $0x4e0] sm:$0xff]
  %v246 = vld [vmem:[%s0 + $0x4e8] sm:$0xff]
  %v247 = vld [vmem:[%s0 + $0x4f0] sm:$0xff]
  %v248 = vld [vmem:[%s0 + $0x4f8] sm:$0xff]
  %v249 = vld [vmem:[%s0 + $0x500] sm:$0xff]
  %v250 = vld [vmem:[%s0 + $0x508] sm:$0xff]
  %v251 = vld [vmem:[%s0 + $0x510] sm:$0xff]
  %v252 = vld [vmem:[%s0 + $0x518] sm:$0xff]
  %v253 = vld [vmem:[%s0 + $0x520] sm:$0xff]
  %v254 = vld [vmem:[%s0 + $0x528] sm:$0xff]
  %v255 = vld [vmem:[%s0 + $0x530] sm:$0xff]
  %v256 = vld [vmem:[%s0 + $0x538] sm:$0xff]
  %v257 = vld [vmem:[%s0 + $0x540] sm:$0xff]
  %v258 = vld [vmem:[%s0 + $0x548] sm:$0xff]
  %v259 = vld [vmem:[%s0 + $0x550] sm:$0xff]
  %v260 = vld [vmem:[%s0 + $0x558] sm:$0xff]
  %v261 = vld [vmem:[%s0 + $0x560] sm:$0xff]
  %v262 = vld [vmem:[%s0 + $0x568] sm:$0xff]
  %v263 = vld [vmem:[%s0 + $0x570] sm:$0xff]
  %v264 = vld [vmem:[%s0 + $0x578] sm:$0xff]
  %v265 = vld [vmem:[%s0 + $0x580] sm:$0xff]
  %v266 = vld [vmem:[%s0 + $0x588] sm:$0xff]
  %v267 = vld [vmem:[%s0 + $0x590] sm:$0xff]
  %v268 = vld [vmem:[%s0 + $0x598] sm:$0xff]
  %v269 = vld [vmem:[%s0 + $0x5a0] sm:$0xff]
  %v270 = vld [vmem:[%s0 + $0x5a8] sm:$0xff]
  %v271 = vld [vmem:[%s0 + $0x5b0] sm:$0xff]
  %v272 = vld [vmem:[%s0 + $0x5b8] sm:$0xff]
  %v273 = vld [vmem:[%s0 + $0x5c0] sm:$0xff]
  %v274 = vld [vmem:[%s0 + $0x5c8] sm:$0xff]
  %v275 = vld [vmem:[%s0 + $0x5d0] sm:$0xff]
  %v276 = vld [vmem:[%s0 + $0x5d8] sm:$0xff]
  %v277 = vld [vmem:[%s0 + $0x5e0] sm:$0xff]
  %v278 = vld [vmem:[%s0 + $0x5e8] sm:$0xff]
  %v279 = vld [vmem:[%s0 + $0x5f0] sm:$0xff]
  %v280 = vld [vmem:[%s0 + $0x5f8] sm:$0xff]
  %v281 = vld [vmem:[%s0 + $0x600] sm:$0xff]
  %v282 = vld [vmem:[%s0 + $0x608] sm:$0xff]
  %v283 = vld [vmem:[%s0 + $0x610] sm:$0xff]
  %v284 = vld [vmem:[%s0 + $0x618] sm:$0xff]
  %v285 = vld [vmem:[%s0 + $0x620] sm:$0xff]
  %v286 = vld [vmem:[%s0 + $0x628] sm:$0xff]
  %v287 = vld [vmem:[%s0 + $0x630] sm:$0xff]
  %v288 = vld [vmem:[%s0 + $0x638] sm:$0xff]
  %v289 = vld [vmem:[%s0 + $0x640] sm:$0xff]
  %v290 = vld [vmem:[%s0 + $0x648] sm:$0xff]
  %v291 = vld [vmem:[%s0 + $0x650] sm:$0xff]
  %v292 = vld [vmem:[%s0 + $0x658] sm:$0xff]
  %v293 = vld [vmem:[%s0 + $0x660] sm:$0xff]
  %v294 = vld [vmem:[%s0 + $0x668] sm:$0xff]
  %v295 = vld [vmem:[%s0 + $0x670] sm:$0xff]
  %v296 = vld [vmem:[%s0 + $0x678] sm:$0xff]
  %v297 = vld [vmem:[%s0 + $0x680] sm:$0xff]
  %v298 = vld [vmem:[%s0 + $0x688] sm:$0xff]
  %v299 = vld [vmem:[%s0 + $0x690] sm:$0xff]
  %v300 = vld [vmem:[%s0 + $0x698] sm:$0xff]
  %v301 = vld [vmem:[%s0 + $0x6a0] sm:$0xff]
  %v302 = vld [vmem:[%s0 + $0x6a8] sm:$0xff]
  %v303 = vld [vmem:[%s0 + $0x6b0] sm:$0xff]
  %v304 = vld [vmem:[%s0 + $0x6b8] sm:$0xff]
  %v305 = vld [vmem:[%s0 + $0x6c0] sm:$0xff]
  %v306 = vld [vmem:[%s0 + $0x6c8] sm:$0xff]
  %v307 = vld [vmem:[%s0 + $0x6d0] sm:$0xff]
  %v308 = vld [vmem:[%s0 + $0x6d8] sm:$0xff]
  %v309 = vld [vmem:[%s0 + $0x6e0] sm:$0xff]
  %v310 = vld [vmem:[%s0 + $0x6e8] sm:$0xff]
  %v311 = vld [vmem:[%s0 + $0x6f0] sm:$0xff]
  %v312 = vld [vmem:[%s0 + $0x6f8] sm:$0xff]
  %v313 = vld [vmem:[%s0 + $0x700] sm:$0xff]
  %v314 = vld [vmem:[%s0 + $0x708] sm:$0xff]
  %v315 = vld [vmem:[%s0 + $0x710] sm:$0xff]
  %v316 = vld [vmem:[%s0 + $0x718] sm:$0xff]
  %v317 = vld [vmem:[%s0 + $0x720] sm:$0xff]
  %v318 = vld [vmem:[%s0 + $0x728] sm:$0xff]
  %v319 = vld [vmem:[%s0 + $0x730] sm:$0xff]
  %v320 = vld [vmem:[%s0 + $0x738] sm:$0xff]
  %v321 = vld [vmem:[%s0 + $0x740] sm:$0xff]
  %v322 = vld [vmem:[%s0 + $0x748] sm:$0xff]
  %v323 = vld [vmem:[%s0 + $0x750] sm:$0xff]
  %v324 = vld [vmem:[%s0 + $0x758] sm:$0xff]
  %v325 = vld [vmem:[%s0 + $0x760] sm:$0xff]
  %v326 = vld [vmem:[%s0 + $0x768] sm:$0xff]
  %v327 = vld [vmem:[%s0 + $0x770] sm:$0xff]
  %v328 = vld [vmem:[%s0 + $0x778] sm:$0xff]
  %v329 = vld [vmem:[%s0 + $0x780] sm:$0xff]
  %v330 = vld [vmem:[%s0 + $0x788] sm:$0xff]
  %v331 = vld [vmem:[%s0 + $0x790] sm:$0xff]
  %v332 = vld [vmem:[%s0 + $0x798] sm:$0xff]
  %v333 = vld [vmem:[%s0 + $0x7a0] sm:$0xff]
  %v334 = vld [vmem:[%s0 + $0x7a8] sm:$0xff]
  %v335 = vld [vmem:[%s0 + $0x7b0] sm:$0xff]
  %v336 = vld [vmem:[%s0 + $0x7b8] sm:$0xff]
  %v337 = vld [vmem:[%s0 + $0x7c0] sm:$0xff]
  %v338 = vld [vmem:[%s0 + $0x7c8] sm:$0xff]
  %v339 = vld [vmem:[%s0 + $0x7d0] sm:$0xff]
  %v340 = vld [vmem:[%s0 + $0x7d8] sm:$0xff]
  %v341 = vld [vmem:[%s0 + $0x7e0] sm:$0xff]
  %v342 = vld [vmem:[%s0 + $0x7e8] sm:$0xff]
  %v343 = vld [vmem:[%s0 + $0x7f0] sm:$0xff]
  %v344 = vld [vmem:[%s0 + $0x7f8] sm:$0xff]
  %v345 = vld [vmem:[#allocation2] sm:$0xff]
  %v346 = vld [vmem:[#allocation2 + $0x8] sm:$0xff]
  %v347 = vld [vmem:[#allocation2 + $0x10] sm:$0xff]
  %v348 = vld [vmem:[#allocation2 + $0x18] sm:$0xff]
  %v349 = vld [vmem:[#allocation2 + $0x20] sm:$0xff]
  %v350 = vld [vmem:[#allocation2 + $0x28] sm:$0xff]
  %v351 = vld [vmem:[#allocation2 + $0x30] sm:$0xff]
  %v352 = vld [vmem:[#allocation2 + $0x38] sm:$0xff]
  %v353 = vld [vmem:[#allocation2 + $0x40] sm:$0xff]
  %v354 = vld [vmem:[#allocation2 + $0x48] sm:$0xff]
  %v355 = vld [vmem:[#allocation2 + $0x50] sm:$0xff]
  %v356 = vld [vmem:[#allocation2 + $0x58] sm:$0xff]
  %v357 = vld [vmem:[#allocation2 + $0x60] sm:$0xff]
  %v358 = vld [vmem:[#allocation2 + $0x68] sm:$0xff]
  %v359 = vld [vmem:[#allocation2 + $0x70] sm:$0xff]
  %v360 = vld [vmem:[#allocation2 + $0x78] sm:$0xff]
  %v361 = vld [vmem:[#allocation2 + $0x80] sm:$0xff]
  %v362 = vld [vmem:[#allocation2 + $0x88] sm:$0xff]
  %v363 = vld [vmem:[#allocation2 + $0x90] sm:$0xff]
  %v364 = vld [vmem:[#allocation2 + $0x98] sm:$0xff]
  %v365 = vld [vmem:[#allocation2 + $0xa0] sm:$0xff]
  %v366 = vld [vmem:[#allocation2 + $0xa8] sm:$0xff]
  %v367 = vld [vmem:[#allocation2 + $0xb0] sm:$0xff]
  %v368 = vld [vmem:[#allocation2 + $0xb8] sm:$0xff]
  %v369 = vld [vmem:[#allocation2 + $0xc0] sm:$0xff]
  %v370 = vld [vmem:[#allocation2 + $0xc8] sm:$0xff]
  %v371 = vld [vmem:[#allocation2 + $0xd0] sm:$0xff]
  %v372 = vld [vmem:[#allocation2 + $0xd8] sm:$0xff]
  %v373 = vld [vmem:[#allocation2 + $0xe0] sm:$0xff]
  %v374 = vld [vmem:[#allocation2 + $0xe8] sm:$0xff]
  %v375 = vld [vmem:[#allocation2 + $0xf0] sm:$0xff]
  %v376 = vld [vmem:[#allocation2 + $0xf8] sm:$0xff]
  %v377 = vld [vmem:[#allocation2 + $0x100] sm:$0xff]
  %v378 = vld [vmem:[#allocation2 + $0x108] sm:$0xff]
  %v379 = vld [vmem:[#allocation2 + $0x110] sm:$0xff]
  %v380 = vld [vmem:[#allocation2 + $0x118] sm:$0xff]
  %v381 = vld [vmem:[#allocation2 + $0x120] sm:$0xff]
  %v382 = vld [vmem:[#allocation2 + $0x128] sm:$0xff]
  %v383 = vld [vmem:[#allocation2 + $0x130] sm:$0xff]
  %v384 = vld [vmem:[#allocation2 + $0x138] sm:$0xff]
  %v385 = vld [vmem:[#allocation2 + $0x140] sm:$0xff]
  %v386 = vld [vmem:[#allocation2 + $0x148] sm:$0xff]
  %v387 = vld [vmem:[#allocation2 + $0x150] sm:$0xff]
  %v388 = vld [vmem:[#allocation2 + $0x158] sm:$0xff]
  %v389 = vld [vmem:[#allocation2 + $0x160] sm:$0xff]
  %v390 = vld [vmem:[#allocation2 + $0x168] sm:$0xff]
  %v391 = vld [vmem:[#allocation2 + $0x170] sm:$0xff]
  %v392 = vld [vmem:[#allocation2 + $0x178] sm:$0xff]
  %v393 = vld [vmem:[#allocation2 + $0x180] sm:$0xff]
  %v394 = vld [vmem:[#allocation2 + $0x188] sm:$0xff]
  %v395 = vld [vmem:[#allocation2 + $0x190] sm:$0xff]
  %v396 = vld [vmem:[#allocation2 + $0x198] sm:$0xff]
  %v397 = vld [vmem:[#allocation2 + $0x1a0] sm:$0xff]
  %v398 = vld [vmem:[#allocation2 + $0x1a8] sm:$0xff]
  %v399 = vld [vmem:[#allocation2 + $0x1b0] sm:$0xff]
  %v400 = vld [vmem:[#allocation2 + $0x1b8] sm:$0xff]
  %v401 = vld [vmem:[#allocation2 + $0x1c0] sm:$0xff]
  %v402 = vld [vmem:[#allocation2 + $0x1c8] sm:$0xff]
  %v403 = vld [vmem:[#allocation2 + $0x1d0] sm:$0xff]
  %v404 = vld [vmem:[#allocation2 + $0x1d8] sm:$0xff]
  %v405 = vld [vmem:[#allocation2 + $0x1e0] sm:$0xff]
  %v406 = vld [vmem:[#allocation2 + $0x1e8] sm:$0xff]
  %v407 = vld [vmem:[#allocation2 + $0x1f0] sm:$0xff]
  %v408 = vld [vmem:[#allocation2 + $0x1f8] sm:$0xff]
  %v409 = vld [vmem:[%s1] sm:$0xf]
  %v410 = vld [vmem:[%s1 + $0x4] sm:$0xf]
  %v411 = vld [vmem:[%s1 + $0x8] sm:$0xf]
  %v412 = vld [vmem:[%s1 + $0xc] sm:$0xf]
  %v413 = vld [vmem:[%s1 + $0x10] sm:$0xf]
  %v414 = vld [vmem:[%s1 + $0x14] sm:$0xf]
  %v415 = vld [vmem:[%s1 + $0x18] sm:$0xf]
  %v416 = vld [vmem:[%s1 + $0x1c] sm:$0xf]
  %v417 = vld [vmem:[%s1 + $0x20] sm:$0xf]
  %v418 = vld [vmem:[%s1 + $0x24] sm:$0xf]
  %v419 = vld [vmem:[%s1 + $0x28] sm:$0xf]
  %v420 = vld [vmem:[%s1 + $0x2c] sm:$0xf]
  %v421 = vld [vmem:[%s1 + $0x30] sm:$0xf]
  %v422 = vld [vmem:[%s1 + $0x34] sm:$0xf]
  %v423 = vld [vmem:[%s1 + $0x38] sm:$0xf]
  %v424 = vld [vmem:[%s1 + $0x3c] sm:$0xf]
  %v425 = vld [vmem:[%s1 + $0x40] sm:$0xf]
  %v426 = vld [vmem:[%s1 + $0x44] sm:$0xf]
  %v427 = vld [vmem:[%s1 + $0x48] sm:$0xf]
  %v428 = vld [vmem:[%s1 + $0x4c] sm:$0xf]
  %v429 = vld [vmem:[%s1 + $0x50] sm:$0xf]
  %v430 = vld [vmem:[%s1 + $0x54] sm:$0xf]
  %v431 = vld [vmem:[%s1 + $0x58] sm:$0xf]
  %v432 = vld [vmem:[%s1 + $0x5c] sm:$0xf]
  %v433 = vld [vmem:[%s1 + $0x60] sm:$0xf]
  %v434 = vld [vmem:[%s1 + $0x64] sm:$0xf]
  %v435 = vld [vmem:[%s1 + $0x68] sm:$0xf]
  %v436 = vld [vmem:[%s1 + $0x6c] sm:$0xf]
  %v437 = vld [vmem:[%s1 + $0x70] sm:$0xf]
  %v438 = vld [vmem:[%s1 + $0x74] sm:$0xf]
  %v439 = vld [vmem:[%s1 + $0x78] sm:$0xf]
  %v440 = vld [vmem:[%s1 + $0x7c] sm:$0xf]
  %v441 = vld [vmem:[%s1 + $0x80] sm:$0xf]
  %v442 = vld [vmem:[%s1 + $0x84] sm:$0xf]
  %v443 = vld [vmem:[%s1 + $0x88] sm:$0xf]
  %v444 = vld [vmem:[%s1 + $0x8c] sm:$0xf]
  %v445 = vld [vmem:[%s1 + $0x90] sm:$0xf]
  %v446 = vld [vmem:[%s1 + $0x94] sm:$0xf]
  %v447 = vld [vmem:[%s1 + $0x98] sm:$0xf]
  %v448 = vld [vmem:[%s1 + $0x9c] sm:$0xf]
  %v449 = vld [vmem:[%s1 + $0xa0] sm:$0xf]
  %v450 = vld [vmem:[%s1 + $0xa4] sm:$0xf]
  %v451 = vld [vmem:[%s1 + $0xa8] sm:$0xf]
  %v452 = vld [vmem:[%s1 + $0xac] sm:$0xf]
  %v453 = vld [vmem:[%s1 + $0xb0] sm:$0xf]
  %v454 = vld [vmem:[%s1 + $0xb4] sm:$0xf]
  %v455 = vld [vmem:[%s1 + $0xb8] sm:$0xf]
  %v456 = vld [vmem:[%s1 + $0xbc] sm:$0xf]
  %v457 = vld [vmem:[%s1 + $0xc0] sm:$0xf]
  %v458 = vld [vmem:[%s1 + $0xc4] sm:$0xf]
  %v459 = vld [vmem:[%s1 + $0xc8] sm:$0xf]
  %v460 = vld [vmem:[%s1 + $0xcc] sm:$0xf]
  %v461 = vld [vmem:[%s1 + $0xd0] sm:$0xf]
  %v462 = vld [vmem:[%s1 + $0xd4] sm:$0xf]
  %v463 = vld [vmem:[%s1 + $0xd8] sm:$0xf]
  %v464 = vld [vmem:[%s1 + $0xdc] sm:$0xf]
  %v465 = vld [vmem:[%s1 + $0xe0] sm:$0xf]
  %v466 = vld [vmem:[%s1 + $0xe4] sm:$0xf]
  %v467 = vld [vmem:[%s1 + $0xe8] sm:$0xf]
  %v468 = vld [vmem:[%s1 + $0xec] sm:$0xf]
  %v469 = vld [vmem:[%s1 + $0xf0] sm:$0xf]
  %v470 = vld [vmem:[%s1 + $0xf4] sm:$0xf]
  %v471 = vld [vmem:[%s1 + $0xf8] sm:$0xf]
  %v472 = vld [vmem:[%s1 + $0xfc] sm:$0xf]
  %v473 = vld [vmem:[%s1 + $0x100] sm:$0xf]
  %v474 = vld [vmem:[%s1 + $0x104] sm:$0xf]
  %v475 = vld [vmem:[%s1 + $0x108] sm:$0xf]
  %v476 = vld [vmem:[%s1 + $0x10c] sm:$0xf]
  %v477 = vld [vmem:[%s1 + $0x110] sm:$0xf]
  %v478 = vld [vmem:[%s1 + $0x114] sm:$0xf]
  %v479 = vld [vmem:[%s1 + $0x118] sm:$0xf]
  %v480 = vld [vmem:[%s1 + $0x11c] sm:$0xf]
  %v481 = vld [vmem:[%s1 + $0x120] sm:$0xf]
  %v482 = vld [vmem:[%s1 + $0x124] sm:$0xf]
  %v483 = vld [vmem:[%s1 + $0x128] sm:$0xf]
  %v484 = vld [vmem:[%s1 + $0x12c] sm:$0xf]
  %v485 = vld [vmem:[%s1 + $0x130] sm:$0xf]
  %v486 = vld [vmem:[%s1 + $0x134] sm:$0xf]
  %v487 = vld [vmem:[%s1 + $0x138] sm:$0xf]
  %v488 = vld [vmem:[%s1 + $0x13c] sm:$0xf]
  %v489 = vld [vmem:[%s1 + $0x140] sm:$0xf]
  %v490 = vld [vmem:[%s1 + $0x144] sm:$0xf]
  %v491 = vld [vmem:[%s1 + $0x148] sm:$0xf]
  %v492 = vld [vmem:[%s1 + $0x14c] sm:$0xf]
  %v493 = vld [vmem:[%s1 + $0x150] sm:$0xf]
  %v494 = vld [vmem:[%s1 + $0x154] sm:$0xf]
  %v495 = vld [vmem:[%s1 + $0x158] sm:$0xf]
  %v496 = vld [vmem:[%s1 + $0x15c] sm:$0xf]
  %v497 = vld [vmem:[%s1 + $0x160] sm:$0xf]
  %v498 = vld [vmem:[%s1 + $0x164] sm:$0xf]
  %v499 = vld [vmem:[%s1 + $0x168] sm:$0xf]
  %v500 = vld [vmem:[%s1 + $0x16c] sm:$0xf]
  %v501 = vld [vmem:[%s1 + $0x170] sm:$0xf]
  %v502 = vld [vmem:[%s1 + $0x174] sm:$0xf]
  %v503 = vld [vmem:[%s1 + $0x178] sm:$0xf]
  %v504 = vld [vmem:[%s1 + $0x17c] sm:$0xf]
  %v505 = vld [vmem:[%s1 + $0x180] sm:$0xf]
  %v506 = vld [vmem:[%s1 + $0x184] sm:$0xf]
  %v507 = vld [vmem:[%s1 + $0x188] sm:$0xf]
  %v508 = vld [vmem:[%s1 + $0x18c] sm:$0xf]
  %v509 = vld [vmem:[%s1 + $0x190] sm:$0xf]
  %v510 = vld [vmem:[%s1 + $0x194] sm:$0xf]
  %v511 = vld [vmem:[%s1 + $0x198] sm:$0xf]
  %v512 = vld [vmem:[%s1 + $0x19c] sm:$0xf]
  %v513 = vld [vmem:[%s1 + $0x1a0] sm:$0xf]
  %v514 = vld [vmem:[%s1 + $0x1a4] sm:$0xf]
  %v515 = vld [vmem:[%s1 + $0x1a8] sm:$0xf]
  %v516 = vld [vmem:[%s1 + $0x1ac] sm:$0xf]
  %v517 = vld [vmem:[%s1 + $0x1b0] sm:$0xf]
  %v518 = vld [vmem:[%s1 + $0x1b4] sm:$0xf]
  %v519 = vld [vmem:[%s1 + $0x1b8] sm:$0xf]
  %v520 = vld [vmem:[%s1 + $0x1bc] sm:$0xf]
  %v521 = vld [vmem:[%s1 + $0x1c0] sm:$0xf]
  %v522 = vld [vmem:[%s1 + $0x1c4] sm:$0xf]
  %v523 = vld [vmem:[%s1 + $0x1c8] sm:$0xf]
  %v524 = vld [vmem:[%s1 + $0x1cc] sm:$0xf]
  %v525 = vld [vmem:[%s1 + $0x1d0] sm:$0xf]
  %v526 = vld [vmem:[%s1 + $0x1d4] sm:$0xf]
  %v527 = vld [vmem:[%s1 + $0x1d8] sm:$0xf]
  %v528 = vld [vmem:[%s1 + $0x1dc] sm:$0xf]
  %v529 = vld [vmem:[%s1 + $0x1e0] sm:$0xf]
  %v530 = vld [vmem:[%s1 + $0x1e4] sm:$0xf]
  %v531 = vld [vmem:[%s1 + $0x1e8] sm:$0xf]
  %v532 = vld [vmem:[%s1 + $0x1ec] sm:$0xf]
  %v533 = vld [vmem:[%s1 + $0x1f0] sm:$0xf]
  %v534 = vld [vmem:[%s1 + $0x1f4] sm:$0xf]
  %v535 = vld [vmem:[%s1 + $0x1f8] sm:$0xf]
  %v536 = vld [vmem:[%s1 + $0x1fc] sm:$0xf]
  %v793 = vunpack.c.l.b16 %v89
  %v794 = vunpack.c.h.b16 %v89
  %v795 = vunpack.c.l.b16 %v90
  %v796 = vunpack.c.h.b16 %v90
  %v797 = vunpack.c.l.b16 %v91
  %v798 = vunpack.c.h.b16 %v91
  %v799 = vunpack.c.l.b16 %v92
  %v800 = vunpack.c.h.b16 %v92
  %v801 = vunpack.c.l.b16 %v93
  %v802 = vunpack.c.h.b16 %v93
  %v803 = vunpack.c.l.b16 %v94
  %v804 = vunpack.c.h.b16 %v94
  %v805 = vunpack.c.l.b16 %v95
  %v806 = vunpack.c.h.b16 %v95
  %v807 = vunpack.c.l.b16 %v96
  %v808 = vunpack.c.h.b16 %v96
  %v809 = vunpack.c.l.b16 %v97
  %v810 = vunpack.c.h.b16 %v97
  %v811 = vunpack.c.l.b16 %v98
  %v812 = vunpack.c.h.b16 %v98
  %v813 = vunpack.c.l.b16 %v99
  %v814 = vunpack.c.h.b16 %v99
  %v815 = vunpack.c.l.b16 %v100
  %v816 = vunpack.c.h.b16 %v100
  %v817 = vunpack.c.l.b16 %v101
  %v818 = vunpack.c.h.b16 %v101
  %v819 = vunpack.c.l.b16 %v102
  %v820 = vunpack.c.h.b16 %v102
  %v821 = vunpack.c.l.b16 %v103
  %v822 = vunpack.c.h.b16 %v103
  %v823 = vunpack.c.l.b16 %v104
  %v824 = vunpack.c.h.b16 %v104
  %v825 = vunpack.c.l.b16 %v105
  %v826 = vunpack.c.h.b16 %v105
  %v827 = vunpack.c.l.b16 %v106
  %v828 = vunpack.c.h.b16 %v106
  %v829 = vunpack.c.l.b16 %v107
  %v830 = vunpack.c.h.b16 %v107
  %v831 = vunpack.c.l.b16 %v108
  %v832 = vunpack.c.h.b16 %v108
  %v833 = vunpack.c.l.b16 %v109
  %v834 = vunpack.c.h.b16 %v109
  %v835 = vunpack.c.l.b16 %v110
  %v836 = vunpack.c.h.b16 %v110
  %v837 = vunpack.c.l.b16 %v111
  %v838 = vunpack.c.h.b16 %v111
  %v839 = vunpack.c.l.b16 %v112
  %v840 = vunpack.c.h.b16 %v112
  %v841 = vunpack.c.l.b16 %v113
  %v842 = vunpack.c.h.b16 %v113
  %v843 = vunpack.c.l.b16 %v114
  %v844 = vunpack.c.h.b16 %v114
  %v845 = vunpack.c.l.b16 %v115
  %v846 = vunpack.c.h.b16 %v115
  %v847 = vunpack.c.l.b16 %v116
  %v848 = vunpack.c.h.b16 %v116
  %v849 = vunpack.c.l.b16 %v117
  %v850 = vunpack.c.h.b16 %v117
  %v851 = vunpack.c.l.b16 %v118
  %v852 = vunpack.c.h.b16 %v118
  %v853 = vunpack.c.l.b16 %v119
  %v854 = vunpack.c.h.b16 %v119
  %v855 = vunpack.c.l.b16 %v120
  %v856 = vunpack.c.h.b16 %v120
  %v857 = vunpack.c.l.b16 %v121
  %v858 = vunpack.c.h.b16 %v121
  %v859 = vunpack.c.l.b16 %v122
  %v860 = vunpack.c.h.b16 %v122
  %v861 = vunpack.c.l.b16 %v123
  %v862 = vunpack.c.h.b16 %v123
  %v863 = vunpack.c.l.b16 %v124
  %v864 = vunpack.c.h.b16 %v124
  %v865 = vunpack.c.l.b16 %v125
  %v866 = vunpack.c.h.b16 %v125
  %v867 = vunpack.c.l.b16 %v126
  %v868 = vunpack.c.h.b16 %v126
  %v869 = vunpack.c.l.b16 %v127
  %v870 = vunpack.c.h.b16 %v127
  %v871 = vunpack.c.l.b16 %v128
  %v872 = vunpack.c.h.b16 %v128
  %v873 = vunpack.c.l.b16 %v129
  %v874 = vunpack.c.h.b16 %v129
  %v875 = vunpack.c.l.b16 %v130
  %v876 = vunpack.c.h.b16 %v130
  %v877 = vunpack.c.l.b16 %v131
  %v878 = vunpack.c.h.b16 %v131
  %v879 = vunpack.c.l.b16 %v132
  %v880 = vunpack.c.h.b16 %v132
  %v881 = vunpack.c.l.b16 %v133
  %v882 = vunpack.c.h.b16 %v133
  %v883 = vunpack.c.l.b16 %v134
  %v884 = vunpack.c.h.b16 %v134
  %v885 = vunpack.c.l.b16 %v135
  %v886 = vunpack.c.h.b16 %v135
  %v887 = vunpack.c.l.b16 %v136
  %v888 = vunpack.c.h.b16 %v136
  %v889 = vunpack.c.l.b16 %v137
  %v890 = vunpack.c.h.b16 %v137
  %v891 = vunpack.c.l.b16 %v138
  %v892 = vunpack.c.h.b16 %v138
  %v893 = vunpack.c.l.b16 %v139
  %v894 = vunpack.c.h.b16 %v139
  %v895 = vunpack.c.l.b16 %v140
  %v896 = vunpack.c.h.b16 %v140
  %v897 = vunpack.c.l.b16 %v141
  %v898 = vunpack.c.h.b16 %v141
  %v899 = vunpack.c.l.b16 %v142
  %v900 = vunpack.c.h.b16 %v142
  %v901 = vunpack.c.l.b16 %v143
  %v902 = vunpack.c.h.b16 %v143
  %v903 = vunpack.c.l.b16 %v144
  %v904 = vunpack.c.h.b16 %v144
  %v905 = vunpack.c.l.b16 %v145
  %v906 = vunpack.c.h.b16 %v145
  %v907 = vunpack.c.l.b16 %v146
  %v908 = vunpack.c.h.b16 %v146
  %v909 = vunpack.c.l.b16 %v147
  %v910 = vunpack.c.h.b16 %v147
  %v911 = vunpack.c.l.b16 %v148
  %v912 = vunpack.c.h.b16 %v148
  %v913 = vunpack.c.l.b16 %v149
  %v914 = vunpack.c.h.b16 %v149
  %v915 = vunpack.c.l.b16 %v150
  %v916 = vunpack.c.h.b16 %v150
  %v917 = vunpack.c.l.b16 %v151
  %v918 = vunpack.c.h.b16 %v151
  %v919 = vunpack.c.l.b16 %v152
  %v920 = vunpack.c.h.b16 %v152
  %v921 = vunpack.c.l.b16 %v153
  %v922 = vunpack.c.h.b16 %v153
  %v923 = vunpack.c.l.b16 %v154
  %v924 = vunpack.c.h.b16 %v154
  %v925 = vunpack.c.l.b16 %v155
  %v926 = vunpack.c.h.b16 %v155
  %v927 = vunpack.c.l.b16 %v156
  %v928 = vunpack.c.h.b16 %v156
  %v929 = vunpack.c.l.b16 %v157
  %v930 = vunpack.c.h.b16 %v157
  %v931 = vunpack.c.l.b16 %v158
  %v932 = vunpack.c.h.b16 %v158
  %v933 = vunpack.c.l.b16 %v159
  %v934 = vunpack.c.h.b16 %v159
  %v935 = vunpack.c.l.b16 %v160
  %v936 = vunpack.c.h.b16 %v160
  %v937 = vunpack.c.l.b16 %v161
  %v938 = vunpack.c.h.b16 %v161
  %v939 = vunpack.c.l.b16 %v162
  %v940 = vunpack.c.h.b16 %v162
  %v941 = vunpack.c.l.b16 %v163
  %v942 = vunpack.c.h.b16 %v163
  %v943 = vunpack.c.l.b16 %v164
  %v944 = vunpack.c.h.b16 %v164
  %v945 = vunpack.c.l.b16 %v165
  %v946 = vunpack.c.h.b16 %v165
  %v947 = vunpack.c.l.b16 %v166
  %v948 = vunpack.c.h.b16 %v166
  %v949 = vunpack.c.l.b16 %v167
  %v950 = vunpack.c.h.b16 %v167
  %v951 = vunpack.c.l.b16 %v168
  %v952 = vunpack.c.h.b16 %v168
  %v953 = vunpack.c.l.b16 %v169
  %v954 = vunpack.c.h.b16 %v169
  %v955 = vunpack.c.l.b16 %v170
  %v956 = vunpack.c.h.b16 %v170
  %v957 = vunpack.c.l.b16 %v171
  %v958 = vunpack.c.h.b16 %v171
  %v959 = vunpack.c.l.b16 %v172
  %v960 = vunpack.c.h.b16 %v172
  %v961 = vunpack.c.l.b16 %v173
  %v962 = vunpack.c.h.b16 %v173
  %v963 = vunpack.c.l.b16 %v174
  %v964 = vunpack.c.h.b16 %v174
  %v965 = vunpack.c.l.b16 %v175
  %v966 = vunpack.c.h.b16 %v175
  %v967 = vunpack.c.l.b16 %v176
  %v968 = vunpack.c.h.b16 %v176
  %v969 = vunpack.c.l.b16 %v177
  %v970 = vunpack.c.h.b16 %v177
  %v971 = vunpack.c.l.b16 %v178
  %v972 = vunpack.c.h.b16 %v178
  %v973 = vunpack.c.l.b16 %v179
  %v974 = vunpack.c.h.b16 %v179
  %v975 = vunpack.c.l.b16 %v180
  %v976 = vunpack.c.h.b16 %v180
  %v977 = vunpack.c.l.b16 %v181
  %v978 = vunpack.c.h.b16 %v181
  %v979 = vunpack.c.l.b16 %v182
  %v980 = vunpack.c.h.b16 %v182
  %v981 = vunpack.c.l.b16 %v183
  %v982 = vunpack.c.h.b16 %v183
  %v983 = vunpack.c.l.b16 %v184
  %v984 = vunpack.c.h.b16 %v184
  %v985 = vunpack.c.l.b16 %v185
  %v986 = vunpack.c.h.b16 %v185
  %v987 = vunpack.c.l.b16 %v186
  %v988 = vunpack.c.h.b16 %v186
  %v989 = vunpack.c.l.b16 %v187
  %v990 = vunpack.c.h.b16 %v187
  %v991 = vunpack.c.l.b16 %v188
  %v992 = vunpack.c.h.b16 %v188
  %v993 = vunpack.c.l.b16 %v189
  %v994 = vunpack.c.h.b16 %v189
  %v995 = vunpack.c.l.b16 %v190
  %v996 = vunpack.c.h.b16 %v190
  %v997 = vunpack.c.l.b16 %v191
  %v998 = vunpack.c.h.b16 %v191
  %v999 = vunpack.c.l.b16 %v192
  %v1000 = vunpack.c.h.b16 %v192
  %v1001 = vunpack.c.l.b16 %v193
  %v1002 = vunpack.c.h.b16 %v193
  %v1003 = vunpack.c.l.b16 %v194
  %v1004 = vunpack.c.h.b16 %v194
  %v1005 = vunpack.c.l.b16 %v195
  %v1006 = vunpack.c.h.b16 %v195
  %v1007 = vunpack.c.l.b16 %v196
  %v1008 = vunpack.c.h.b16 %v196
  %v1009 = vunpack.c.l.b16 %v197
  %v1010 = vunpack.c.h.b16 %v197
  %v1011 = vunpack.c.l.b16 %v198
  %v1012 = vunpack.c.h.b16 %v198
  %v1013 = vunpack.c.l.b16 %v199
  %v1014 = vunpack.c.h.b16 %v199
  %v1015 = vunpack.c.l.b16 %v200
  %v1016 = vunpack.c.h.b16 %v200
  %v1017 = vunpack.c.l.b16 %v201
  %v1018 = vunpack.c.h.b16 %v201
  %v1019 = vunpack.c.l.b16 %v202
  %v1020 = vunpack.c.h.b16 %v202
  %v1021 = vunpack.c.l.b16 %v203
  %v1022 = vunpack.c.h.b16 %v203
  %v1023 = vunpack.c.l.b16 %v204
  %v1024 = vunpack.c.h.b16 %v204
  %v1025 = vunpack.c.l.b16 %v205
  %v1026 = vunpack.c.h.b16 %v205
  %v1027 = vunpack.c.l.b16 %v206
  %v1028 = vunpack.c.h.b16 %v206
  %v1029 = vunpack.c.l.b16 %v207
  %v1030 = vunpack.c.h.b16 %v207
  %v1031 = vunpack.c.l.b16 %v208
  %v1032 = vunpack.c.h.b16 %v208
  %v1033 = vunpack.c.l.b16 %v209
  %v1034 = vunpack.c.h.b16 %v209
  %v1035 = vunpack.c.l.b16 %v210
  %v1036 = vunpack.c.h.b16 %v210
  %v1037 = vunpack.c.l.b16 %v211
  %v1038 = vunpack.c.h.b16 %v211
  %v1039 = vunpack.c.l.b16 %v212
  %v1040 = vunpack.c.h.b16 %v212
  %v1041 = vunpack.c.l.b16 %v213
  %v1042 = vunpack.c.h.b16 %v213
  %v1043 = vunpack.c.l.b16 %v214
  %v1044 = vunpack.c.h.b16 %v214
  %v1045 = vunpack.c.l.b16 %v215
  %v1046 = vunpack.c.h.b16 %v215
  %v1047 = vunpack.c.l.b16 %v216
  %v1048 = vunpack.c.h.b16 %v216
  %v1049 = vunpack.c.l.b16 %v217
  %v1050 = vunpack.c.h.b16 %v217
  %v1051 = vunpack.c.l.b16 %v218
  %v1052 = vunpack.c.h.b16 %v218
  %v1053 = vunpack.c.l.b16 %v219
  %v1054 = vunpack.c.h.b16 %v219
  %v1055 = vunpack.c.l.b16 %v220
  %v1056 = vunpack.c.h.b16 %v220
  %v1057 = vunpack.c.l.b16 %v221
  %v1058 = vunpack.c.h.b16 %v221
  %v1059 = vunpack.c.l.b16 %v222
  %v1060 = vunpack.c.h.b16 %v222
  %v1061 = vunpack.c.l.b16 %v223
  %v1062 = vunpack.c.h.b16 %v223
  %v1063 = vunpack.c.l.b16 %v224
  %v1064 = vunpack.c.h.b16 %v224
  %v1065 = vunpack.c.l.b16 %v225
  %v1066 = vunpack.c.h.b16 %v225
  %v1067 = vunpack.c.l.b16 %v226
  %v1068 = vunpack.c.h.b16 %v226
  %v1069 = vunpack.c.l.b16 %v227
  %v1070 = vunpack.c.h.b16 %v227
  %v1071 = vunpack.c.l.b16 %v228
  %v1072 = vunpack.c.h.b16 %v228
  %v1073 = vunpack.c.l.b16 %v229
  %v1074 = vunpack.c.h.b16 %v229
  %v1075 = vunpack.c.l.b16 %v230
  %v1076 = vunpack.c.h.b16 %v230
  %v1077 = vunpack.c.l.b16 %v231
  %v1078 = vunpack.c.h.b16 %v231
  %v1079 = vunpack.c.l.b16 %v232
  %v1080 = vunpack.c.h.b16 %v232
  %v1081 = vunpack.c.l.b16 %v233
  %v1082 = vunpack.c.h.b16 %v233
  %v1083 = vunpack.c.l.b16 %v234
  %v1084 = vunpack.c.h.b16 %v234
  %v1085 = vunpack.c.l.b16 %v235
  %v1086 = vunpack.c.h.b16 %v235
  %v1087 = vunpack.c.l.b16 %v236
  %v1088 = vunpack.c.h.b16 %v236
  %v1089 = vunpack.c.l.b16 %v237
  %v1090 = vunpack.c.h.b16 %v237
  %v1091 = vunpack.c.l.b16 %v238
  %v1092 = vunpack.c.h.b16 %v238
  %v1093 = vunpack.c.l.b16 %v239
  %v1094 = vunpack.c.h.b16 %v239
  %v1095 = vunpack.c.l.b16 %v240
  %v1096 = vunpack.c.h.b16 %v240
  %v1097 = vunpack.c.l.b16 %v241
  %v1098 = vunpack.c.h.b16 %v241
  %v1099 = vunpack.c.l.b16 %v242
  %v1100 = vunpack.c.h.b16 %v242
  %v1101 = vunpack.c.l.b16 %v243
  %v1102 = vunpack.c.h.b16 %v243
  %v1103 = vunpack.c.l.b16 %v244
  %v1104 = vunpack.c.h.b16 %v244
  %v1105 = vunpack.c.l.b16 %v245
  %v1106 = vunpack.c.h.b16 %v245
  %v1107 = vunpack.c.l.b16 %v246
  %v1108 = vunpack.c.h.b16 %v246
  %v1109 = vunpack.c.l.b16 %v247
  %v1110 = vunpack.c.h.b16 %v247
  %v1111 = vunpack.c.l.b16 %v248
  %v1112 = vunpack.c.h.b16 %v248
  %v1113 = vunpack.c.l.b16 %v249
  %v1114 = vunpack.c.h.b16 %v249
  %v1115 = vunpack.c.l.b16 %v250
  %v1116 = vunpack.c.h.b16 %v250
  %v1117 = vunpack.c.l.b16 %v251
  %v1118 = vunpack.c.h.b16 %v251
  %v1119 = vunpack.c.l.b16 %v252
  %v1120 = vunpack.c.h.b16 %v252
  %v1121 = vunpack.c.l.b16 %v253
  %v1122 = vunpack.c.h.b16 %v253
  %v1123 = vunpack.c.l.b16 %v254
  %v1124 = vunpack.c.h.b16 %v254
  %v1125 = vunpack.c.l.b16 %v255
  %v1126 = vunpack.c.h.b16 %v255
  %v1127 = vunpack.c.l.b16 %v256
  %v1128 = vunpack.c.h.b16 %v256
  %v1129 = vunpack.c.l.b16 %v257
  %v1130 = vunpack.c.h.b16 %v257
  %v1131 = vunpack.c.l.b16 %v258
  %v1132 = vunpack.c.h.b16 %v258
  %v1133 = vunpack.c.l.b16 %v259
  %v1134 = vunpack.c.h.b16 %v259
  %v1135 = vunpack.c.l.b16 %v260
  %v1136 = vunpack.c.h.b16 %v260
  %v1137 = vunpack.c.l.b16 %v261
  %v1138 = vunpack.c.h.b16 %v261
  %v1139 = vunpack.c.l.b16 %v262
  %v1140 = vunpack.c.h.b16 %v262
  %v1141 = vunpack.c.l.b16 %v263
  %v1142 = vunpack.c.h.b16 %v263
  %v1143 = vunpack.c.l.b16 %v264
  %v1144 = vunpack.c.h.b16 %v264
  %v1145 = vunpack.c.l.b16 %v265
  %v1146 = vunpack.c.h.b16 %v265
  %v1147 = vunpack.c.l.b16 %v266
  %v1148 = vunpack.c.h.b16 %v266
  %v1149 = vunpack.c.l.b16 %v267
  %v1150 = vunpack.c.h.b16 %v267
  %v1151 = vunpack.c.l.b16 %v268
  %v1152 = vunpack.c.h.b16 %v268
  %v1153 = vunpack.c.l.b16 %v269
  %v1154 = vunpack.c.h.b16 %v269
  %v1155 = vunpack.c.l.b16 %v270
  %v1156 = vunpack.c.h.b16 %v270
  %v1157 = vunpack.c.l.b16 %v271
  %v1158 = vunpack.c.h.b16 %v271
  %v1159 = vunpack.c.l.b16 %v272
  %v1160 = vunpack.c.h.b16 %v272
  %v1161 = vunpack.c.l.b16 %v273
  %v1162 = vunpack.c.h.b16 %v273
  %v1163 = vunpack.c.l.b16 %v274
  %v1164 = vunpack.c.h.b16 %v274
  %v1165 = vunpack.c.l.b16 %v275
  %v1166 = vunpack.c.h.b16 %v275
  %v1167 = vunpack.c.l.b16 %v276
  %v1168 = vunpack.c.h.b16 %v276
  %v1169 = vunpack.c.l.b16 %v277
  %v1170 = vunpack.c.h.b16 %v277
  %v1171 = vunpack.c.l.b16 %v278
  %v1172 = vunpack.c.h.b16 %v278
  %v1173 = vunpack.c.l.b16 %v279
  %v1174 = vunpack.c.h.b16 %v279
  %v1175 = vunpack.c.l.b16 %v280
  %v1176 = vunpack.c.h.b16 %v280
  %v1177 = vunpack.c.l.b16 %v281
  %v1178 = vunpack.c.h.b16 %v281
  %v1179 = vunpack.c.l.b16 %v282
  %v1180 = vunpack.c.h.b16 %v282
  %v1181 = vunpack.c.l.b16 %v283
  %v1182 = vunpack.c.h.b16 %v283
  %v1183 = vunpack.c.l.b16 %v284
  %v1184 = vunpack.c.h.b16 %v284
  %v1185 = vunpack.c.l.b16 %v285
  %v1186 = vunpack.c.h.b16 %v285
  %v1187 = vunpack.c.l.b16 %v286
  %v1188 = vunpack.c.h.b16 %v286
  %v1189 = vunpack.c.l.b16 %v287
  %v1190 = vunpack.c.h.b16 %v287
  %v1191 = vunpack.c.l.b16 %v288
  %v1192 = vunpack.c.h.b16 %v288
  %v1193 = vunpack.c.l.b16 %v289
  %v1194 = vunpack.c.h.b16 %v289
  %v1195 = vunpack.c.l.b16 %v290
  %v1196 = vunpack.c.h.b16 %v290
  %v1197 = vunpack.c.l.b16 %v291
  %v1198 = vunpack.c.h.b16 %v291
  %v1199 = vunpack.c.l.b16 %v292
  %v1200 = vunpack.c.h.b16 %v292
  %v1201 = vunpack.c.l.b16 %v293
  %v1202 = vunpack.c.h.b16 %v293
  %v1203 = vunpack.c.l.b16 %v294
  %v1204 = vunpack.c.h.b16 %v294
  %v1205 = vunpack.c.l.b16 %v295
  %v1206 = vunpack.c.h.b16 %v295
  %v1207 = vunpack.c.l.b16 %v296
  %v1208 = vunpack.c.h.b16 %v296
  %v1209 = vunpack.c.l.b16 %v297
  %v1210 = vunpack.c.h.b16 %v297
  %v1211 = vunpack.c.l.b16 %v298
  %v1212 = vunpack.c.h.b16 %v298
  %v1213 = vunpack.c.l.b16 %v299
  %v1214 = vunpack.c.h.b16 %v299
  %v1215 = vunpack.c.l.b16 %v300
  %v1216 = vunpack.c.h.b16 %v300
  %v1217 = vunpack.c.l.b16 %v301
  %v1218 = vunpack.c.h.b16 %v301
  %v1219 = vunpack.c.l.b16 %v302
  %v1220 = vunpack.c.h.b16 %v302
  %v1221 = vunpack.c.l.b16 %v303
  %v1222 = vunpack.c.h.b16 %v303
  %v1223 = vunpack.c.l.b16 %v304
  %v1224 = vunpack.c.h.b16 %v304
  %v1225 = vunpack.c.l.b16 %v305
  %v1226 = vunpack.c.h.b16 %v305
  %v1227 = vunpack.c.l.b16 %v306
  %v1228 = vunpack.c.h.b16 %v306
  %v1229 = vunpack.c.l.b16 %v307
  %v1230 = vunpack.c.h.b16 %v307
  %v1231 = vunpack.c.l.b16 %v308
  %v1232 = vunpack.c.h.b16 %v308
  %v1233 = vunpack.c.l.b16 %v309
  %v1234 = vunpack.c.h.b16 %v309
  %v1235 = vunpack.c.l.b16 %v310
  %v1236 = vunpack.c.h.b16 %v310
  %v1237 = vunpack.c.l.b16 %v311
  %v1238 = vunpack.c.h.b16 %v311
  %v1239 = vunpack.c.l.b16 %v312
  %v1240 = vunpack.c.h.b16 %v312
  %v1241 = vunpack.c.l.b16 %v313
  %v1242 = vunpack.c.h.b16 %v313
  %v1243 = vunpack.c.l.b16 %v314
  %v1244 = vunpack.c.h.b16 %v314
  %v1245 = vunpack.c.l.b16 %v315
  %v1246 = vunpack.c.h.b16 %v315
  %v1247 = vunpack.c.l.b16 %v316
  %v1248 = vunpack.c.h.b16 %v316
  %v1249 = vunpack.c.l.b16 %v317
  %v1250 = vunpack.c.h.b16 %v317
  %v1251 = vunpack.c.l.b16 %v318
  %v1252 = vunpack.c.h.b16 %v318
  %v1253 = vunpack.c.l.b16 %v319
  %v1254 = vunpack.c.h.b16 %v319
  %v1255 = vunpack.c.l.b16 %v320
  %v1256 = vunpack.c.h.b16 %v320
  %v1257 = vunpack.c.l.b16 %v321
  %v1258 = vunpack.c.h.b16 %v321
  %v1259 = vunpack.c.l.b16 %v322
  %v1260 = vunpack.c.h.b16 %v322
  %v1261 = vunpack.c.l.b16 %v323
  %v1262 = vunpack.c.h.b16 %v323
  %v1263 = vunpack.c.l.b16 %v324
  %v1264 = vunpack.c.h.b16 %v324
  %v1265 = vunpack.c.l.b16 %v325
  %v1266 = vunpack.c.h.b16 %v325
  %v1267 = vunpack.c.l.b16 %v326
  %v1268 = vunpack.c.h.b16 %v326
  %v1269 = vunpack.c.l.b16 %v327
  %v1270 = vunpack.c.h.b16 %v327
  %v1271 = vunpack.c.l.b16 %v328
  %v1272 = vunpack.c.h.b16 %v328
  %v1273 = vunpack.c.l.b16 %v329
  %v1274 = vunpack.c.h.b16 %v329
  %v1275 = vunpack.c.l.b16 %v330
  %v1276 = vunpack.c.h.b16 %v330
  %v1277 = vunpack.c.l.b16 %v331
  %v1278 = vunpack.c.h.b16 %v331
  %v1279 = vunpack.c.l.b16 %v332
  %v1280 = vunpack.c.h.b16 %v332
  %v1281 = vunpack.c.l.b16 %v333
  %v1282 = vunpack.c.h.b16 %v333
  %v1283 = vunpack.c.l.b16 %v334
  %v1284 = vunpack.c.h.b16 %v334
  %v1285 = vunpack.c.l.b16 %v335
  %v1286 = vunpack.c.h.b16 %v335
  %v1287 = vunpack.c.l.b16 %v336
  %v1288 = vunpack.c.h.b16 %v336
  %v1289 = vunpack.c.l.b16 %v337
  %v1290 = vunpack.c.h.b16 %v337
  %v1291 = vunpack.c.l.b16 %v338
  %v1292 = vunpack.c.h.b16 %v338
  %v1293 = vunpack.c.l.b16 %v339
  %v1294 = vunpack.c.h.b16 %v339
  %v1295 = vunpack.c.l.b16 %v340
  %v1296 = vunpack.c.h.b16 %v340
  %v1297 = vunpack.c.l.b16 %v341
  %v1298 = vunpack.c.h.b16 %v341
  %v1299 = vunpack.c.l.b16 %v342
  %v1300 = vunpack.c.h.b16 %v342
  %v1301 = vunpack.c.l.b16 %v343
  %v1302 = vunpack.c.h.b16 %v343
  %v1303 = vunpack.c.l.b16 %v344
  %v1304 = vunpack.c.h.b16 %v344
  %v1305 = vpack.c.b16 %v801, %v793
  %v1306 = vpack.c.b16 %v802, %v794
  %v1307 = vpack.c.b16 %v803, %v795
  %v1308 = vpack.c.b16 %v804, %v796
  %v1309 = vpack.c.b16 %v805, %v797
  %v1310 = vpack.c.b16 %v806, %v798
  %v1311 = vpack.c.b16 %v807, %v799
  %v1312 = vpack.c.b16 %v808, %v800
  %v1313 = vpack.c.b16 %v817, %v809
  %v1314 = vpack.c.b16 %v818, %v810
  %v1315 = vpack.c.b16 %v819, %v811
  %v1316 = vpack.c.b16 %v820, %v812
  %v1317 = vpack.c.b16 %v821, %v813
  %v1318 = vpack.c.b16 %v822, %v814
  %v1319 = vpack.c.b16 %v823, %v815
  %v1320 = vpack.c.b16 %v824, %v816
  %v1321 = vpack.c.b16 %v833, %v825
  %v1322 = vpack.c.b16 %v834, %v826
  %v1323 = vpack.c.b16 %v835, %v827
  %v1324 = vpack.c.b16 %v836, %v828
  %v1325 = vpack.c.b16 %v837, %v829
  %v1326 = vpack.c.b16 %v838, %v830
  %v1327 = vpack.c.b16 %v839, %v831
  %v1328 = vpack.c.b16 %v840, %v832
  %v1329 = vpack.c.b16 %v849, %v841
  %v1330 = vpack.c.b16 %v850, %v842
  %v1331 = vpack.c.b16 %v851, %v843
  %v1332 = vpack.c.b16 %v852, %v844
  %v1333 = vpack.c.b16 %v853, %v845
  %v1334 = vpack.c.b16 %v854, %v846
  %v1335 = vpack.c.b16 %v855, %v847
  %v1336 = vpack.c.b16 %v856, %v848
  %v1337 = vpack.c.b16 %v865, %v857
  %v1338 = vpack.c.b16 %v866, %v858
  %v1339 = vpack.c.b16 %v867, %v859
  %v1340 = vpack.c.b16 %v868, %v860
  %v1341 = vpack.c.b16 %v869, %v861
  %v1342 = vpack.c.b16 %v870, %v862
  %v1343 = vpack.c.b16 %v871, %v863
  %v1344 = vpack.c.b16 %v872, %v864
  %v1345 = vpack.c.b16 %v881, %v873
  %v1346 = vpack.c.b16 %v882, %v874
  %v1347 = vpack.c.b16 %v883, %v875
  %v1348 = vpack.c.b16 %v884, %v876
  %v1349 = vpack.c.b16 %v885, %v877
  %v1350 = vpack.c.b16 %v886, %v878
  %v1351 = vpack.c.b16 %v887, %v879
  %v1352 = vpack.c.b16 %v888, %v880
  %v1353 = vpack.c.b16 %v897, %v889
  %v1354 = vpack.c.b16 %v898, %v890
  %v1355 = vpack.c.b16 %v899, %v891
  %v1356 = vpack.c.b16 %v900, %v892
  %v1357 = vpack.c.b16 %v901, %v893
  %v1358 = vpack.c.b16 %v902, %v894
  %v1359 = vpack.c.b16 %v903, %v895
  %v1360 = vpack.c.b16 %v904, %v896
  %v1361 = vpack.c.b16 %v913, %v905
  %v1362 = vpack.c.b16 %v914, %v906
  %v1363 = vpack.c.b16 %v915, %v907
  %v1364 = vpack.c.b16 %v916, %v908
  %v1365 = vpack.c.b16 %v917, %v909
  %v1366 = vpack.c.b16 %v918, %v910
  %v1367 = vpack.c.b16 %v919, %v911
  %v1368 = vpack.c.b16 %v920, %v912
  %v1369 = vpack.c.b16 %v929, %v921
  %v1370 = vpack.c.b16 %v930, %v922
  %v1371 = vpack.c.b16 %v931, %v923
  %v1372 = vpack.c.b16 %v932, %v924
  %v1373 = vpack.c.b16 %v933, %v925
  %v1374 = vpack.c.b16 %v934, %v926
  %v1375 = vpack.c.b16 %v935, %v927
  %v1376 = vpack.c.b16 %v936, %v928
  %v1377 = vpack.c.b16 %v945, %v937
  %v1378 = vpack.c.b16 %v946, %v938
  %v1379 = vpack.c.b16 %v947, %v939
  %v1380 = vpack.c.b16 %v948, %v940
  %v1381 = vpack.c.b16 %v949, %v941
  %v1382 = vpack.c.b16 %v950, %v942
  %v1383 = vpack.c.b16 %v951, %v943
  %v1384 = vpack.c.b16 %v952, %v944
  %v1385 = vpack.c.b16 %v961, %v953
  %v1386 = vpack.c.b16 %v962, %v954
  %v1387 = vpack.c.b16 %v963, %v955
  %v1388 = vpack.c.b16 %v964, %v956
  %v1389 = vpack.c.b16 %v965, %v957
  %v1390 = vpack.c.b16 %v966, %v958
  %v1391 = vpack.c.b16 %v967, %v959
  %v1392 = vpack.c.b16 %v968, %v960
  %v1393 = vpack.c.b16 %v977, %v969
  %v1394 = vpack.c.b16 %v978, %v970
  %v1395 = vpack.c.b16 %v979, %v971
  %v1396 = vpack.c.b16 %v980, %v972
  %v1397 = vpack.c.b16 %v981, %v973
  %v1398 = vpack.c.b16 %v982, %v974
  %v1399 = vpack.c.b16 %v983, %v975
  %v1400 = vpack.c.b16 %v984, %v976
  %v1401 = vpack.c.b16 %v993, %v985
  %v1402 = vpack.c.b16 %v994, %v986
  %v1403 = vpack.c.b16 %v995, %v987
  %v1404 = vpack.c.b16 %v996, %v988
  %v1405 = vpack.c.b16 %v997, %v989
  %v1406 = vpack.c.b16 %v998, %v990
  %v1407 = vpack.c.b16 %v999, %v991
  %v1408 = vpack.c.b16 %v1000, %v992
  %v1409 = vpack.c.b16 %v1009, %v1001
  %v1410 = vpack.c.b16 %v1010, %v1002
  %v1411 = vpack.c.b16 %v1011, %v1003
  %v1412 = vpack.c.b16 %v1012, %v1004
  %v1413 = vpack.c.b16 %v1013, %v1005
  %v1414 = vpack.c.b16 %v1014, %v1006
  %v1415 = vpack.c.b16 %v1015, %v1007
  %v1416 = vpack.c.b16 %v1016, %v1008
  %v1417 = vpack.c.b16 %v1025, %v1017
  %v1418 = vpack.c.b16 %v1026, %v1018
  %v1419 = vpack.c.b16 %v1027, %v1019
  %v1420 = vpack.c.b16 %v1028, %v1020
  %v1421 = vpack.c.b16 %v1029, %v1021
  %v1422 = vpack.c.b16 %v1030, %v1022
  %v1423 = vpack.c.b16 %v1031, %v1023
  %v1424 = vpack.c.b16 %v1032, %v1024
  %v1425 = vpack.c.b16 %v1041, %v1033
  %v1426 = vpack.c.b16 %v1042, %v1034
  %v1427 = vpack.c.b16 %v1043, %v1035
  %v1428 = vpack.c.b16 %v1044, %v1036
  %v1429 = vpack.c.b16 %v1045, %v1037
  %v1430 = vpack.c.b16 %v1046, %v1038
  %v1431 = vpack.c.b16 %v1047, %v1039
  %v1432 = vpack.c.b16 %v1048, %v1040
  %v1433 = vpack.c.b16 %v1057, %v1049
  %v1434 = vpack.c.b16 %v1058, %v1050
  %v1435 = vpack.c.b16 %v1059, %v1051
  %v1436 = vpack.c.b16 %v1060, %v1052
  %v1437 = vpack.c.b16 %v1061, %v1053
  %v1438 = vpack.c.b16 %v1062, %v1054
  %v1439 = vpack.c.b16 %v1063, %v1055
  %v1440 = vpack.c.b16 %v1064, %v1056
  %v1441 = vpack.c.b16 %v1073, %v1065
  %v1442 = vpack.c.b16 %v1074, %v1066
  %v1443 = vpack.c.b16 %v1075, %v1067
  %v1444 = vpack.c.b16 %v1076, %v1068
  %v1445 = vpack.c.b16 %v1077, %v1069
  %v1446 = vpack.c.b16 %v1078, %v1070
  %v1447 = vpack.c.b16 %v1079, %v1071
  %v1448 = vpack.c.b16 %v1080, %v1072
  %v1449 = vpack.c.b16 %v1089, %v1081
  %v1450 = vpack.c.b16 %v1090, %v1082
  %v1451 = vpack.c.b16 %v1091, %v1083
  %v1452 = vpack.c.b16 %v1092, %v1084
  %v1453 = vpack.c.b16 %v1093, %v1085
  %v1454 = vpack.c.b16 %v1094, %v1086
  %v1455 = vpack.c.b16 %v1095, %v1087
  %v1456 = vpack.c.b16 %v1096, %v1088
  %v1457 = vpack.c.b16 %v1105, %v1097
  %v1458 = vpack.c.b16 %v1106, %v1098
  %v1459 = vpack.c.b16 %v1107, %v1099
  %v1460 = vpack.c.b16 %v1108, %v1100
  %v1461 = vpack.c.b16 %v1109, %v1101
  %v1462 = vpack.c.b16 %v1110, %v1102
  %v1463 = vpack.c.b16 %v1111, %v1103
  %v1464 = vpack.c.b16 %v1112, %v1104
  %v1465 = vpack.c.b16 %v1121, %v1113
  %v1466 = vpack.c.b16 %v1122, %v1114
  %v1467 = vpack.c.b16 %v1123, %v1115
  %v1468 = vpack.c.b16 %v1124, %v1116
  %v1469 = vpack.c.b16 %v1125, %v1117
  %v1470 = vpack.c.b16 %v1126, %v1118
  %v1471 = vpack.c.b16 %v1127, %v1119
  %v1472 = vpack.c.b16 %v1128, %v1120
  %v1473 = vpack.c.b16 %v1137, %v1129
  %v1474 = vpack.c.b16 %v1138, %v1130
  %v1475 = vpack.c.b16 %v1139, %v1131
  %v1476 = vpack.c.b16 %v1140, %v1132
  %v1477 = vpack.c.b16 %v1141, %v1133
  %v1478 = vpack.c.b16 %v1142, %v1134
  %v1479 = vpack.c.b16 %v1143, %v1135
  %v1480 = vpack.c.b16 %v1144, %v1136
  %v1481 = vpack.c.b16 %v1153, %v1145
  %v1482 = vpack.c.b16 %v1154, %v1146
  %v1483 = vpack.c.b16 %v1155, %v1147
  %v1484 = vpack.c.b16 %v1156, %v1148
  %v1485 = vpack.c.b16 %v1157, %v1149
  %v1486 = vpack.c.b16 %v1158, %v1150
  %v1487 = vpack.c.b16 %v1159, %v1151
  %v1488 = vpack.c.b16 %v1160, %v1152
  %v1489 = vpack.c.b16 %v1169, %v1161
  %v1490 = vpack.c.b16 %v1170, %v1162
  %v1491 = vpack.c.b16 %v1171, %v1163
  %v1492 = vpack.c.b16 %v1172, %v1164
  %v1493 = vpack.c.b16 %v1173, %v1165
  %v1494 = vpack.c.b16 %v1174, %v1166
  %v1495 = vpack.c.b16 %v1175, %v1167
  %v1496 = vpack.c.b16 %v1176, %v1168
  %v1497 = vpack.c.b16 %v1185, %v1177
  %v1498 = vpack.c.b16 %v1186, %v1178
  %v1499 = vpack.c.b16 %v1187, %v1179
  %v1500 = vpack.c.b16 %v1188, %v1180
  %v1501 = vpack.c.b16 %v1189, %v1181
  %v1502 = vpack.c.b16 %v1190, %v1182
  %v1503 = vpack.c.b16 %v1191, %v1183
  %v1504 = vpack.c.b16 %v1192, %v1184
  %v1505 = vpack.c.b16 %v1201, %v1193
  %v1506 = vpack.c.b16 %v1202, %v1194
  %v1507 = vpack.c.b16 %v1203, %v1195
  %v1508 = vpack.c.b16 %v1204, %v1196
  %v1509 = vpack.c.b16 %v1205, %v1197
  %v1510 = vpack.c.b16 %v1206, %v1198
  %v1511 = vpack.c.b16 %v1207, %v1199
  %v1512 = vpack.c.b16 %v1208, %v1200
  %v1513 = vpack.c.b16 %v1217, %v1209
  %v1514 = vpack.c.b16 %v1218, %v1210
  %v1515 = vpack.c.b16 %v1219, %v1211
  %v1516 = vpack.c.b16 %v1220, %v1212
  %v1517 = vpack.c.b16 %v1221, %v1213
  %v1518 = vpack.c.b16 %v1222, %v1214
  %v1519 = vpack.c.b16 %v1223, %v1215
  %v1520 = vpack.c.b16 %v1224, %v1216
  %v1521 = vpack.c.b16 %v1233, %v1225
  %v1522 = vpack.c.b16 %v1234, %v1226
  %v1523 = vpack.c.b16 %v1235, %v1227
  %v1524 = vpack.c.b16 %v1236, %v1228
  %v1525 = vpack.c.b16 %v1237, %v1229
  %v1526 = vpack.c.b16 %v1238, %v1230
  %v1527 = vpack.c.b16 %v1239, %v1231
  %v1528 = vpack.c.b16 %v1240, %v1232
  %v1529 = vpack.c.b16 %v1249, %v1241
  %v1530 = vpack.c.b16 %v1250, %v1242
  %v1531 = vpack.c.b16 %v1251, %v1243
  %v1532 = vpack.c.b16 %v1252, %v1244
  %v1533 = vpack.c.b16 %v1253, %v1245
  %v1534 = vpack.c.b16 %v1254, %v1246
  %v1535 = vpack.c.b16 %v1255, %v1247
  %v1536 = vpack.c.b16 %v1256, %v1248
  %v1537 = vpack.c.b16 %v1265, %v1257
  %v1538 = vpack.c.b16 %v1266, %v1258
  %v1539 = vpack.c.b16 %v1267, %v1259
  %v1540 = vpack.c.b16 %v1268, %v1260
  %v1541 = vpack.c.b16 %v1269, %v1261
  %v1542 = vpack.c.b16 %v1270, %v1262
  %v1543 = vpack.c.b16 %v1271, %v1263
  %v1544 = vpack.c.b16 %v1272, %v1264
  %v1545 = vpack.c.b16 %v1281, %v1273
  %v1546 = vpack.c.b16 %v1282, %v1274
  %v1547 = vpack.c.b16 %v1283, %v1275
  %v1548 = vpack.c.b16 %v1284, %v1276
  %v1549 = vpack.c.b16 %v1285, %v1277
  %v1550 = vpack.c.b16 %v1286, %v1278
  %v1551 = vpack.c.b16 %v1287, %v1279
  %v1552 = vpack.c.b16 %v1288, %v1280
  %v1553 = vpack.c.b16 %v1297, %v1289
  %v1554 = vpack.c.b16 %v1298, %v1290
  %v1555 = vpack.c.b16 %v1299, %v1291
  %v1556 = vpack.c.b16 %v1300, %v1292
  %v1557 = vpack.c.b16 %v1301, %v1293
  %v1558 = vpack.c.b16 %v1302, %v1294
  %v1559 = vpack.c.b16 %v1303, %v1295
  %v1560 = vpack.c.b16 %v1304, %v1296
  %v1945 = vunpack.c.l.b16 %v409
  %v1946 = vunpack.c.l.b16 %v410
  %v1947 = vunpack.c.l.b16 %v411
  %v1948 = vunpack.c.l.b16 %v412
  %v1949 = vunpack.c.l.b16 %v413
  %v1950 = vunpack.c.l.b16 %v414
  %v1951 = vunpack.c.l.b16 %v415
  %v1952 = vunpack.c.l.b16 %v416
  %v1953 = vunpack.c.l.b16 %v417
  %v1954 = vunpack.c.l.b16 %v418
  %v1955 = vunpack.c.l.b16 %v419
  %v1956 = vunpack.c.l.b16 %v420
  %v1957 = vunpack.c.l.b16 %v421
  %v1958 = vunpack.c.l.b16 %v422
  %v1959 = vunpack.c.l.b16 %v423
  %v1960 = vunpack.c.l.b16 %v424
  %v1961 = vunpack.c.l.b16 %v425
  %v1962 = vunpack.c.l.b16 %v426
  %v1963 = vunpack.c.l.b16 %v427
  %v1964 = vunpack.c.l.b16 %v428
  %v1965 = vunpack.c.l.b16 %v429
  %v1966 = vunpack.c.l.b16 %v430
  %v1967 = vunpack.c.l.b16 %v431
  %v1968 = vunpack.c.l.b16 %v432
  %v1969 = vunpack.c.l.b16 %v433
  %v1970 = vunpack.c.l.b16 %v434
  %v1971 = vunpack.c.l.b16 %v435
  %v1972 = vunpack.c.l.b16 %v436
  %v1973 = vunpack.c.l.b16 %v437
  %v1974 = vunpack.c.l.b16 %v438
  %v1975 = vunpack.c.l.b16 %v439
  %v1976 = vunpack.c.l.b16 %v440
  %v1977 = vunpack.c.l.b16 %v441
  %v1978 = vunpack.c.l.b16 %v442
  %v1979 = vunpack.c.l.b16 %v443
  %v1980 = vunpack.c.l.b16 %v444
  %v1981 = vunpack.c.l.b16 %v445
  %v1982 = vunpack.c.l.b16 %v446
  %v1983 = vunpack.c.l.b16 %v447
  %v1984 = vunpack.c.l.b16 %v448
  %v1985 = vunpack.c.l.b16 %v449
  %v1986 = vunpack.c.l.b16 %v450
  %v1987 = vunpack.c.l.b16 %v451
  %v1988 = vunpack.c.l.b16 %v452
  %v1989 = vunpack.c.l.b16 %v453
  %v1990 = vunpack.c.l.b16 %v454
  %v1991 = vunpack.c.l.b16 %v455
  %v1992 = vunpack.c.l.b16 %v456
  %v1993 = vunpack.c.l.b16 %v457
  %v1994 = vunpack.c.l.b16 %v458
  %v1995 = vunpack.c.l.b16 %v459
  %v1996 = vunpack.c.l.b16 %v460
  %v1997 = vunpack.c.l.b16 %v461
  %v1998 = vunpack.c.l.b16 %v462
  %v1999 = vunpack.c.l.b16 %v463
  %v2000 = vunpack.c.l.b16 %v464
  %v2001 = vunpack.c.l.b16 %v465
  %v2002 = vunpack.c.l.b16 %v466
  %v2003 = vunpack.c.l.b16 %v467
  %v2004 = vunpack.c.l.b16 %v468
  %v2005 = vunpack.c.l.b16 %v469
  %v2006 = vunpack.c.l.b16 %v470
  %v2007 = vunpack.c.l.b16 %v471
  %v2008 = vunpack.c.l.b16 %v472
  %v2009 = vunpack.c.l.b16 %v473
  %v2010 = vunpack.c.l.b16 %v474
  %v2011 = vunpack.c.l.b16 %v475
  %v2012 = vunpack.c.l.b16 %v476
  %v2013 = vunpack.c.l.b16 %v477
  %v2014 = vunpack.c.l.b16 %v478
  %v2015 = vunpack.c.l.b16 %v479
  %v2016 = vunpack.c.l.b16 %v480
  %v2017 = vunpack.c.l.b16 %v481
  %v2018 = vunpack.c.l.b16 %v482
  %v2019 = vunpack.c.l.b16 %v483
  %v2020 = vunpack.c.l.b16 %v484
  %v2021 = vunpack.c.l.b16 %v485
  %v2022 = vunpack.c.l.b16 %v486
  %v2023 = vunpack.c.l.b16 %v487
  %v2024 = vunpack.c.l.b16 %v488
  %v2025 = vunpack.c.l.b16 %v489
  %v2026 = vunpack.c.l.b16 %v490
  %v2027 = vunpack.c.l.b16 %v491
  %v2028 = vunpack.c.l.b16 %v492
  %v2029 = vunpack.c.l.b16 %v493
  %v2030 = vunpack.c.l.b16 %v494
  %v2031 = vunpack.c.l.b16 %v495
  %v2032 = vunpack.c.l.b16 %v496
  %v2033 = vunpack.c.l.b16 %v497
  %v2034 = vunpack.c.l.b16 %v498
  %v2035 = vunpack.c.l.b16 %v499
  %v2036 = vunpack.c.l.b16 %v500
  %v2037 = vunpack.c.l.b16 %v501
  %v2038 = vunpack.c.l.b16 %v502
  %v2039 = vunpack.c.l.b16 %v503
  %v2040 = vunpack.c.l.b16 %v504
  %v2041 = vunpack.c.l.b16 %v505
  %v2042 = vunpack.c.l.b16 %v506
  %v2043 = vunpack.c.l.b16 %v507
  %v2044 = vunpack.c.l.b16 %v508
  %v2045 = vunpack.c.l.b16 %v509
  %v2046 = vunpack.c.l.b16 %v510
  %v2047 = vunpack.c.l.b16 %v511
  %v2048 = vunpack.c.l.b16 %v512
  %v2049 = vunpack.c.l.b16 %v513
  %v2050 = vunpack.c.l.b16 %v514
  %v2051 = vunpack.c.l.b16 %v515
  %v2052 = vunpack.c.l.b16 %v516
  %v2053 = vunpack.c.l.b16 %v517
  %v2054 = vunpack.c.l.b16 %v518
  %v2055 = vunpack.c.l.b16 %v519
  %v2056 = vunpack.c.l.b16 %v520
  %v2057 = vunpack.c.l.b16 %v521
  %v2058 = vunpack.c.l.b16 %v522
  %v2059 = vunpack.c.l.b16 %v523
  %v2060 = vunpack.c.l.b16 %v524
  %v2061 = vunpack.c.l.b16 %v525
  %v2062 = vunpack.c.l.b16 %v526
  %v2063 = vunpack.c.l.b16 %v527
  %v2064 = vunpack.c.l.b16 %v528
  %v2065 = vunpack.c.l.b16 %v529
  %v2066 = vunpack.c.l.b16 %v530
  %v2067 = vunpack.c.l.b16 %v531
  %v2068 = vunpack.c.l.b16 %v532
  %v2069 = vunpack.c.l.b16 %v533
  %v2070 = vunpack.c.l.b16 %v534
  %v2071 = vunpack.c.l.b16 %v535
  %v2072 = vunpack.c.l.b16 %v536
  %v2073 = vpack.c.b16 %v1946, %v1945
  %v2074 = vpack.c.b16 %v1948, %v1947
  %v2075 = vpack.c.b16 %v1950, %v1949
  %v2076 = vpack.c.b16 %v1952, %v1951
  %v2077 = vpack.c.b16 %v1954, %v1953
  %v2078 = vpack.c.b16 %v1956, %v1955
  %v2079 = vpack.c.b16 %v1958, %v1957
  %v2080 = vpack.c.b16 %v1960, %v1959
  %v2081 = vpack.c.b16 %v1962, %v1961
  %v2082 = vpack.c.b16 %v1964, %v1963
  %v2083 = vpack.c.b16 %v1966, %v1965
  %v2084 = vpack.c.b16 %v1968, %v1967
  %v2085 = vpack.c.b16 %v1970, %v1969
  %v2086 = vpack.c.b16 %v1972, %v1971
  %v2087 = vpack.c.b16 %v1974, %v1973
  %v2088 = vpack.c.b16 %v1976, %v1975
  %v2089 = vpack.c.b16 %v1978, %v1977
  %v2090 = vpack.c.b16 %v1980, %v1979
  %v2091 = vpack.c.b16 %v1982, %v1981
  %v2092 = vpack.c.b16 %v1984, %v1983
  %v2093 = vpack.c.b16 %v1986, %v1985
  %v2094 = vpack.c.b16 %v1988, %v1987
  %v2095 = vpack.c.b16 %v1990, %v1989
  %v2096 = vpack.c.b16 %v1992, %v1991
  %v2097 = vpack.c.b16 %v1994, %v1993
  %v2098 = vpack.c.b16 %v1996, %v1995
  %v2099 = vpack.c.b16 %v1998, %v1997
  %v2100 = vpack.c.b16 %v2000, %v1999
  %v2101 = vpack.c.b16 %v2002, %v2001
  %v2102 = vpack.c.b16 %v2004, %v2003
  %v2103 = vpack.c.b16 %v2006, %v2005
  %v2104 = vpack.c.b16 %v2008, %v2007
  %v2105 = vpack.c.b16 %v2010, %v2009
  %v2106 = vpack.c.b16 %v2012, %v2011
  %v2107 = vpack.c.b16 %v2014, %v2013
  %v2108 = vpack.c.b16 %v2016, %v2015
  %v2109 = vpack.c.b16 %v2018, %v2017
  %v2110 = vpack.c.b16 %v2020, %v2019
  %v2111 = vpack.c.b16 %v2022, %v2021
  %v2112 = vpack.c.b16 %v2024, %v2023
  %v2113 = vpack.c.b16 %v2026, %v2025
  %v2114 = vpack.c.b16 %v2028, %v2027
  %v2115 = vpack.c.b16 %v2030, %v2029
  %v2116 = vpack.c.b16 %v2032, %v2031
  %v2117 = vpack.c.b16 %v2034, %v2033
  %v2118 = vpack.c.b16 %v2036, %v2035
  %v2119 = vpack.c.b16 %v2038, %v2037
  %v2120 = vpack.c.b16 %v2040, %v2039
  %v2121 = vpack.c.b16 %v2042, %v2041
  %v2122 = vpack.c.b16 %v2044, %v2043
  %v2123 = vpack.c.b16 %v2046, %v2045
  %v2124 = vpack.c.b16 %v2048, %v2047
  %v2125 = vpack.c.b16 %v2050, %v2049
  %v2126 = vpack.c.b16 %v2052, %v2051
  %v2127 = vpack.c.b16 %v2054, %v2053
  %v2128 = vpack.c.b16 %v2056, %v2055
  %v2129 = vpack.c.b16 %v2058, %v2057
  %v2130 = vpack.c.b16 %v2060, %v2059
  %v2131 = vpack.c.b16 %v2062, %v2061
  %v2132 = vpack.c.b16 %v2064, %v2063
  %v2133 = vpack.c.b16 %v2066, %v2065
  %v2134 = vpack.c.b16 %v2068, %v2067
  %v2135 = vpack.c.b16 %v2070, %v2069
  %v2136 = vpack.c.b16 %v2072, %v2071
  %2201 = vmatprep.subr.bf16.mxu0 0
  %2202 = vmatpush1.bf16.msra.mxu0 %v2073
  %2203 = vmatprep.subr.bf16.mxu0 0
  %2204 = vmatpush1.bf16.msra.mxu0 %v2074
  %2205 = vmatprep.subr.bf16.mxu0 0
  %2206 = vmatpush1.bf16.msra.mxu0 %v2075
  %2207 = vmatprep.subr.bf16.mxu0 0
  %2208 = vmatpush1.bf16.msra.mxu0 %v2076
  %2209 = vmatprep.subr.bf16.mxu0 0
  %2210 = vmatpush1.bf16.msra.mxu0 %v2077
  %2211 = vmatprep.subr.bf16.mxu0 0
  %2212 = vmatpush1.bf16.msra.mxu0 %v2078
  %2213 = vmatprep.subr.bf16.mxu0 0
  %2214 = vmatpush1.bf16.msra.mxu0 %v2079
  %2215 = vmatprep.subr.bf16.mxu0 0
  %2216 = vmatpush1.bf16.msra.mxu0 %v2080
  %2217 = vmatprep.subr.bf16.mxu0 0
  %2218 = vmatpush1.bf16.msra.mxu0 %v2081
  %2219 = vmatprep.subr.bf16.mxu0 0
  %2220 = vmatpush1.bf16.msra.mxu0 %v2082
  %2221 = vmatprep.subr.bf16.mxu0 0
  %2222 = vmatpush1.bf16.msra.mxu0 %v2083
  %2223 = vmatprep.subr.bf16.mxu0 0
  %2224 = vmatpush1.bf16.msra.mxu0 %v2084
  %2225 = vmatprep.subr.bf16.mxu0 0
  %2226 = vmatpush1.bf16.msra.mxu0 %v2085
  %2227 = vmatprep.subr.bf16.mxu0 0
  %2228 = vmatpush1.bf16.msra.mxu0 %v2086
  %2229 = vmatprep.subr.bf16.mxu0 0
  %2230 = vmatpush1.bf16.msra.mxu0 %v2087
  %2231 = vmatprep.subr.bf16.mxu0 0
  %2232 = vmatpush1.bf16.msra.mxu0 %v2088
  %2233 = vmatprep.mubr.bf16.mxu0 %v1306
  %2234 = vmatmul.mubr.bf16.gmra.mrb[0].mxu0 %v1305
  %v2235 = vpop.f32.mrb[0].mxu0
  %v2236 = vadd.f32 0.0, %v2235
  %v2237 = vpop.f32.mrb[0].mxu0
  %v2238 = vpop.f32.mrb[0].mxu0
  %v2239 = vadd.f32 0.0, %v2238
  %v2240 = vpop.f32.mrb[0].mxu0
  %2241 = vmatprep.mubr.bf16.mxu0 %v1314
  %2242 = vmatmul.mubr.bf16.gmra.mrb[0].mxu0 %v1313
  %v2243 = vpop.f32.mrb[0].mxu0
  %v2244 = vadd.f32 0.0, %v2243
  %v2245 = vpop.f32.mrb[0].mxu0
  %v2246 = vpop.f32.mrb[0].mxu0
  %v2247 = vadd.f32 0.0, %v2246
  %v2248 = vpop.f32.mrb[0].mxu0
  %2249 = vmatprep.mubr.bf16.mxu0 %v1322
  %2250 = vmatmul.mubr.bf16.gmra.mrb[0].mxu0 %v1321
  %v2251 = vpop.f32.mrb[0].mxu0
  %v2252 = vadd.f32 0.0, %v2251
  %v2253 = vpop.f32.mrb[0].mxu0
  %v2254 = vpop.f32.mrb[0].mxu0
  %v2255 = vadd.f32 0.0, %v2254
  %v2256 = vpop.f32.mrb[0].mxu0
  %2257 = vmatprep.mubr.bf16.mxu0 %v1330
  %2258 = vmatmul.mubr.bf16.gmra.mrb[0].mxu0 %v1329
  %v2259 = vpop.f32.mrb[0].mxu0
  %v2260 = vadd.f32 0.0, %v2259
  %v2261 = vpop.f32.mrb[0].mxu0
  %v2262 = vpop.f32.mrb[0].mxu0
  %v2263 = vadd.f32 0.0, %v2262
  %v2264 = vpop.f32.mrb[0].mxu0
  %2265 = vmatprep.mubr.bf16.mxu0 %v1338
  %2266 = vmatmul.mubr.bf16.gmra.mrb[0].mxu0 %v1337
  %v2267 = vpop.f32.mrb[0].mxu0
  %v2268 = vadd.f32 0.0, %v2267
  %v2269 = vpop.f32.mrb[0].mxu0
  %v2270 = vpop.f32.mrb[0].mxu0
  %v2271 = vadd.f32 0.0, %v2270
  %v2272 = vpop.f32.mrb[0].mxu0
  %2273 = vmatprep.mubr.bf16.mxu0 %v1346
  %2274 = vmatmul.mubr.bf16.gmra.mrb[0].mxu0 %v1345
  %v2275 = vpop.f32.mrb[0].mxu0
  %v2276 = vadd.f32 0.0, %v2275
  %v2277 = vpop.f32.mrb[0].mxu0
  %v2278 = vpop.f32.mrb[0].mxu0
  %v2279 = vadd.f32 0.0, %v2278
  %v2280 = vpop.f32.mrb[0].mxu0
  %2281 = vmatprep.mubr.bf16.mxu0 %v1354
  %2282 = vmatmul.mubr.bf16.gmra.mrb[0].mxu0 %v1353
  %v2283 = vpop.f32.mrb[0].mxu0
  %v2284 = vadd.f32 0.0, %v2283
  %v2285 = vpop.f32.mrb[0].mxu0
  %v2286 = vpop.f32.mrb[0].mxu0
  %v2287 = vadd.f32 0.0, %v2286
  %v2288 = vpop.f32.mrb[0].mxu0
  %2289 = vmatprep.mubr.bf16.mxu0 %v1362
  %2290 = vmatmul.mubr.bf16.gmra.mrb[0].mxu0 %v1361
  %v2291 = vpop.f32.mrb[0].mxu0
  %v2292 = vadd.f32 0.0, %v2291
  %v2293 = vpop.f32.mrb[0].mxu0
  %v2294 = vpop.f32.mrb[0].mxu0
  %v2295 = vadd.f32 0.0, %v2294
  %v2296 = vpop.f32.mrb[0].mxu0
  %2297 = vmatprep.mubr.bf16.mxu0 %v1370
  %2298 = vmatmul.mubr.bf16.gmra.mrb[0].mxu0 %v1369
  %v2299 = vpop.f32.mrb[0].mxu0
  %v2300 = vadd.f32 0.0, %v2299
  %v2301 = vpop.f32.mrb[0].mxu0
  %v2302 = vpop.f32.mrb[0].mxu0
  %v2303 = vadd.f32 0.0, %v2302
  %v2304 = vpop.f32.mrb[0].mxu0
  %2305 = vmatprep.mubr.bf16.mxu0 %v1378
  %2306 = vmatmul.mubr.bf16.gmra.mrb[0].mxu0 %v1377
  %v2307 = vpop.f32.mrb[0].mxu0
  %v2308 = vadd.f32 0.0, %v2307
  %v2309 = vpop.f32.mrb[0].mxu0
  %v2310 = vpop.f32.mrb[0].mxu0
  %v2311 = vadd.f32 0.0, %v2310
  %v2312 = vpop.f32.mrb[0].mxu0
  %2313 = vmatprep.mubr.bf16.mxu0 %v1386
  %2314 = vmatmul.mubr.bf16.gmra.mrb[0].mxu0 %v1385
  %v2315 = vpop.f32.mrb[0].mxu0
  %v2316 = vadd.f32 0.0, %v2315
  %v2317 = vpop.f32.mrb[0].mxu0
  %v2318 = vpop.f32.mrb[0].mxu0
  %v2319 = vadd.f32 0.0, %v2318
  %v2320 = vpop.f32.mrb[0].mxu0
  %2321 = vmatprep.mubr.bf16.mxu0 %v1394
  %2322 = vmatmul.mubr.bf16.gmra.mrb[0].mxu0 %v1393
  %v2323 = vpop.f32.mrb[0].mxu0
  %v2324 = vadd.f32 0.0, %v2323
  %v2325 = vpop.f32.mrb[0].mxu0
  %v2326 = vpop.f32.mrb[0].mxu0
  %v2327 = vadd.f32 0.0, %v2326
  %v2328 = vpop.f32.mrb[0].mxu0
  %2329 = vmatprep.mubr.bf16.mxu0 %v1402
  %2330 = vmatmul.mubr.bf16.gmra.mrb[0].mxu0 %v1401
  %v2331 = vpop.f32.mrb[0].mxu0
  %v2332 = vadd.f32 0.0, %v2331
  %v2333 = vpop.f32.mrb[0].mxu0
  %v2334 = vpop.f32.mrb[0].mxu0
  %v2335 = vadd.f32 0.0, %v2334
  %v2336 = vpop.f32.mrb[0].mxu0
  %2337 = vmatprep.mubr.bf16.mxu0 %v1410
  %2338 = vmatmul.mubr.bf16.gmra.mrb[0].mxu0 %v1409
  %v2339 = vpop.f32.mrb[0].mxu0
  %v2340 = vadd.f32 0.0, %v2339
  %v2341 = vpop.f32.mrb[0].mxu0
  %v2342 = vpop.f32.mrb[0].mxu0
  %v2343 = vadd.f32 0.0, %v2342
  %v2344 = vpop.f32.mrb[0].mxu0
  %2345 = vmatprep.mubr.bf16.mxu0 %v1418
  %2346 = vmatmul.mubr.bf16.gmra.mrb[0].mxu0 %v1417
  %v2347 = vpop.f32.mrb[0].mxu0
  %v2348 = vadd.f32 0.0, %v2347
  %v2349 = vpop.f32.mrb[0].mxu0
  %v2350 = vpop.f32.mrb[0].mxu0
  %v2351 = vadd.f32 0.0, %v2350
  %v2352 = vpop.f32.mrb[0].mxu0
  %2353 = vmatprep.mubr.bf16.mxu0 %v1426
  %2354 = vmatmul.mubr.bf16.gmra.mrb[0].mxu0 %v1425
  %v2355 = vpop.f32.mrb[0].mxu0
  %v2356 = vadd.f32 0.0, %v2355
  %v2357 = vpop.f32.mrb[0].mxu0
  %v2358 = vpop.f32.mrb[0].mxu0
  %v2359 = vadd.f32 0.0, %v2358
  %v2360 = vpop.f32.mrb[0].mxu0
  %2361 = vmatprep.mubr.bf16.mxu0 %v1434
  %2362 = vmatmul.mubr.bf16.gmra.mrb[0].mxu0 %v1433
  %v2363 = vpop.f32.mrb[0].mxu0
  %v2364 = vadd.f32 0.0, %v2363
  %v2365 = vpop.f32.mrb[0].mxu0
  %v2366 = vpop.f32.mrb[0].mxu0
  %v2367 = vadd.f32 0.0, %v2366
  %v2368 = vpop.f32.mrb[0].mxu0
  %2369 = vmatprep.mubr.bf16.mxu0 %v1442
  %2370 = vmatmul.mubr.bf16.gmra.mrb[0].mxu0 %v1441
  %v2371 = vpop.f32.mrb[0].mxu0
  %v2372 = vadd.f32 0.0, %v2371
  %v2373 = vpop.f32.mrb[0].mxu0
  %v2374 = vpop.f32.mrb[0].mxu0
  %v2375 = vadd.f32 0.0, %v2374
  %v2376 = vpop.f32.mrb[0].mxu0
  %2377 = vmatprep.mubr.bf16.mxu0 %v1450
  %2378 = vmatmul.mubr.bf16.gmra.mrb[0].mxu0 %v1449
  %v2379 = vpop.f32.mrb[0].mxu0
  %v2380 = vadd.f32 0.0, %v2379
  %v2381 = vpop.f32.mrb[0].mxu0
  %v2382 = vpop.f32.mrb[0].mxu0
  %v2383 = vadd.f32 0.0, %v2382
  %v2384 = vpop.f32.mrb[0].mxu0
  %2385 = vmatprep.mubr.bf16.mxu0 %v1458
  %2386 = vmatmul.mubr.bf16.gmra.mrb[0].mxu0 %v1457
  %v2387 = vpop.f32.mrb[0].mxu0
  %v2388 = vadd.f32 0.0, %v2387
  %v2389 = vpop.f32.mrb[0].mxu0
  %v2390 = vpop.f32.mrb[0].mxu0
  %v2391 = vadd.f32 0.0, %v2390
  %v2392 = vpop.f32.mrb[0].mxu0
  %2393 = vmatprep.mubr.bf16.mxu0 %v1466
  %2394 = vmatmul.mubr.bf16.gmra.mrb[0].mxu0 %v1465
  %v2395 = vpop.f32.mrb[0].mxu0
  %v2396 = vadd.f32 0.0, %v2395
  %v2397 = vpop.f32.mrb[0].mxu0
  %v2398 = vpop.f32.mrb[0].mxu0
  %v2399 = vadd.f32 0.0, %v2398
  %v2400 = vpop.f32.mrb[0].mxu0
  %2401 = vmatprep.mubr.bf16.mxu0 %v1474
  %2402 = vmatmul.mubr.bf16.gmra.mrb[0].mxu0 %v1473
  %v2403 = vpop.f32.mrb[0].mxu0
  %v2404 = vadd.f32 0.0, %v2403
  %v2405 = vpop.f32.mrb[0].mxu0
  %v2406 = vpop.f32.mrb[0].mxu0
  %v2407 = vadd.f32 0.0, %v2406
  %v2408 = vpop.f32.mrb[0].mxu0
  %2409 = vmatprep.mubr.bf16.mxu0 %v1482
  %2410 = vmatmul.mubr.bf16.gmra.mrb[0].mxu0 %v1481
  %v2411 = vpop.f32.mrb[0].mxu0
  %v2412 = vadd.f32 0.0, %v2411
  %v2413 = vpop.f32.mrb[0].mxu0
  %v2414 = vpop.f32.mrb[0].mxu0
  %v2415 = vadd.f32 0.0, %v2414
  %v2416 = vpop.f32.mrb[0].mxu0
  %2417 = vmatprep.mubr.bf16.mxu0 %v1490
  %2418 = vmatmul.mubr.bf16.gmra.mrb[0].mxu0 %v1489
  %v2419 = vpop.f32.mrb[0].mxu0
  %v2420 = vadd.f32 0.0, %v2419
  %v2421 = vpop.f32.mrb[0].mxu0
  %v2422 = vpop.f32.mrb[0].mxu0
  %v2423 = vadd.f32 0.0, %v2422
  %v2424 = vpop.f32.mrb[0].mxu0
  %2425 = vmatprep.mubr.bf16.mxu0 %v1498
  %2426 = vmatmul.mubr.bf16.gmra.mrb[0].mxu0 %v1497
  %v2427 = vpop.f32.mrb[0].mxu0
  %v2428 = vadd.f32 0.0, %v2427
  %v2429 = vpop.f32.mrb[0].mxu0
  %v2430 = vpop.f32.mrb[0].mxu0
  %v2431 = vadd.f32 0.0, %v2430
  %v2432 = vpop.f32.mrb[0].mxu0
  %2433 = vmatprep.mubr.bf16.mxu0 %v1506
  %2434 = vmatmul.mubr.bf16.gmra.mrb[0].mxu0 %v1505
  %v2435 = vpop.f32.mrb[0].mxu0
  %v2436 = vadd.f32 0.0, %v2435
  %v2437 = vpop.f32.mrb[0].mxu0
  %v2438 = vpop.f32.mrb[0].mxu0
  %v2439 = vadd.f32 0.0, %v2438
  %v2440 = vpop.f32.mrb[0].mxu0
  %2441 = vmatprep.mubr.bf16.mxu0 %v1514
  %2442 = vmatmul.mubr.bf16.gmra.mrb[0].mxu0 %v1513
  %v2443 = vpop.f32.mrb[0].mxu0
  %v2444 = vadd.f32 0.0, %v2443
  %v2445 = vpop.f32.mrb[0].mxu0
  %v2446 = vpop.f32.mrb[0].mxu0
  %v2447 = vadd.f32 0.0, %v2446
  %v2448 = vpop.f32.mrb[0].mxu0
  %2449 = vmatprep.mubr.bf16.mxu0 %v1522
  %2450 = vmatmul.mubr.bf16.gmra.mrb[0].mxu0 %v1521
  %v2451 = vpop.f32.mrb[0].mxu0
  %v2452 = vadd.f32 0.0, %v2451
  %v2453 = vpop.f32.mrb[0].mxu0
  %v2454 = vpop.f32.mrb[0].mxu0
  %v2455 = vadd.f32 0.0, %v2454
  %v2456 = vpop.f32.mrb[0].mxu0
  %2457 = vmatprep.mubr.bf16.mxu0 %v1530
  %2458 = vmatmul.mubr.bf16.gmra.mrb[0].mxu0 %v1529
  %v2459 = vpop.f32.mrb[0].mxu0
  %v2460 = vadd.f32 0.0, %v2459
  %v2461 = vpop.f32.mrb[0].mxu0
  %v2462 = vpop.f32.mrb[0].mxu0
  %v2463 = vadd.f32 0.0, %v2462
  %v2464 = vpop.f32.mrb[0].mxu0
  %2465 = vmatprep.mubr.bf16.mxu0 %v1538
  %2466 = vmatmul.mubr.bf16.gmra.mrb[0].mxu0 %v1537
  %v2467 = vpop.f32.mrb[0].mxu0
  %v2468 = vadd.f32 0.0, %v2467
  %v2469 = vpop.f32.mrb[0].mxu0
  %v2470 = vpop.f32.mrb[0].mxu0
  %v2471 = vadd.f32 0.0, %v2470
  %v2472 = vpop.f32.mrb[0].mxu0
  %2473 = vmatprep.mubr.bf16.mxu0 %v1546
  %2474 = vmatmul.mubr.bf16.gmra.mrb[0].mxu0 %v1545
  %v2475 = vpop.f32.mrb[0].mxu0
  %v2476 = vadd.f32 0.0, %v2475
  %v2477 = vpop.f32.mrb[0].mxu0
  %v2478 = vpop.f32.mrb[0].mxu0
  %v2479 = vadd.f32 0.0, %v2478
  %v2480 = vpop.f32.mrb[0].mxu0
  %2481 = vmatprep.mubr.bf16.mxu0 %v1554
  %2482 = vmatmul.mubr.bf16.gmra.mrb[0].mxu0 %v1553
  %v2483 = vpop.f32.mrb[0].mxu0
  %v2484 = vadd.f32 0.0, %v2483
  %v2485 = vpop.f32.mrb[0].mxu0
  %v2486 = vpop.f32.mrb[0].mxu0
  %v2487 = vadd.f32 0.0, %v2486
  %v2488 = vpop.f32.mrb[0].mxu0
  %2489 = vdwg.mxu0
  %2490 = vmatprep.subr.bf16.mxu0 0
  %2491 = vmatpush1.bf16.msra.mxu0 %v2089
  %2492 = vmatprep.subr.bf16.mxu0 0
  %2493 = vmatpush1.bf16.msra.mxu0 %v2090
  %2494 = vmatprep.subr.bf16.mxu0 0
  %2495 = vmatpush1.bf16.msra.mxu0 %v2091
  %2496 = vmatprep.subr.bf16.mxu0 0
  %2497 = vmatpush1.bf16.msra.mxu0 %v2092
  %2498 = vmatprep.subr.bf16.mxu0 0
  %2499 = vmatpush1.bf16.msra.mxu0 %v2093
  %2500 = vmatprep.subr.bf16.mxu0 0
  %2501 = vmatpush1.bf16.msra.mxu0 %v2094
  %2502 = vmatprep.subr.bf16.mxu0 0
  %2503 = vmatpush1.bf16.msra.mxu0 %v2095
  %2504 = vmatprep.subr.bf16.mxu0 0
  %2505 = vmatpush1.bf16.msra.mxu0 %v2096
  %2506 = vmatprep.subr.bf16.mxu0 0
  %2507 = vmatpush1.bf16.msra.mxu0 %v2097
  %2508 = vmatprep.subr.bf16.mxu0 0
  %2509 = vmatpush1.bf16.msra.mxu0 %v2098
  %2510 = vmatprep.subr.bf16.mxu0 0
  %2511 = vmatpush1.bf16.msra.mxu0 %v2099
  %2512 = vmatprep.subr.bf16.mxu0 0
  %2513 = vmatpush1.bf16.msra.mxu0 %v2100
  %2514 = vmatprep.subr.bf16.mxu0 0
  %2515 = vmatpush1.bf16.msra.mxu0 %v2101
  %2516 = vmatprep.subr.bf16.mxu0 0
  %2517 = vmatpush1.bf16.msra.mxu0 %v2102
  %2518 = vmatprep.subr.bf16.mxu0 0
  %2519 = vmatpush1.bf16.msra.mxu0 %v2103
  %2520 = vmatprep.subr.bf16.mxu0 0
  %2521 = vmatpush1.bf16.msra.mxu0 %v2104
  %2522 = vmatprep.mubr.bf16.mxu0 %v1308
  %2523 = vmatmul.mubr.bf16.gmra.mrb[0].mxu0 %v1307
  %v2524 = vpop.f32.mrb[0].mxu0
  %v2525 = vadd.f32 %v2236, %v2524
  %v2526 = vpop.f32.mrb[0].mxu0
  %v2527 = vpop.f32.mrb[0].mxu0
  %v2528 = vadd.f32 %v2239, %v2527
  %v2529 = vpop.f32.mrb[0].mxu0
  %2530 = vmatprep.mubr.bf16.mxu0 %v1316
  %2531 = vmatmul.mubr.bf16.gmra.mrb[0].mxu0 %v1315
  %v2532 = vpop.f32.mrb[0].mxu0
  %v2533 = vadd.f32 %v2244, %v2532
  %v2534 = vpop.f32.mrb[0].mxu0
  %v2535 = vpop.f32.mrb[0].mxu0
  %v2536 = vadd.f32 %v2247, %v2535
  %v2537 = vpop.f32.mrb[0].mxu0
  %2538 = vmatprep.mubr.bf16.mxu0 %v1324
  %2539 = vmatmul.mubr.bf16.gmra.mrb[0].mxu0 %v1323
  %v2540 = vpop.f32.mrb[0].mxu0
  %v2541 = vadd.f32 %v2252, %v2540
  %v2542 = vpop.f32.mrb[0].mxu0
  %v2543 = vpop.f32.mrb[0].mxu0
  %v2544 = vadd.f32 %v2255, %v2543
  %v2545 = vpop.f32.mrb[0].mxu0
  %2546 = vmatprep.mubr.bf16.mxu0 %v1332
  %2547 = vmatmul.mubr.bf16.gmra.mrb[0].mxu0 %v1331
  %v2548 = vpop.f32.mrb[0].mxu0
  %v2549 = vadd.f32 %v2260, %v2548
  %v2550 = vpop.f32.mrb[0].mxu0
  %v2551 = vpop.f32.mrb[0].mxu0
  %v2552 = vadd.f32 %v2263, %v2551
  %v2553 = vpop.f32.mrb[0].mxu0
  %2554 = vmatprep.mubr.bf16.mxu0 %v1340
  %2555 = vmatmul.mubr.bf16.gmra.mrb[0].mxu0 %v1339
  %v2556 = vpop.f32.mrb[0].mxu0
  %v2557 = vadd.f32 %v2268, %v2556
  %v2558 = vpop.f32.mrb[0].mxu0
  %v2559 = vpop.f32.mrb[0].mxu0
  %v2560 = vadd.f32 %v2271, %v2559
  %v2561 = vpop.f32.mrb[0].mxu0
  %2562 = vmatprep.mubr.bf16.mxu0 %v1348
  %2563 = vmatmul.mubr.bf16.gmra.mrb[0].mxu0 %v1347
  %v2564 = vpop.f32.mrb[0].mxu0
  %v2565 = vadd.f32 %v2276, %v2564
  %v2566 = vpop.f32.mrb[0].mxu0
  %v2567 = vpop.f32.mrb[0].mxu0
  %v2568 = vadd.f32 %v2279, %v2567
  %v2569 = vpop.f32.mrb[0].mxu0
  %2570 = vmatprep.mubr.bf16.mxu0 %v1356
  %2571 = vmatmul.mubr.bf16.gmra.mrb[0].mxu0 %v1355
  %v2572 = vpop.f32.mrb[0].mxu0
  %v2573 = vadd.f32 %v2284, %v2572
  %v2574 = vpop.f32.mrb[0].mxu0
  %v2575 = vpop.f32.mrb[0].mxu0
  %v2576 = vadd.f32 %v2287, %v2575
  %v2577 = vpop.f32.mrb[0].mxu0
  %2578 = vmatprep.mubr.bf16.mxu0 %v1364
  %2579 = vmatmul.mubr.bf16.gmra.mrb[0].mxu0 %v1363
  %v2580 = vpop.f32.mrb[0].mxu0
  %v2581 = vadd.f32 %v2292, %v2580
  %v2582 = vpop.f32.mrb[0].mxu0
  %v2583 = vpop.f32.mrb[0].mxu0
  %v2584 = vadd.f32 %v2295, %v2583
  %v2585 = vpop.f32.mrb[0].mxu0
  %2586 = vmatprep.mubr.bf16.mxu0 %v1372
  %2587 = vmatmul.mubr.bf16.gmra.mrb[0].mxu0 %v1371
  %v2588 = vpop.f32.mrb[0].mxu0
  %v2589 = vadd.f32 %v2300, %v2588
  %v2590 = vpop.f32.mrb[0].mxu0
  %v2591 = vpop.f32.mrb[0].mxu0
  %v2592 = vadd.f32 %v2303, %v2591
  %v2593 = vpop.f32.mrb[0].mxu0
  %2594 = vmatprep.mubr.bf16.mxu0 %v1380
  %2595 = vmatmul.mubr.bf16.gmra.mrb[0].mxu0 %v1379
  %v2596 = vpop.f32.mrb[0].mxu0
  %v2597 = vadd.f32 %v2308, %v2596
  %v2598 = vpop.f32.mrb[0].mxu0
  %v2599 = vpop.f32.mrb[0].mxu0
  %v2600 = vadd.f32 %v2311, %v2599
  %v2601 = vpop.f32.mrb[0].mxu0
  %2602 = vmatprep.mubr.bf16.mxu0 %v1388
  %2603 = vmatmul.mubr.bf16.gmra.mrb[0].mxu0 %v1387
  %v2604 = vpop.f32.mrb[0].mxu0
  %v2605 = vadd.f32 %v2316, %v2604
  %v2606 = vpop.f32.mrb[0].mxu0
  %v2607 = vpop.f32.mrb[0].mxu0
  %v2608 = vadd.f32 %v2319, %v2607
  %v2609 = vpop.f32.mrb[0].mxu0
  %2610 = vmatprep.mubr.bf16.mxu0 %v1396
  %2611 = vmatmul.mubr.bf16.gmra.mrb[0].mxu0 %v1395
  %v2612 = vpop.f32.mrb[0].mxu0
  %v2613 = vadd.f32 %v2324, %v2612
  %v2614 = vpop.f32.mrb[0].mxu0
  %v2615 = vpop.f32.mrb[0].mxu0
  %v2616 = vadd.f32 %v2327, %v2615
  %v2617 = vpop.f32.mrb[0].mxu0
  %2618 = vmatprep.mubr.bf16.mxu0 %v1404
  %2619 = vmatmul.mubr.bf16.gmra.mrb[0].mxu0 %v1403
  %v2620 = vpop.f32.mrb[0].mxu0
  %v2621 = vadd.f32 %v2332, %v2620
  %v2622 = vpop.f32.mrb[0].mxu0
  %v2623 = vpop.f32.mrb[0].mxu0
  %v2624 = vadd.f32 %v2335, %v2623
  %v2625 = vpop.f32.mrb[0].mxu0
  %2626 = vmatprep.mubr.bf16.mxu0 %v1412
  %2627 = vmatmul.mubr.bf16.gmra.mrb[0].mxu0 %v1411
  %v2628 = vpop.f32.mrb[0].mxu0
  %v2629 = vadd.f32 %v2340, %v2628
  %v2630 = vpop.f32.mrb[0].mxu0
  %v2631 = vpop.f32.mrb[0].mxu0
  %v2632 = vadd.f32 %v2343, %v2631
  %v2633 = vpop.f32.mrb[0].mxu0
  %2634 = vmatprep.mubr.bf16.mxu0 %v1420
  %2635 = vmatmul.mubr.bf16.gmra.mrb[0].mxu0 %v1419
  %v2636 = vpop.f32.mrb[0].mxu0
  %v2637 = vadd.f32 %v2348, %v2636
  %v2638 = vpop.f32.mrb[0].mxu0
  %v2639 = vpop.f32.mrb[0].mxu0
  %v2640 = vadd.f32 %v2351, %v2639
  %v2641 = vpop.f32.mrb[0].mxu0
  %2642 = vmatprep.mubr.bf16.mxu0 %v1428
  %2643 = vmatmul.mubr.bf16.gmra.mrb[0].mxu0 %v1427
  %v2644 = vpop.f32.mrb[0].mxu0
  %v2645 = vadd.f32 %v2356, %v2644
  %v2646 = vpop.f32.mrb[0].mxu0
  %v2647 = vpop.f32.mrb[0].mxu0
  %v2648 = vadd.f32 %v2359, %v2647
  %v2649 = vpop.f32.mrb[0].mxu0
  %2650 = vmatprep.mubr.bf16.mxu0 %v1436
  %2651 = vmatmul.mubr.bf16.gmra.mrb[0].mxu0 %v1435
  %v2652 = vpop.f32.mrb[0].mxu0
  %v2653 = vadd.f32 %v2364, %v2652
  %v2654 = vpop.f32.mrb[0].mxu0
  %v2655 = vpop.f32.mrb[0].mxu0
  %v2656 = vadd.f32 %v2367, %v2655
  %v2657 = vpop.f32.mrb[0].mxu0
  %2658 = vmatprep.mubr.bf16.mxu0 %v1444
  %2659 = vmatmul.mubr.bf16.gmra.mrb[0].mxu0 %v1443
  %v2660 = vpop.f32.mrb[0].mxu0
  %v2661 = vadd.f32 %v2372, %v2660
  %v2662 = vpop.f32.mrb[0].mxu0
  %v2663 = vpop.f32.mrb[0].mxu0
  %v2664 = vadd.f32 %v2375, %v2663
  %v2665 = vpop.f32.mrb[0].mxu0
  %2666 = vmatprep.mubr.bf16.mxu0 %v1452
  %2667 = vmatmul.mubr.bf16.gmra.mrb[0].mxu0 %v1451
  %v2668 = vpop.f32.mrb[0].mxu0
  %v2669 = vadd.f32 %v2380, %v2668
  %v2670 = vpop.f32.mrb[0].mxu0
  %v2671 = vpop.f32.mrb[0].mxu0
  %v2672 = vadd.f32 %v2383, %v2671
  %v2673 = vpop.f32.mrb[0].mxu0
  %2674 = vmatprep.mubr.bf16.mxu0 %v1460
  %2675 = vmatmul.mubr.bf16.gmra.mrb[0].mxu0 %v1459
  %v2676 = vpop.f32.mrb[0].mxu0
  %v2677 = vadd.f32 %v2388, %v2676
  %v2678 = vpop.f32.mrb[0].mxu0
  %v2679 = vpop.f32.mrb[0].mxu0
  %v2680 = vadd.f32 %v2391, %v2679
  %v2681 = vpop.f32.mrb[0].mxu0
  %2682 = vmatprep.mubr.bf16.mxu0 %v1468
  %2683 = vmatmul.mubr.bf16.gmra.mrb[0].mxu0 %v1467
  %v2684 = vpop.f32.mrb[0].mxu0
  %v2685 = vadd.f32 %v2396, %v2684
  %v2686 = vpop.f32.mrb[0].mxu0
  %v2687 = vpop.f32.mrb[0].mxu0
  %v2688 = vadd.f32 %v2399, %v2687
  %v2689 = vpop.f32.mrb[0].mxu0
  %2690 = vmatprep.mubr.bf16.mxu0 %v1476
  %2691 = vmatmul.mubr.bf16.gmra.mrb[0].mxu0 %v1475
  %v2692 = vpop.f32.mrb[0].mxu0
  %v2693 = vadd.f32 %v2404, %v2692
  %v2694 = vpop.f32.mrb[0].mxu0
  %v2695 = vpop.f32.mrb[0].mxu0
  %v2696 = vadd.f32 %v2407, %v2695
  %v2697 = vpop.f32.mrb[0].mxu0
  %2698 = vmatprep.mubr.bf16.mxu0 %v1484
  %2699 = vmatmul.mubr.bf16.gmra.mrb[0].mxu0 %v1483
  %v2700 = vpop.f32.mrb[0].mxu0
  %v2701 = vadd.f32 %v2412, %v2700
  %v2702 = vpop.f32.mrb[0].mxu0
  %v2703 = vpop.f32.mrb[0].mxu0
  %v2704 = vadd.f32 %v2415, %v2703
  %v2705 = vpop.f32.mrb[0].mxu0
  %2706 = vmatprep.mubr.bf16.mxu0 %v1492
  %2707 = vmatmul.mubr.bf16.gmra.mrb[0].mxu0 %v1491
  %v2708 = vpop.f32.mrb[0].mxu0
  %v2709 = vadd.f32 %v2420, %v2708
  %v2710 = vpop.f32.mrb[0].mxu0
  %v2711 = vpop.f32.mrb[0].mxu0
  %v2712 = vadd.f32 %v2423, %v2711
  %v2713 = vpop.f32.mrb[0].mxu0
  %2714 = vmatprep.mubr.bf16.mxu0 %v1500
  %2715 = vmatmul.mubr.bf16.gmra.mrb[0].mxu0 %v1499
  %v2716 = vpop.f32.mrb[0].mxu0
  %v2717 = vadd.f32 %v2428, %v2716
  %v2718 = vpop.f32.mrb[0].mxu0
  %v2719 = vpop.f32.mrb[0].mxu0
  %v2720 = vadd.f32 %v2431, %v2719
  %v2721 = vpop.f32.mrb[0].mxu0
  %2722 = vmatprep.mubr.bf16.mxu0 %v1508
  %2723 = vmatmul.mubr.bf16.gmra.mrb[0].mxu0 %v1507
  %v2724 = vpop.f32.mrb[0].mxu0
  %v2725 = vadd.f32 %v2436, %v2724
  %v2726 = vpop.f32.mrb[0].mxu0
  %v2727 = vpop.f32.mrb[0].mxu0
  %v2728 = vadd.f32 %v2439, %v2727
  %v2729 = vpop.f32.mrb[0].mxu0
  %2730 = vmatprep.mubr.bf16.mxu0 %v1516
  %2731 = vmatmul.mubr.bf16.gmra.mrb[0].mxu0 %v1515
  %v2732 = vpop.f32.mrb[0].mxu0
  %v2733 = vadd.f32 %v2444, %v2732
  %v2734 = vpop.f32.mrb[0].mxu0
  %v2735 = vpop.f32.mrb[0].mxu0
  %v2736 = vadd.f32 %v2447, %v2735
  %v2737 = vpop.f32.mrb[0].mxu0
  %2738 = vmatprep.mubr.bf16.mxu0 %v1524
  %2739 = vmatmul.mubr.bf16.gmra.mrb[0].mxu0 %v1523
  %v2740 = vpop.f32.mrb[0].mxu0
  %v2741 = vadd.f32 %v2452, %v2740
  %v2742 = vpop.f32.mrb[0].mxu0
  %v2743 = vpop.f32.mrb[0].mxu0
  %v2744 = vadd.f32 %v2455, %v2743
  %v2745 = vpop.f32.mrb[0].mxu0
  %2746 = vmatprep.mubr.bf16.mxu0 %v1532
  %2747 = vmatmul.mubr.bf16.gmra.mrb[0].mxu0 %v1531
  %v2748 = vpop.f32.mrb[0].mxu0
  %v2749 = vadd.f32 %v2460, %v2748
  %v2750 = vpop.f32.mrb[0].mxu0
  %v2751 = vpop.f32.mrb[0].mxu0
  %v2752 = vadd.f32 %v2463, %v2751
  %v2753 = vpop.f32.mrb[0].mxu0
  %2754 = vmatprep.mubr.bf16.mxu0 %v1540
  %2755 = vmatmul.mubr.bf16.gmra.mrb[0].mxu0 %v1539
  %v2756 = vpop.f32.mrb[0].mxu0
  %v2757 = vadd.f32 %v2468, %v2756
  %v2758 = vpop.f32.mrb[0].mxu0
  %v2759 = vpop.f32.mrb[0].mxu0
  %v2760 = vadd.f32 %v2471, %v2759
  %v2761 = vpop.f32.mrb[0].mxu0
  %2762 = vmatprep.mubr.bf16.mxu0 %v1548
  %2763 = vmatmul.mubr.bf16.gmra.mrb[0].mxu0 %v1547
  %v2764 = vpop.f32.mrb[0].mxu0
  %v2765 = vadd.f32 %v2476, %v2764
  %v2766 = vpop.f32.mrb[0].mxu0
  %v2767 = vpop.f32.mrb[0].mxu0
  %v2768 = vadd.f32 %v2479, %v2767
  %v2769 = vpop.f32.mrb[0].mxu0
  %2770 = vmatprep.mubr.bf16.mxu0 %v1556
  %2771 = vmatmul.mubr.bf16.gmra.mrb[0].mxu0 %v1555
  %v2772 = vpop.f32.mrb[0].mxu0
  %v2773 = vadd.f32 %v2484, %v2772
  %v2774 = vpop.f32.mrb[0].mxu0
  %v2775 = vpop.f32.mrb[0].mxu0
  %v2776 = vadd.f32 %v2487, %v2775
  %v2777 = vpop.f32.mrb[0].mxu0
  %2778 = vdwg.mxu0
  %2779 = vmatprep.subr.bf16.mxu0 0
  %2780 = vmatpush1.bf16.msra.mxu0 %v2105
  %2781 = vmatprep.subr.bf16.mxu0 0
  %2782 = vmatpush1.bf16.msra.mxu0 %v2106
  %2783 = vmatprep.subr.bf16.mxu0 0
  %2784 = vmatpush1.bf16.msra.mxu0 %v2107
  %2785 = vmatprep.subr.bf16.mxu0 0
  %2786 = vmatpush1.bf16.msra.mxu0 %v2108
  %2787 = vmatprep.subr.bf16.mxu0 0
  %2788 = vmatpush1.bf16.msra.mxu0 %v2109
  %2789 = vmatprep.subr.bf16.mxu0 0
  %2790 = vmatpush1.bf16.msra.mxu0 %v2110
  %2791 = vmatprep.subr.bf16.mxu0 0
  %2792 = vmatpush1.bf16.msra.mxu0 %v2111
  %2793 = vmatprep.subr.bf16.mxu0 0
  %2794 = vmatpush1.bf16.msra.mxu0 %v2112
  %2795 = vmatprep.subr.bf16.mxu0 0
  %2796 = vmatpush1.bf16.msra.mxu0 %v2113
  %2797 = vmatprep.subr.bf16.mxu0 0
  %2798 = vmatpush1.bf16.msra.mxu0 %v2114
  %2799 = vmatprep.subr.bf16.mxu0 0
  %2800 = vmatpush1.bf16.msra.mxu0 %v2115
  %2801 = vmatprep.subr.bf16.mxu0 0
  %2802 = vmatpush1.bf16.msra.mxu0 %v2116
  %2803 = vmatprep.subr.bf16.mxu0 0
  %2804 = vmatpush1.bf16.msra.mxu0 %v2117
  %2805 = vmatprep.subr.bf16.mxu0 0
  %2806 = vmatpush1.bf16.msra.mxu0 %v2118
  %2807 = vmatprep.subr.bf16.mxu0 0
  %2808 = vmatpush1.bf16.msra.mxu0 %v2119
  %2809 = vmatprep.subr.bf16.mxu0 0
  %2810 = vmatpush1.bf16.msra.mxu0 %v2120
  %2811 = vmatprep.mubr.bf16.mxu0 %v1310
  %2812 = vmatmul.mubr.bf16.gmra.mrb[0].mxu0 %v1309
  %v2813 = vpop.f32.mrb[0].mxu0
  %v2814 = vadd.f32 %v2525, %v2813
  %v2815 = vpop.f32.mrb[0].mxu0
  %v2816 = vpop.f32.mrb[0].mxu0
  %v2817 = vadd.f32 %v2528, %v2816
  %v2818 = vpop.f32.mrb[0].mxu0
  %2819 = vmatprep.mubr.bf16.mxu0 %v1318
  %2820 = vmatmul.mubr.bf16.gmra.mrb[0].mxu0 %v1317
  %v2821 = vpop.f32.mrb[0].mxu0
  %v2822 = vadd.f32 %v2533, %v2821
  %v2823 = vpop.f32.mrb[0].mxu0
  %v2824 = vpop.f32.mrb[0].mxu0
  %v2825 = vadd.f32 %v2536, %v2824
  %v2826 = vpop.f32.mrb[0].mxu0
  %2827 = vmatprep.mubr.bf16.mxu0 %v1326
  %2828 = vmatmul.mubr.bf16.gmra.mrb[0].mxu0 %v1325
  %v2829 = vpop.f32.mrb[0].mxu0
  %v2830 = vadd.f32 %v2541, %v2829
  %v2831 = vpop.f32.mrb[0].mxu0
  %v2832 = vpop.f32.mrb[0].mxu0
  %v2833 = vadd.f32 %v2544, %v2832
  %v2834 = vpop.f32.mrb[0].mxu0
  %2835 = vmatprep.mubr.bf16.mxu0 %v1334
  %2836 = vmatmul.mubr.bf16.gmra.mrb[0].mxu0 %v1333
  %v2837 = vpop.f32.mrb[0].mxu0
  %v2838 = vadd.f32 %v2549, %v2837
  %v2839 = vpop.f32.mrb[0].mxu0
  %v2840 = vpop.f32.mrb[0].mxu0
  %v2841 = vadd.f32 %v2552, %v2840
  %v2842 = vpop.f32.mrb[0].mxu0
  %2843 = vmatprep.mubr.bf16.mxu0 %v1342
  %2844 = vmatmul.mubr.bf16.gmra.mrb[0].mxu0 %v1341
  %v2845 = vpop.f32.mrb[0].mxu0
  %v2846 = vadd.f32 %v2557, %v2845
  %v2847 = vpop.f32.mrb[0].mxu0
  %v2848 = vpop.f32.mrb[0].mxu0
  %v2849 = vadd.f32 %v2560, %v2848
  %v2850 = vpop.f32.mrb[0].mxu0
  %2851 = vmatprep.mubr.bf16.mxu0 %v1350
  %2852 = vmatmul.mubr.bf16.gmra.mrb[0].mxu0 %v1349
  %v2853 = vpop.f32.mrb[0].mxu0
  %v2854 = vadd.f32 %v2565, %v2853
  %v2855 = vpop.f32.mrb[0].mxu0
  %v2856 = vpop.f32.mrb[0].mxu0
  %v2857 = vadd.f32 %v2568, %v2856
  %v2858 = vpop.f32.mrb[0].mxu0
  %2859 = vmatprep.mubr.bf16.mxu0 %v1358
  %2860 = vmatmul.mubr.bf16.gmra.mrb[0].mxu0 %v1357
  %v2861 = vpop.f32.mrb[0].mxu0
  %v2862 = vadd.f32 %v2573, %v2861
  %v2863 = vpop.f32.mrb[0].mxu0
  %v2864 = vpop.f32.mrb[0].mxu0
  %v2865 = vadd.f32 %v2576, %v2864
  %v2866 = vpop.f32.mrb[0].mxu0
  %2867 = vmatprep.mubr.bf16.mxu0 %v1366
  %2868 = vmatmul.mubr.bf16.gmra.mrb[0].mxu0 %v1365
  %v2869 = vpop.f32.mrb[0].mxu0
  %v2870 = vadd.f32 %v2581, %v2869
  %v2871 = vpop.f32.mrb[0].mxu0
  %v2872 = vpop.f32.mrb[0].mxu0
  %v2873 = vadd.f32 %v2584, %v2872
  %v2874 = vpop.f32.mrb[0].mxu0
  %2875 = vmatprep.mubr.bf16.mxu0 %v1374
  %2876 = vmatmul.mubr.bf16.gmra.mrb[0].mxu0 %v1373
  %v2877 = vpop.f32.mrb[0].mxu0
  %v2878 = vadd.f32 %v2589, %v2877
  %v2879 = vpop.f32.mrb[0].mxu0
  %v2880 = vpop.f32.mrb[0].mxu0
  %v2881 = vadd.f32 %v2592, %v2880
  %v2882 = vpop.f32.mrb[0].mxu0
  %2883 = vmatprep.mubr.bf16.mxu0 %v1382
  %2884 = vmatmul.mubr.bf16.gmra.mrb[0].mxu0 %v1381
  %v2885 = vpop.f32.mrb[0].mxu0
  %v2886 = vadd.f32 %v2597, %v2885
  %v2887 = vpop.f32.mrb[0].mxu0
  %v2888 = vpop.f32.mrb[0].mxu0
  %v2889 = vadd.f32 %v2600, %v2888
  %v2890 = vpop.f32.mrb[0].mxu0
  %2891 = vmatprep.mubr.bf16.mxu0 %v1390
  %2892 = vmatmul.mubr.bf16.gmra.mrb[0].mxu0 %v1389
  %v2893 = vpop.f32.mrb[0].mxu0
  %v2894 = vadd.f32 %v2605, %v2893
  %v2895 = vpop.f32.mrb[0].mxu0
  %v2896 = vpop.f32.mrb[0].mxu0
  %v2897 = vadd.f32 %v2608, %v2896
  %v2898 = vpop.f32.mrb[0].mxu0
  %2899 = vmatprep.mubr.bf16.mxu0 %v1398
  %2900 = vmatmul.mubr.bf16.gmra.mrb[0].mxu0 %v1397
  %v2901 = vpop.f32.mrb[0].mxu0
  %v2902 = vadd.f32 %v2613, %v2901
  %v2903 = vpop.f32.mrb[0].mxu0
  %v2904 = vpop.f32.mrb[0].mxu0
  %v2905 = vadd.f32 %v2616, %v2904
  %v2906 = vpop.f32.mrb[0].mxu0
  %2907 = vmatprep.mubr.bf16.mxu0 %v1406
  %2908 = vmatmul.mubr.bf16.gmra.mrb[0].mxu0 %v1405
  %v2909 = vpop.f32.mrb[0].mxu0
  %v2910 = vadd.f32 %v2621, %v2909
  %v2911 = vpop.f32.mrb[0].mxu0
  %v2912 = vpop.f32.mrb[0].mxu0
  %v2913 = vadd.f32 %v2624, %v2912
  %v2914 = vpop.f32.mrb[0].mxu0
  %2915 = vmatprep.mubr.bf16.mxu0 %v1414
  %2916 = vmatmul.mubr.bf16.gmra.mrb[0].mxu0 %v1413
  %v2917 = vpop.f32.mrb[0].mxu0
  %v2918 = vadd.f32 %v2629, %v2917
  %v2919 = vpop.f32.mrb[0].mxu0
  %v2920 = vpop.f32.mrb[0].mxu0
  %v2921 = vadd.f32 %v2632, %v2920
  %v2922 = vpop.f32.mrb[0].mxu0
  %2923 = vmatprep.mubr.bf16.mxu0 %v1422
  %2924 = vmatmul.mubr.bf16.gmra.mrb[0].mxu0 %v1421
  %v2925 = vpop.f32.mrb[0].mxu0
  %v2926 = vadd.f32 %v2637, %v2925
  %v2927 = vpop.f32.mrb[0].mxu0
  %v2928 = vpop.f32.mrb[0].mxu0
  %v2929 = vadd.f32 %v2640, %v2928
  %v2930 = vpop.f32.mrb[0].mxu0
  %2931 = vmatprep.mubr.bf16.mxu0 %v1430
  %2932 = vmatmul.mubr.bf16.gmra.mrb[0].mxu0 %v1429
  %v2933 = vpop.f32.mrb[0].mxu0
  %v2934 = vadd.f32 %v2645, %v2933
  %v2935 = vpop.f32.mrb[0].mxu0
  %v2936 = vpop.f32.mrb[0].mxu0
  %v2937 = vadd.f32 %v2648, %v2936
  %v2938 = vpop.f32.mrb[0].mxu0
  %2939 = vmatprep.mubr.bf16.mxu0 %v1438
  %2940 = vmatmul.mubr.bf16.gmra.mrb[0].mxu0 %v1437
  %v2941 = vpop.f32.mrb[0].mxu0
  %v2942 = vadd.f32 %v2653, %v2941
  %v2943 = vpop.f32.mrb[0].mxu0
  %v2944 = vpop.f32.mrb[0].mxu0
  %v2945 = vadd.f32 %v2656, %v2944
  %v2946 = vpop.f32.mrb[0].mxu0
  %2947 = vmatprep.mubr.bf16.mxu0 %v1446
  %2948 = vmatmul.mubr.bf16.gmra.mrb[0].mxu0 %v1445
  %v2949 = vpop.f32.mrb[0].mxu0
  %v2950 = vadd.f32 %v2661, %v2949
  %v2951 = vpop.f32.mrb[0].mxu0
  %v2952 = vpop.f32.mrb[0].mxu0
  %v2953 = vadd.f32 %v2664, %v2952
  %v2954 = vpop.f32.mrb[0].mxu0
  %2955 = vmatprep.mubr.bf16.mxu0 %v1454
  %2956 = vmatmul.mubr.bf16.gmra.mrb[0].mxu0 %v1453
  %v2957 = vpop.f32.mrb[0].mxu0
  %v2958 = vadd.f32 %v2669, %v2957
  %v2959 = vpop.f32.mrb[0].mxu0
  %v2960 = vpop.f32.mrb[0].mxu0
  %v2961 = vadd.f32 %v2672, %v2960
  %v2962 = vpop.f32.mrb[0].mxu0
  %2963 = vmatprep.mubr.bf16.mxu0 %v1462
  %2964 = vmatmul.mubr.bf16.gmra.mrb[0].mxu0 %v1461
  %v2965 = vpop.f32.mrb[0].mxu0
  %v2966 = vadd.f32 %v2677, %v2965
  %v2967 = vpop.f32.mrb[0].mxu0
  %v2968 = vpop.f32.mrb[0].mxu0
  %v2969 = vadd.f32 %v2680, %v2968
  %v2970 = vpop.f32.mrb[0].mxu0
  %2971 = vmatprep.mubr.bf16.mxu0 %v1470
  %2972 = vmatmul.mubr.bf16.gmra.mrb[0].mxu0 %v1469
  %v2973 = vpop.f32.mrb[0].mxu0
  %v2974 = vadd.f32 %v2685, %v2973
  %v2975 = vpop.f32.mrb[0].mxu0
  %v2976 = vpop.f32.mrb[0].mxu0
  %v2977 = vadd.f32 %v2688, %v2976
  %v2978 = vpop.f32.mrb[0].mxu0
  %2979 = vmatprep.mubr.bf16.mxu0 %v1478
  %2980 = vmatmul.mubr.bf16.gmra.mrb[0].mxu0 %v1477
  %v2981 = vpop.f32.mrb[0].mxu0
  %v2982 = vadd.f32 %v2693, %v2981
  %v2983 = vpop.f32.mrb[0].mxu0
  %v2984 = vpop.f32.mrb[0].mxu0
  %v2985 = vadd.f32 %v2696, %v2984
  %v2986 = vpop.f32.mrb[0].mxu0
  %2987 = vmatprep.mubr.bf16.mxu0 %v1486
  %2988 = vmatmul.mubr.bf16.gmra.mrb[0].mxu0 %v1485
  %v2989 = vpop.f32.mrb[0].mxu0
  %v2990 = vadd.f32 %v2701, %v2989
  %v2991 = vpop.f32.mrb[0].mxu0
  %v2992 = vpop.f32.mrb[0].mxu0
  %v2993 = vadd.f32 %v2704, %v2992
  %v2994 = vpop.f32.mrb[0].mxu0
  %2995 = vmatprep.mubr.bf16.mxu0 %v1494
  %2996 = vmatmul.mubr.bf16.gmra.mrb[0].mxu0 %v1493
  %v2997 = vpop.f32.mrb[0].mxu0
  %v2998 = vadd.f32 %v2709, %v2997
  %v2999 = vpop.f32.mrb[0].mxu0
  %v3000 = vpop.f32.mrb[0].mxu0
  %v3001 = vadd.f32 %v2712, %v3000
  %v3002 = vpop.f32.mrb[0].mxu0
  %3003 = vmatprep.mubr.bf16.mxu0 %v1502
  %3004 = vmatmul.mubr.bf16.gmra.mrb[0].mxu0 %v1501
  %v3005 = vpop.f32.mrb[0].mxu0
  %v3006 = vadd.f32 %v2717, %v3005
  %v3007 = vpop.f32.mrb[0].mxu0
  %v3008 = vpop.f32.mrb[0].mxu0
  %v3009 = vadd.f32 %v2720, %v3008
  %v3010 = vpop.f32.mrb[0].mxu0
  %3011 = vmatprep.mubr.bf16.mxu0 %v1510
  %3012 = vmatmul.mubr.bf16.gmra.mrb[0].mxu0 %v1509
  %v3013 = vpop.f32.mrb[0].mxu0
  %v3014 = vadd.f32 %v2725, %v3013
  %v3015 = vpop.f32.mrb[0].mxu0
  %v3016 = vpop.f32.mrb[0].mxu0
  %v3017 = vadd.f32 %v2728, %v3016
  %v3018 = vpop.f32.mrb[0].mxu0
  %3019 = vmatprep.mubr.bf16.mxu0 %v1518
  %3020 = vmatmul.mubr.bf16.gmra.mrb[0].mxu0 %v1517
  %v3021 = vpop.f32.mrb[0].mxu0
  %v3022 = vadd.f32 %v2733, %v3021
  %v3023 = vpop.f32.mrb[0].mxu0
  %v3024 = vpop.f32.mrb[0].mxu0
  %v3025 = vadd.f32 %v2736, %v3024
  %v3026 = vpop.f32.mrb[0].mxu0
  %3027 = vmatprep.mubr.bf16.mxu0 %v1526
  %3028 = vmatmul.mubr.bf16.gmra.mrb[0].mxu0 %v1525
  %v3029 = vpop.f32.mrb[0].mxu0
  %v3030 = vadd.f32 %v2741, %v3029
  %v3031 = vpop.f32.mrb[0].mxu0
  %v3032 = vpop.f32.mrb[0].mxu0
  %v3033 = vadd.f32 %v2744, %v3032
  %v3034 = vpop.f32.mrb[0].mxu0
  %3035 = vmatprep.mubr.bf16.mxu0 %v1534
  %3036 = vmatmul.mubr.bf16.gmra.mrb[0].mxu0 %v1533
  %v3037 = vpop.f32.mrb[0].mxu0
  %v3038 = vadd.f32 %v2749, %v3037
  %v3039 = vpop.f32.mrb[0].mxu0
  %v3040 = vpop.f32.mrb[0].mxu0
  %v3041 = vadd.f32 %v2752, %v3040
  %v3042 = vpop.f32.mrb[0].mxu0
  %3043 = vmatprep.mubr.bf16.mxu0 %v1542
  %3044 = vmatmul.mubr.bf16.gmra.mrb[0].mxu0 %v1541
  %v3045 = vpop.f32.mrb[0].mxu0
  %v3046 = vadd.f32 %v2757, %v3045
  %v3047 = vpop.f32.mrb[0].mxu0
  %v3048 = vpop.f32.mrb[0].mxu0
  %v3049 = vadd.f32 %v2760, %v3048
  %v3050 = vpop.f32.mrb[0].mxu0
  %3051 = vmatprep.mubr.bf16.mxu0 %v1550
  %3052 = vmatmul.mubr.bf16.gmra.mrb[0].mxu0 %v1549
  %v3053 = vpop.f32.mrb[0].mxu0
  %v3054 = vadd.f32 %v2765, %v3053
  %v3055 = vpop.f32.mrb[0].mxu0
  %v3056 = vpop.f32.mrb[0].mxu0
  %v3057 = vadd.f32 %v2768, %v3056
  %v3058 = vpop.f32.mrb[0].mxu0
  %3059 = vmatprep.mubr.bf16.mxu0 %v1558
  %3060 = vmatmul.mubr.bf16.gmra.mrb[0].mxu0 %v1557
  %v3061 = vpop.f32.mrb[0].mxu0
  %v3062 = vadd.f32 %v2773, %v3061
  %v3063 = vpop.f32.mrb[0].mxu0
  %v3064 = vpop.f32.mrb[0].mxu0
  %v3065 = vadd.f32 %v2776, %v3064
  %v3066 = vpop.f32.mrb[0].mxu0
  %3067 = vdwg.mxu0
  %3068 = vmatprep.subr.bf16.mxu0 0
  %3069 = vmatpush1.bf16.msra.mxu0 %v2121
  %3070 = vmatprep.subr.bf16.mxu0 0
  %3071 = vmatpush1.bf16.msra.mxu0 %v2122
  %3072 = vmatprep.subr.bf16.mxu0 0
  %3073 = vmatpush1.bf16.msra.mxu0 %v2123
  %3074 = vmatprep.subr.bf16.mxu0 0
  %3075 = vmatpush1.bf16.msra.mxu0 %v2124
  %3076 = vmatprep.subr.bf16.mxu0 0
  %3077 = vmatpush1.bf16.msra.mxu0 %v2125
  %3078 = vmatprep.subr.bf16.mxu0 0
  %3079 = vmatpush1.bf16.msra.mxu0 %v2126
  %3080 = vmatprep.subr.bf16.mxu0 0
  %3081 = vmatpush1.bf16.msra.mxu0 %v2127
  %3082 = vmatprep.subr.bf16.mxu0 0
  %3083 = vmatpush1.bf16.msra.mxu0 %v2128
  %3084 = vmatprep.subr.bf16.mxu0 0
  %3085 = vmatpush1.bf16.msra.mxu0 %v2129
  %3086 = vmatprep.subr.bf16.mxu0 0
  %3087 = vmatpush1.bf16.msra.mxu0 %v2130
  %3088 = vmatprep.subr.bf16.mxu0 0
  %3089 = vmatpush1.bf16.msra.mxu0 %v2131
  %3090 = vmatprep.subr.bf16.mxu0 0
  %3091 = vmatpush1.bf16.msra.mxu0 %v2132
  %3092 = vmatprep.subr.bf16.mxu0 0
  %3093 = vmatpush1.bf16.msra.mxu0 %v2133
  %3094 = vmatprep.subr.bf16.mxu0 0
  %3095 = vmatpush1.bf16.msra.mxu0 %v2134
  %3096 = vmatprep.subr.bf16.mxu0 0
  %3097 = vmatpush1.bf16.msra.mxu0 %v2135
  %3098 = vmatprep.subr.bf16.mxu0 0
  %3099 = vmatpush1.bf16.msra.mxu0 %v2136
  %3100 = vmatprep.mubr.bf16.mxu0 %v1312
  %3101 = vmatmul.mubr.bf16.gmra.mrb[0].mxu0 %v1311
  %v3102 = vpop.f32.mrb[0].mxu0
  %v3103 = vadd.f32 %v2814, %v3102
  %v3104 = vpop.f32.mrb[0].mxu0
  %v3105 = vpop.f32.mrb[0].mxu0
  %v3106 = vadd.f32 %v2817, %v3105
  %v3107 = vpop.f32.mrb[0].mxu0
  %3108 = vmatprep.mubr.bf16.mxu0 %v1320
  %3109 = vmatmul.mubr.bf16.gmra.mrb[0].mxu0 %v1319
  %v3110 = vpop.f32.mrb[0].mxu0
  %v3111 = vadd.f32 %v2822, %v3110
  %v3112 = vpop.f32.mrb[0].mxu0
  %v3113 = vpop.f32.mrb[0].mxu0
  %v3114 = vadd.f32 %v2825, %v3113
  %v3115 = vpop.f32.mrb[0].mxu0
  %3116 = vmatprep.mubr.bf16.mxu0 %v1328
  %3117 = vmatmul.mubr.bf16.gmra.mrb[0].mxu0 %v1327
  %v3118 = vpop.f32.mrb[0].mxu0
  %v3119 = vadd.f32 %v2830, %v3118
  %v3120 = vpop.f32.mrb[0].mxu0
  %v3121 = vpop.f32.mrb[0].mxu0
  %v3122 = vadd.f32 %v2833, %v3121
  %v3123 = vpop.f32.mrb[0].mxu0
  %3124 = vmatprep.mubr.bf16.mxu0 %v1336
  %3125 = vmatmul.mubr.bf16.gmra.mrb[0].mxu0 %v1335
  %v3126 = vpop.f32.mrb[0].mxu0
  %v3127 = vadd.f32 %v2838, %v3126
  %v3128 = vpop.f32.mrb[0].mxu0
  %v3129 = vpop.f32.mrb[0].mxu0
  %v3130 = vadd.f32 %v2841, %v3129
  %v3131 = vpop.f32.mrb[0].mxu0
  %3132 = vmatprep.mubr.bf16.mxu0 %v1344
  %3133 = vmatmul.mubr.bf16.gmra.mrb[0].mxu0 %v1343
  %v3134 = vpop.f32.mrb[0].mxu0
  %v3135 = vadd.f32 %v2846, %v3134
  %v3136 = vpop.f32.mrb[0].mxu0
  %v3137 = vpop.f32.mrb[0].mxu0
  %v3138 = vadd.f32 %v2849, %v3137
  %v3139 = vpop.f32.mrb[0].mxu0
  %3140 = vmatprep.mubr.bf16.mxu0 %v1352
  %3141 = vmatmul.mubr.bf16.gmra.mrb[0].mxu0 %v1351
  %v3142 = vpop.f32.mrb[0].mxu0
  %v3143 = vadd.f32 %v2854, %v3142
  %v3144 = vpop.f32.mrb[0].mxu0
  %v3145 = vpop.f32.mrb[0].mxu0
  %v3146 = vadd.f32 %v2857, %v3145
  %v3147 = vpop.f32.mrb[0].mxu0
  %3148 = vmatprep.mubr.bf16.mxu0 %v1360
  %3149 = vmatmul.mubr.bf16.gmra.mrb[0].mxu0 %v1359
  %v3150 = vpop.f32.mrb[0].mxu0
  %v3151 = vadd.f32 %v2862, %v3150
  %v3152 = vpop.f32.mrb[0].mxu0
  %v3153 = vpop.f32.mrb[0].mxu0
  %v3154 = vadd.f32 %v2865, %v3153
  %v3155 = vpop.f32.mrb[0].mxu0
  %3156 = vmatprep.mubr.bf16.mxu0 %v1368
  %3157 = vmatmul.mubr.bf16.gmra.mrb[0].mxu0 %v1367
  %v3158 = vpop.f32.mrb[0].mxu0
  %v3159 = vadd.f32 %v2870, %v3158
  %v3160 = vpop.f32.mrb[0].mxu0
  %v3161 = vpop.f32.mrb[0].mxu0
  %v3162 = vadd.f32 %v2873, %v3161
  %v3163 = vpop.f32.mrb[0].mxu0
  %3164 = vmatprep.mubr.bf16.mxu0 %v1376
  %3165 = vmatmul.mubr.bf16.gmra.mrb[0].mxu0 %v1375
  %v3166 = vpop.f32.mrb[0].mxu0
  %v3167 = vadd.f32 %v2878, %v3166
  %v3168 = vpop.f32.mrb[0].mxu0
  %v3169 = vpop.f32.mrb[0].mxu0
  %v3170 = vadd.f32 %v2881, %v3169
  %v3171 = vpop.f32.mrb[0].mxu0
  %3172 = vmatprep.mubr.bf16.mxu0 %v1384
  %3173 = vmatmul.mubr.bf16.gmra.mrb[0].mxu0 %v1383
  %v3174 = vpop.f32.mrb[0].mxu0
  %v3175 = vadd.f32 %v2886, %v3174
  %v3176 = vpop.f32.mrb[0].mxu0
  %v3177 = vpop.f32.mrb[0].mxu0
  %v3178 = vadd.f32 %v2889, %v3177
  %v3179 = vpop.f32.mrb[0].mxu0
  %3180 = vmatprep.mubr.bf16.mxu0 %v1392
  %3181 = vmatmul.mubr.bf16.gmra.mrb[0].mxu0 %v1391
  %v3182 = vpop.f32.mrb[0].mxu0
  %v3183 = vadd.f32 %v2894, %v3182
  %v3184 = vpop.f32.mrb[0].mxu0
  %v3185 = vpop.f32.mrb[0].mxu0
  %v3186 = vadd.f32 %v2897, %v3185
  %v3187 = vpop.f32.mrb[0].mxu0
  %3188 = vmatprep.mubr.bf16.mxu0 %v1400
  %3189 = vmatmul.mubr.bf16.gmra.mrb[0].mxu0 %v1399
  %v3190 = vpop.f32.mrb[0].mxu0
  %v3191 = vadd.f32 %v2902, %v3190
  %v3192 = vpop.f32.mrb[0].mxu0
  %v3193 = vpop.f32.mrb[0].mxu0
  %v3194 = vadd.f32 %v2905, %v3193
  %v3195 = vpop.f32.mrb[0].mxu0
  %3196 = vmatprep.mubr.bf16.mxu0 %v1408
  %3197 = vmatmul.mubr.bf16.gmra.mrb[0].mxu0 %v1407
  %v3198 = vpop.f32.mrb[0].mxu0
  %v3199 = vadd.f32 %v2910, %v3198
  %v3200 = vpop.f32.mrb[0].mxu0
  %v3201 = vpop.f32.mrb[0].mxu0
  %v3202 = vadd.f32 %v2913, %v3201
  %v3203 = vpop.f32.mrb[0].mxu0
  %3204 = vmatprep.mubr.bf16.mxu0 %v1416
  %3205 = vmatmul.mubr.bf16.gmra.mrb[0].mxu0 %v1415
  %v3206 = vpop.f32.mrb[0].mxu0
  %v3207 = vadd.f32 %v2918, %v3206
  %v3208 = vpop.f32.mrb[0].mxu0
  %v3209 = vpop.f32.mrb[0].mxu0
  %v3210 = vadd.f32 %v2921, %v3209
  %v3211 = vpop.f32.mrb[0].mxu0
  %3212 = vmatprep.mubr.bf16.mxu0 %v1424
  %3213 = vmatmul.mubr.bf16.gmra.mrb[0].mxu0 %v1423
  %v3214 = vpop.f32.mrb[0].mxu0
  %v3215 = vadd.f32 %v2926, %v3214
  %v3216 = vpop.f32.mrb[0].mxu0
  %v3217 = vpop.f32.mrb[0].mxu0
  %v3218 = vadd.f32 %v2929, %v3217
  %v3219 = vpop.f32.mrb[0].mxu0
  %3220 = vmatprep.mubr.bf16.mxu0 %v1432
  %3221 = vmatmul.mubr.bf16.gmra.mrb[0].mxu0 %v1431
  %v3222 = vpop.f32.mrb[0].mxu0
  %v3223 = vadd.f32 %v2934, %v3222
  %v3224 = vpop.f32.mrb[0].mxu0
  %v3225 = vpop.f32.mrb[0].mxu0
  %v3226 = vadd.f32 %v2937, %v3225
  %v3227 = vpop.f32.mrb[0].mxu0
  %3228 = vmatprep.mubr.bf16.mxu0 %v1440
  %3229 = vmatmul.mubr.bf16.gmra.mrb[0].mxu0 %v1439
  %v3230 = vpop.f32.mrb[0].mxu0
  %v3231 = vadd.f32 %v2942, %v3230
  %v3232 = vpop.f32.mrb[0].mxu0
  %v3233 = vpop.f32.mrb[0].mxu0
  %v3234 = vadd.f32 %v2945, %v3233
  %v3235 = vpop.f32.mrb[0].mxu0
  %3236 = vmatprep.mubr.bf16.mxu0 %v1448
  %3237 = vmatmul.mubr.bf16.gmra.mrb[0].mxu0 %v1447
  %v3238 = vpop.f32.mrb[0].mxu0
  %v3239 = vadd.f32 %v2950, %v3238
  %v3240 = vpop.f32.mrb[0].mxu0
  %v3241 = vpop.f32.mrb[0].mxu0
  %v3242 = vadd.f32 %v2953, %v3241
  %v3243 = vpop.f32.mrb[0].mxu0
  %3244 = vmatprep.mubr.bf16.mxu0 %v1456
  %3245 = vmatmul.mubr.bf16.gmra.mrb[0].mxu0 %v1455
  %v3246 = vpop.f32.mrb[0].mxu0
  %v3247 = vadd.f32 %v2958, %v3246
  %v3248 = vpop.f32.mrb[0].mxu0
  %v3249 = vpop.f32.mrb[0].mxu0
  %v3250 = vadd.f32 %v2961, %v3249
  %v3251 = vpop.f32.mrb[0].mxu0
  %3252 = vmatprep.mubr.bf16.mxu0 %v1464
  %3253 = vmatmul.mubr.bf16.gmra.mrb[0].mxu0 %v1463
  %v3254 = vpop.f32.mrb[0].mxu0
  %v3255 = vadd.f32 %v2966, %v3254
  %v3256 = vpop.f32.mrb[0].mxu0
  %v3257 = vpop.f32.mrb[0].mxu0
  %v3258 = vadd.f32 %v2969, %v3257
  %v3259 = vpop.f32.mrb[0].mxu0
  %3260 = vmatprep.mubr.bf16.mxu0 %v1472
  %3261 = vmatmul.mubr.bf16.gmra.mrb[0].mxu0 %v1471
  %v3262 = vpop.f32.mrb[0].mxu0
  %v3263 = vadd.f32 %v2974, %v3262
  %v3264 = vpop.f32.mrb[0].mxu0
  %v3265 = vpop.f32.mrb[0].mxu0
  %v3266 = vadd.f32 %v2977, %v3265
  %v3267 = vpop.f32.mrb[0].mxu0
  %3268 = vmatprep.mubr.bf16.mxu0 %v1480
  %3269 = vmatmul.mubr.bf16.gmra.mrb[0].mxu0 %v1479
  %v3270 = vpop.f32.mrb[0].mxu0
  %v3271 = vadd.f32 %v2982, %v3270
  %v3272 = vpop.f32.mrb[0].mxu0
  %v3273 = vpop.f32.mrb[0].mxu0
  %v3274 = vadd.f32 %v2985, %v3273
  %v3275 = vpop.f32.mrb[0].mxu0
  %3276 = vmatprep.mubr.bf16.mxu0 %v1488
  %3277 = vmatmul.mubr.bf16.gmra.mrb[0].mxu0 %v1487
  %v3278 = vpop.f32.mrb[0].mxu0
  %v3279 = vadd.f32 %v2990, %v3278
  %v3280 = vpop.f32.mrb[0].mxu0
  %v3281 = vpop.f32.mrb[0].mxu0
  %v3282 = vadd.f32 %v2993, %v3281
  %v3283 = vpop.f32.mrb[0].mxu0
  %3284 = vmatprep.mubr.bf16.mxu0 %v1496
  %3285 = vmatmul.mubr.bf16.gmra.mrb[0].mxu0 %v1495
  %v3286 = vpop.f32.mrb[0].mxu0
  %v3287 = vadd.f32 %v2998, %v3286
  %v3288 = vpop.f32.mrb[0].mxu0
  %v3289 = vpop.f32.mrb[0].mxu0
  %v3290 = vadd.f32 %v3001, %v3289
  %v3291 = vpop.f32.mrb[0].mxu0
  %3292 = vmatprep.mubr.bf16.mxu0 %v1504
  %3293 = vmatmul.mubr.bf16.gmra.mrb[0].mxu0 %v1503
  %v3294 = vpop.f32.mrb[0].mxu0
  %v3295 = vadd.f32 %v3006, %v3294
  %v3296 = vpop.f32.mrb[0].mxu0
  %v3297 = vpop.f32.mrb[0].mxu0
  %v3298 = vadd.f32 %v3009, %v3297
  %v3299 = vpop.f32.mrb[0].mxu0
  %3300 = vmatprep.mubr.bf16.mxu0 %v1512
  %3301 = vmatmul.mubr.bf16.gmra.mrb[0].mxu0 %v1511
  %v3302 = vpop.f32.mrb[0].mxu0
  %v3303 = vadd.f32 %v3014, %v3302
  %v3304 = vpop.f32.mrb[0].mxu0
  %v3305 = vpop.f32.mrb[0].mxu0
  %v3306 = vadd.f32 %v3017, %v3305
  %v3307 = vpop.f32.mrb[0].mxu0
  %3308 = vmatprep.mubr.bf16.mxu0 %v1520
  %3309 = vmatmul.mubr.bf16.gmra.mrb[0].mxu0 %v1519
  %v3310 = vpop.f32.mrb[0].mxu0
  %v3311 = vadd.f32 %v3022, %v3310
  %v3312 = vpop.f32.mrb[0].mxu0
  %v3313 = vpop.f32.mrb[0].mxu0
  %v3314 = vadd.f32 %v3025, %v3313
  %v3315 = vpop.f32.mrb[0].mxu0
  %3316 = vmatprep.mubr.bf16.mxu0 %v1528
  %3317 = vmatmul.mubr.bf16.gmra.mrb[0].mxu0 %v1527
  %v3318 = vpop.f32.mrb[0].mxu0
  %v3319 = vadd.f32 %v3030, %v3318
  %v3320 = vpop.f32.mrb[0].mxu0
  %v3321 = vpop.f32.mrb[0].mxu0
  %v3322 = vadd.f32 %v3033, %v3321
  %v3323 = vpop.f32.mrb[0].mxu0
  %3324 = vmatprep.mubr.bf16.mxu0 %v1536
  %3325 = vmatmul.mubr.bf16.gmra.mrb[0].mxu0 %v1535
  %v3326 = vpop.f32.mrb[0].mxu0
  %v3327 = vadd.f32 %v3038, %v3326
  %v3328 = vpop.f32.mrb[0].mxu0
  %v3329 = vpop.f32.mrb[0].mxu0
  %v3330 = vadd.f32 %v3041, %v3329
  %v3331 = vpop.f32.mrb[0].mxu0
  %3332 = vmatprep.mubr.bf16.mxu0 %v1544
  %3333 = vmatmul.mubr.bf16.gmra.mrb[0].mxu0 %v1543
  %v3334 = vpop.f32.mrb[0].mxu0
  %v3335 = vadd.f32 %v3046, %v3334
  %v3336 = vpop.f32.mrb[0].mxu0
  %v3337 = vpop.f32.mrb[0].mxu0
  %v3338 = vadd.f32 %v3049, %v3337
  %v3339 = vpop.f32.mrb[0].mxu0
  %3340 = vmatprep.mubr.bf16.mxu0 %v1552
  %3341 = vmatmul.mubr.bf16.gmra.mrb[0].mxu0 %v1551
  %v3342 = vpop.f32.mrb[0].mxu0
  %v3343 = vadd.f32 %v3054, %v3342
  %v3344 = vpop.f32.mrb[0].mxu0
  %v3345 = vpop.f32.mrb[0].mxu0
  %v3346 = vadd.f32 %v3057, %v3345
  %v3347 = vpop.f32.mrb[0].mxu0
  %3348 = vmatprep.mubr.bf16.mxu0 %v1560
  %3349 = vmatmul.mubr.bf16.gmra.mrb[0].mxu0 %v1559
  %v3350 = vpop.f32.mrb[0].mxu0
  %v3351 = vadd.f32 %v3062, %v3350
  %v3352 = vpop.f32.mrb[0].mxu0
  %v3353 = vpop.f32.mrb[0].mxu0
  %v3354 = vadd.f32 %v3065, %v3353
  %v3355 = vpop.f32.mrb[0].mxu0
  %3356 = vdwg.mxu0
  %v3357 = vadd.f32 %v345, %v3103
  %v3358 = vadd.f32 %v346, %v3106
  %v3359 = vadd.f32 %v347, %v3111
  %v3360 = vadd.f32 %v348, %v3114
  %v3361 = vadd.f32 %v349, %v3119
  %v3362 = vadd.f32 %v350, %v3122
  %v3363 = vadd.f32 %v351, %v3127
  %v3364 = vadd.f32 %v352, %v3130
  %v3365 = vadd.f32 %v353, %v3135
  %v3366 = vadd.f32 %v354, %v3138
  %v3367 = vadd.f32 %v355, %v3143
  %v3368 = vadd.f32 %v356, %v3146
  %v3369 = vadd.f32 %v357, %v3151
  %v3370 = vadd.f32 %v358, %v3154
  %v3371 = vadd.f32 %v359, %v3159
  %v3372 = vadd.f32 %v360, %v3162
  %v3373 = vadd.f32 %v361, %v3167
  %v3374 = vadd.f32 %v362, %v3170
  %v3375 = vadd.f32 %v363, %v3175
  %v3376 = vadd.f32 %v364, %v3178
  %v3377 = vadd.f32 %v365, %v3183
  %v3378 = vadd.f32 %v366, %v3186
  %v3379 = vadd.f32 %v367, %v3191
  %v3380 = vadd.f32 %v368, %v3194
  %v3381 = vadd.f32 %v369, %v3199
  %v3382 = vadd.f32 %v370, %v3202
  %v3383 = vadd.f32 %v371, %v3207
  %v3384 = vadd.f32 %v372, %v3210
  %v3385 = vadd.f32 %v373, %v3215
  %v3386 = vadd.f32 %v374, %v3218
  %v3387 = vadd.f32 %v375, %v3223
  %v3388 = vadd.f32 %v376, %v3226
  %v3389 = vadd.f32 %v377, %v3231
  %v3390 = vadd.f32 %v378, %v3234
  %v3391 = vadd.f32 %v379, %v3239
  %v3392 = vadd.f32 %v380, %v3242
  %v3393 = vadd.f32 %v381, %v3247
  %v3394 = vadd.f32 %v382, %v3250
  %v3395 = vadd.f32 %v383, %v3255
  %v3396 = vadd.f32 %v384, %v3258
  %v3397 = vadd.f32 %v385, %v3263
  %v3398 = vadd.f32 %v386, %v3266
  %v3399 = vadd.f32 %v387, %v3271
  %v3400 = vadd.f32 %v388, %v3274
  %v3401 = vadd.f32 %v389, %v3279
  %v3402 = vadd.f32 %v390, %v3282
  %v3403 = vadd.f32 %v391, %v3287
  %v3404 = vadd.f32 %v392, %v3290
  %v3405 = vadd.f32 %v393, %v3295
  %v3406 = vadd.f32 %v394, %v3298
  %v3407 = vadd.f32 %v395, %v3303
  %v3408 = vadd.f32 %v396, %v3306
  %v3409 = vadd.f32 %v397, %v3311
  %v3410 = vadd.f32 %v398, %v3314
  %v3411 = vadd.f32 %v399, %v3319
  %v3412 = vadd.f32 %v400, %v3322
  %v3413 = vadd.f32 %v401, %v3327
  %v3414 = vadd.f32 %v402, %v3330
  %v3415 = vadd.f32 %v403, %v3335
  %v3416 = vadd.f32 %v404, %v3338
  %v3417 = vadd.f32 %v405, %v3343
  %v3418 = vadd.f32 %v406, %v3346
  %v3419 = vadd.f32 %v407, %v3351
  %v3420 = vadd.f32 %v408, %v3354
  %3421 = vst [vmem:[#allocation2] sm:$0xff] %v3357
  %3422 = vst [vmem:[#allocation2 + $0x8] sm:$0xff] %v3358
  %3423 = vst [vmem:[#allocation2 + $0x10] sm:$0xff] %v3359
  %3424 = vst [vmem:[#allocation2 + $0x18] sm:$0xff] %v3360
  %3425 = vst [vmem:[#allocation2 + $0x20] sm:$0xff] %v3361
  %3426 = vst [vmem:[#allocation2 + $0x28] sm:$0xff] %v3362
  %3427 = vst [vmem:[#allocation2 + $0x30] sm:$0xff] %v3363
  %3428 = vst [vmem:[#allocation2 + $0x38] sm:$0xff] %v3364
  %3429 = vst [vmem:[#allocation2 + $0x40] sm:$0xff] %v3365
  %3430 = vst [vmem:[#allocation2 + $0x48] sm:$0xff] %v3366
  %3431 = vst [vmem:[#allocation2 + $0x50] sm:$0xff] %v3367
  %3432 = vst [vmem:[#allocation2 + $0x58] sm:$0xff] %v3368
  %3433 = vst [vmem:[#allocation2 + $0x60] sm:$0xff] %v3369
  %3434 = vst [vmem:[#allocation2 + $0x68] sm:$0xff] %v3370
  %3435 = vst [vmem:[#allocation2 + $0x70] sm:$0xff] %v3371
  %3436 = vst [vmem:[#allocation2 + $0x78] sm:$0xff] %v3372
  %3437 = vst [vmem:[#allocation2 + $0x80] sm:$0xff] %v3373
  %3438 = vst [vmem:[#allocation2 + $0x88] sm:$0xff] %v3374
  %3439 = vst [vmem:[#allocation2 + $0x90] sm:$0xff] %v3375
  %3440 = vst [vmem:[#allocation2 + $0x98] sm:$0xff] %v3376
  %3441 = vst [vmem:[#allocation2 + $0xa0] sm:$0xff] %v3377
  %3442 = vst [vmem:[#allocation2 + $0xa8] sm:$0xff] %v3378
  %3443 = vst [vmem:[#allocation2 + $0xb0] sm:$0xff] %v3379
  %3444 = vst [vmem:[#allocation2 + $0xb8] sm:$0xff] %v3380
  %3445 = vst [vmem:[#allocation2 + $0xc0] sm:$0xff] %v3381
  %3446 = vst [vmem:[#allocation2 + $0xc8] sm:$0xff] %v3382
  %3447 = vst [vmem:[#allocation2 + $0xd0] sm:$0xff] %v3383
  %3448 = vst [vmem:[#allocation2 + $0xd8] sm:$0xff] %v3384
  %3449 = vst [vmem:[#allocation2 + $0xe0] sm:$0xff] %v3385
  %3450 = vst [vmem:[#allocation2 + $0xe8] sm:$0xff] %v3386
  %3451 = vst [vmem:[#allocation2 + $0xf0] sm:$0xff] %v3387
  %3452 = vst [vmem:[#allocation2 + $0xf8] sm:$0xff] %v3388
  %3453 = vst [vmem:[#allocation2 + $0x100] sm:$0xff] %v3389
  %3454 = vst [vmem:[#allocation2 + $0x108] sm:$0xff] %v3390
  %3455 = vst [vmem:[#allocation2 + $0x110] sm:$0xff] %v3391
  %3456 = vst [vmem:[#allocation2 + $0x118] sm:$0xff] %v3392
  %3457 = vst [vmem:[#allocation2 + $0x120] sm:$0xff] %v3393
  %3458 = vst [vmem:[#allocation2 + $0x128] sm:$0xff] %v3394
  %3459 = vst [vmem:[#allocation2 + $0x130] sm:$0xff] %v3395
  %3460 = vst [vmem:[#allocation2 + $0x138] sm:$0xff] %v3396
  %3461 = vst [vmem:[#allocation2 + $0x140] sm:$0xff] %v3397
  %3462 = vst [vmem:[#allocation2 + $0x148] sm:$0xff] %v3398
  %3463 = vst [vmem:[#allocation2 + $0x150] sm:$0xff] %v3399
  %3464 = vst [vmem:[#allocation2 + $0x158] sm:$0xff] %v3400
  %3465 = vst [vmem:[#allocation2 + $0x160] sm:$0xff] %v3401
  %3466 = vst [vmem:[#allocation2 + $0x168] sm:$0xff] %v3402
  %3467 = vst [vmem:[#allocation2 + $0x170] sm:$0xff] %v3403
  %3468 = vst [vmem:[#allocation2 + $0x178] sm:$0xff] %v3404
  %3469 = vst [vmem:[#allocation2 + $0x180] sm:$0xff] %v3405
  %3470 = vst [vmem:[#allocation2 + $0x188] sm:$0xff] %v3406
  %3471 = vst [vmem:[#allocation2 + $0x190] sm:$0xff] %v3407
  %3472 = vst [vmem:[#allocation2 + $0x198] sm:$0xff] %v3408
  %3473 = vst [vmem:[#allocation2 + $0x1a0] sm:$0xff] %v3409
  %3474 = vst [vmem:[#allocation2 + $0x1a8] sm:$0xff] %v3410
  %3475 = vst [vmem:[#allocation2 + $0x1b0] sm:$0xff] %v3411
  %3476 = vst [vmem:[#allocation2 + $0x1b8] sm:$0xff] %v3412
  %3477 = vst [vmem:[#allocation2 + $0x1c0] sm:$0xff] %v3413
  %3478 = vst [vmem:[#allocation2 + $0x1c8] sm:$0xff] %v3414
  %3479 = vst [vmem:[#allocation2 + $0x1d0] sm:$0xff] %v3415
  %3480 = vst [vmem:[#allocation2 + $0x1d8] sm:$0xff] %v3416
  %3481 = vst [vmem:[#allocation2 + $0x1e0] sm:$0xff] %v3417
  %3482 = vst [vmem:[#allocation2 + $0x1e8] sm:$0xff] %v3418
  %3483 = vst [vmem:[#allocation2 + $0x1f0] sm:$0xff] %v3419
  %3484 = vst [vmem:[#allocation2 + $0x1f8] sm:$0xff] %v3420
  // Predicated region
  $region26: #{feature_conv_forward.1} parent=0 // pred_check
    %p3485 = pneg %p21
  $region27: #{feature_conv_forward.1} parent=0 // pred_check_branch
    %3487 = sbr.rel (%p3485) target = $region29
  $region28: #{feature_conv_forward.1} parent=0 // pred_region
    %v3488 = vld [vmem:[#allocation2] sm:$0xff]
    %v3489 = vld [vmem:[#allocation2 + $0x8] sm:$0xff]
    %v3490 = vld [vmem:[#allocation2 + $0x10] sm:$0xff]
    %v3491 = vld [vmem:[#allocation2 + $0x18] sm:$0xff]
    %v3492 = vld [vmem:[#allocation2 + $0x20] sm:$0xff]
    %v3493 = vld [vmem:[#allocation2 + $0x28] sm:$0xff]
    %v3494 = vld [vmem:[#allocation2 + $0x30] sm:$0xff]
    %v3495 = vld [vmem:[#allocation2 + $0x38] sm:$0xff]
    %v3496 = vld [vmem:[#allocation2 + $0x40] sm:$0xff]
    %v3497 = vld [vmem:[#allocation2 + $0x48] sm:$0xff]
    %v3498 = vld [vmem:[#allocation2 + $0x50] sm:$0xff]
    %v3499 = vld [vmem:[#allocation2 + $0x58] sm:$0xff]
    %v3500 = vld [vmem:[#allocation2 + $0x60] sm:$0xff]
    %v3501 = vld [vmem:[#allocation2 + $0x68] sm:$0xff]
    %v3502 = vld [vmem:[#allocation2 + $0x70] sm:$0xff]
    %v3503 = vld [vmem:[#allocation2 + $0x78] sm:$0xff]
    %v3504 = vld [vmem:[#allocation2 + $0x80] sm:$0xff]
    %v3505 = vld [vmem:[#allocation2 + $0x88] sm:$0xff]
    %v3506 = vld [vmem:[#allocation2 + $0x90] sm:$0xff]
    %v3507 = vld [vmem:[#allocation2 + $0x98] sm:$0xff]
    %v3508 = vld [vmem:[#allocation2 + $0xa0] sm:$0xff]
    %v3509 = vld [vmem:[#allocation2 + $0xa8] sm:$0xff]
    %v3510 = vld [vmem:[#allocation2 + $0xb0] sm:$0xff]
    %v3511 = vld [vmem:[#allocation2 + $0xb8] sm:$0xff]
    %v3512 = vld [vmem:[#allocation2 + $0xc0] sm:$0xff]
    %v3513 = vld [vmem:[#allocation2 + $0xc8] sm:$0xff]
    %v3514 = vld [vmem:[#allocation2 + $0xd0] sm:$0xff]
    %v3515 = vld [vmem:[#allocation2 + $0xd8] sm:$0xff]
    %v3516 = vld [vmem:[#allocation2 + $0xe0] sm:$0xff]
    %v3517 = vld [vmem:[#allocation2 + $0xe8] sm:$0xff]
    %v3518 = vld [vmem:[#allocation2 + $0xf0] sm:$0xff]
    %v3519 = vld [vmem:[#allocation2 + $0xf8] sm:$0xff]
    %v3520 = vpack.c.bf16 %v3489, %v3488
    %v3521 = vpack.c.bf16 %v3491, %v3490
    %v3522 = vpack.c.bf16 %v3493, %v3492
    %v3523 = vpack.c.bf16 %v3495, %v3494
    %v3524 = vpack.c.bf16 %v3497, %v3496
    %v3525 = vpack.c.bf16 %v3499, %v3498
    %v3526 = vpack.c.bf16 %v3501, %v3500
    %v3527 = vpack.c.bf16 %v3503, %v3502
    %v3528 = vpack.c.bf16 %v3505, %v3504
    %v3529 = vpack.c.bf16 %v3507, %v3506
    %v3530 = vpack.c.bf16 %v3509, %v3508
    %v3531 = vpack.c.bf16 %v3511, %v3510
    %v3532 = vpack.c.bf16 %v3513, %v3512
    %v3533 = vpack.c.bf16 %v3515, %v3514
    %v3534 = vpack.c.bf16 %v3517, %v3516
    %v3535 = vpack.c.bf16 %v3519, %v3518
    %v3536 = vld [vmem:[#allocation2 + $0x100] sm:$0xff]
    %v3537 = vld [vmem:[#allocation2 + $0x108] sm:$0xff]
    %v3538 = vld [vmem:[#allocation2 + $0x110] sm:$0xff]
    %v3539 = vld [vmem:[#allocation2 + $0x118] sm:$0xff]
    %v3540 = vld [vmem:[#allocation2 + $0x120] sm:$0xff]
    %v3541 = vld [vmem:[#allocation2 + $0x128] sm:$0xff]
    %v3542 = vld [vmem:[#allocation2 + $0x130] sm:$0xff]
    %v3543 = vld [vmem:[#allocation2 + $0x138] sm:$0xff]
    %v3544 = vld [vmem:[#allocation2 + $0x140] sm:$0xff]
    %v3545 = vld [vmem:[#allocation2 + $0x148] sm:$0xff]
    %v3546 = vld [vmem:[#allocation2 + $0x150] sm:$0xff]
    %v3547 = vld [vmem:[#allocation2 + $0x158] sm:$0xff]
    %v3548 = vld [vmem:[#allocation2 + $0x160] sm:$0xff]
    %v3549 = vld [vmem:[#allocation2 + $0x168] sm:$0xff]
    %v3550 = vld [vmem:[#allocation2 + $0x170] sm:$0xff]
    %v3551 = vld [vmem:[#allocation2 + $0x178] sm:$0xff]
    %v3552 = vld [vmem:[#allocation2 + $0x180] sm:$0xff]
    %v3553 = vld [vmem:[#allocation2 + $0x188] sm:$0xff]
    %v3554 = vld [vmem:[#allocation2 + $0x190] sm:$0xff]
    %v3555 = vld [vmem:[#allocation2 + $0x198] sm:$0xff]
    %v3556 = vld [vmem:[#allocation2 + $0x1a0] sm:$0xff]
    %v3557 = vld [vmem:[#allocation2 + $0x1a8] sm:$0xff]
    %v3558 = vld [vmem:[#allocation2 + $0x1b0] sm:$0xff]
    %v3559 = vld [vmem:[#allocation2 + $0x1b8] sm:$0xff]
    %v3560 = vld [vmem:[#allocation2 + $0x1c0] sm:$0xff]
    %v3561 = vld [vmem:[#allocation2 + $0x1c8] sm:$0xff]
    %v3562 = vld [vmem:[#allocation2 + $0x1d0] sm:$0xff]
    %v3563 = vld [vmem:[#allocation2 + $0x1d8] sm:$0xff]
    %v3564 = vld [vmem:[#allocation2 + $0x1e0] sm:$0xff]
    %v3565 = vld [vmem:[#allocation2 + $0x1e8] sm:$0xff]
    %v3566 = vld [vmem:[#allocation2 + $0x1f0] sm:$0xff]
    %v3567 = vld [vmem:[#allocation2 + $0x1f8] sm:$0xff]
    %v3568 = vpack.c.bf16 %v3537, %v3536
    %v3569 = vpack.c.bf16 %v3539, %v3538
    %v3570 = vpack.c.bf16 %v3541, %v3540
    %v3571 = vpack.c.bf16 %v3543, %v3542
    %v3572 = vpack.c.bf16 %v3545, %v3544
    %v3573 = vpack.c.bf16 %v3547, %v3546
    %v3574 = vpack.c.bf16 %v3549, %v3548
    %v3575 = vpack.c.bf16 %v3551, %v3550
    %v3576 = vpack.c.bf16 %v3553, %v3552
    %v3577 = vpack.c.bf16 %v3555, %v3554
    %v3578 = vpack.c.bf16 %v3557, %v3556
    %v3579 = vpack.c.bf16 %v3559, %v3558
    %v3580 = vpack.c.bf16 %v3561, %v3560
    %v3581 = vpack.c.bf16 %v3563, %v3562
    %v3582 = vpack.c.bf16 %v3565, %v3564
    %v3583 = vpack.c.bf16 %v3567, %v3566
    %v3584 = vld [vmem:[%s2] sm:$0xf]
    %v3585 = vld [vmem:[%s2 + $0x4] sm:$0xf]
    %v3586 = vld [vmem:[%s2 + $0x8] sm:$0xf]
    %v3587 = vld [vmem:[%s2 + $0xc] sm:$0xf]
    %v3588 = vld [vmem:[%s2 + $0x10] sm:$0xf]
    %v3589 = vld [vmem:[%s2 + $0x14] sm:$0xf]
    %v3590 = vld [vmem:[%s2 + $0x18] sm:$0xf]
    %v3591 = vld [vmem:[%s2 + $0x1c] sm:$0xf]
    %v3592 = vld [vmem:[%s2 + $0x20] sm:$0xf]
    %v3593 = vld [vmem:[%s2 + $0x24] sm:$0xf]
    %v3594 = vld [vmem:[%s2 + $0x28] sm:$0xf]
    %v3595 = vld [vmem:[%s2 + $0x2c] sm:$0xf]
    %v3596 = vld [vmem:[%s2 + $0x30] sm:$0xf]
    %v3597 = vld [vmem:[%s2 + $0x34] sm:$0xf]
    %v3598 = vld [vmem:[%s2 + $0x38] sm:$0xf]
    %v3599 = vld [vmem:[%s2 + $0x3c] sm:$0xf]
    %v3600 = vld [vmem:[%s2 + $0x40] sm:$0xf]
    %v3601 = vld [vmem:[%s2 + $0x44] sm:$0xf]
    %v3602 = vld [vmem:[%s2 + $0x48] sm:$0xf]
    %v3603 = vld [vmem:[%s2 + $0x4c] sm:$0xf]
    %v3604 = vld [vmem:[%s2 + $0x50] sm:$0xf]
    %v3605 = vld [vmem:[%s2 + $0x54] sm:$0xf]
    %v3606 = vld [vmem:[%s2 + $0x58] sm:$0xf]
    %v3607 = vld [vmem:[%s2 + $0x5c] sm:$0xf]
    %v3608 = vld [vmem:[%s2 + $0x60] sm:$0xf]
    %v3609 = vld [vmem:[%s2 + $0x64] sm:$0xf]
    %v3610 = vld [vmem:[%s2 + $0x68] sm:$0xf]
    %v3611 = vld [vmem:[%s2 + $0x6c] sm:$0xf]
    %v3612 = vld [vmem:[%s2 + $0x70] sm:$0xf]
    %v3613 = vld [vmem:[%s2 + $0x74] sm:$0xf]
    %v3614 = vld [vmem:[%s2 + $0x78] sm:$0xf]
    %v3615 = vld [vmem:[%s2 + $0x7c] sm:$0xf]
    %v3616 = vunpack.c.l.bf16 %v3584
    %v3617 = vunpack.c.l.bf16 %v3585
    %v3618 = vunpack.c.l.bf16 %v3586
    %v3619 = vunpack.c.l.bf16 %v3587
    %v3620 = vunpack.c.l.bf16 %v3588
    %v3621 = vunpack.c.l.bf16 %v3589
    %v3622 = vunpack.c.l.bf16 %v3590
    %v3623 = vunpack.c.l.bf16 %v3591
    %v3624 = vunpack.c.l.bf16 %v3592
    %v3625 = vunpack.c.l.bf16 %v3593
    %v3626 = vunpack.c.l.bf16 %v3594
    %v3627 = vunpack.c.l.bf16 %v3595
    %v3628 = vunpack.c.l.bf16 %v3596
    %v3629 = vunpack.c.l.bf16 %v3597
    %v3630 = vunpack.c.l.bf16 %v3598
    %v3631 = vunpack.c.l.bf16 %v3599
    %v3632 = vunpack.c.l.bf16 %v3600
    %v3633 = vunpack.c.l.bf16 %v3601
    %v3634 = vunpack.c.l.bf16 %v3602
    %v3635 = vunpack.c.l.bf16 %v3603
    %v3636 = vunpack.c.l.bf16 %v3604
    %v3637 = vunpack.c.l.bf16 %v3605
    %v3638 = vunpack.c.l.bf16 %v3606
    %v3639 = vunpack.c.l.bf16 %v3607
    %v3640 = vunpack.c.l.bf16 %v3608
    %v3641 = vunpack.c.l.bf16 %v3609
    %v3642 = vunpack.c.l.bf16 %v3610
    %v3643 = vunpack.c.l.bf16 %v3611
    %v3644 = vunpack.c.l.bf16 %v3612
    %v3645 = vunpack.c.l.bf16 %v3613
    %v3646 = vunpack.c.l.bf16 %v3614
    %v3647 = vunpack.c.l.bf16 %v3615
    %v3648 = vld [vmem:[%s3] sm:$0x1]
    %v3649 = vlaneseq
    %v3650 = vshrl.u32 %v3649, 7
    %v3651 = vsub.s32 0, %v3650
    %v3652 = vrot.slane %v3648, %v3651
    %v3653 = vsub.f32 %v3616, %v3652
    %v3654 = vsub.f32 %v3617, %v3652
    %v3655 = vsub.f32 %v3618, %v3652
    %v3656 = vsub.f32 %v3619, %v3652
    %v3657 = vsub.f32 %v3620, %v3652
    %v3658 = vsub.f32 %v3621, %v3652
    %v3659 = vsub.f32 %v3622, %v3652
    %v3660 = vsub.f32 %v3623, %v3652
    %v3661 = vsub.f32 %v3624, %v3652
    %v3662 = vsub.f32 %v3625, %v3652
    %v3663 = vsub.f32 %v3626, %v3652
    %v3664 = vsub.f32 %v3627, %v3652
    %v3665 = vsub.f32 %v3628, %v3652
    %v3666 = vsub.f32 %v3629, %v3652
    %v3667 = vsub.f32 %v3630, %v3652
    %v3668 = vsub.f32 %v3631, %v3652
    %v3669 = vsub.f32 %v3632, %v3652
    %v3670 = vsub.f32 %v3633, %v3652
    %v3671 = vsub.f32 %v3634, %v3652
    %v3672 = vsub.f32 %v3635, %v3652
    %v3673 = vsub.f32 %v3636, %v3652
    %v3674 = vsub.f32 %v3637, %v3652
    %v3675 = vsub.f32 %v3638, %v3652
    %v3676 = vsub.f32 %v3639, %v3652
    %v3677 = vsub.f32 %v3640, %v3652
    %v3678 = vsub.f32 %v3641, %v3652
    %v3679 = vsub.f32 %v3642, %v3652
    %v3680 = vsub.f32 %v3643, %v3652
    %v3681 = vsub.f32 %v3644, %v3652
    %v3682 = vsub.f32 %v3645, %v3652
    %v3683 = vsub.f32 %v3646, %v3652
    %v3684 = vsub.f32 %v3647, %v3652
    %v3685 = vpack.c.bf16 %v3654, %v3653
    %v3686 = vpack.c.bf16 %v3656, %v3655
    %v3687 = vpack.c.bf16 %v3658, %v3657
    %v3688 = vpack.c.bf16 %v3660, %v3659
    %v3689 = vpack.c.bf16 %v3662, %v3661
    %v3690 = vpack.c.bf16 %v3664, %v3663
    %v3691 = vpack.c.bf16 %v3666, %v3665
    %v3692 = vpack.c.bf16 %v3668, %v3667
    %v3693 = vpack.c.bf16 %v3670, %v3669
    %v3694 = vpack.c.bf16 %v3672, %v3671
    %v3695 = vpack.c.bf16 %v3674, %v3673
    %v3696 = vpack.c.bf16 %v3676, %v3675
    %v3697 = vpack.c.bf16 %v3678, %v3677
    %v3698 = vpack.c.bf16 %v3680, %v3679
    %v3699 = vpack.c.bf16 %v3682, %v3681
    %v3700 = vpack.c.bf16 %v3684, %v3683
    %v3701 = vld [vmem:[%s4] sm:$0xf]
    %v3702 = vld [vmem:[%s4 + $0x4] sm:$0xf]
    %v3703 = vld [vmem:[%s4 + $0x8] sm:$0xf]
    %v3704 = vld [vmem:[%s4 + $0xc] sm:$0xf]
    %v3705 = vld [vmem:[%s4 + $0x10] sm:$0xf]
    %v3706 = vld [vmem:[%s4 + $0x14] sm:$0xf]
    %v3707 = vld [vmem:[%s4 + $0x18] sm:$0xf]
    %v3708 = vld [vmem:[%s4 + $0x1c] sm:$0xf]
    %v3709 = vld [vmem:[%s4 + $0x20] sm:$0xf]
    %v3710 = vld [vmem:[%s4 + $0x24] sm:$0xf]
    %v3711 = vld [vmem:[%s4 + $0x28] sm:$0xf]
    %v3712 = vld [vmem:[%s4 + $0x2c] sm:$0xf]
    %v3713 = vld [vmem:[%s4 + $0x30] sm:$0xf]
    %v3714 = vld [vmem:[%s4 + $0x34] sm:$0xf]
    %v3715 = vld [vmem:[%s4 + $0x38] sm:$0xf]
    %v3716 = vld [vmem:[%s4 + $0x3c] sm:$0xf]
    %v3717 = vld [vmem:[%s4 + $0x40] sm:$0xf]
    %v3718 = vld [vmem:[%s4 + $0x44] sm:$0xf]
    %v3719 = vld [vmem:[%s4 + $0x48] sm:$0xf]
    %v3720 = vld [vmem:[%s4 + $0x4c] sm:$0xf]
    %v3721 = vld [vmem:[%s4 + $0x50] sm:$0xf]
    %v3722 = vld [vmem:[%s4 + $0x54] sm:$0xf]
    %v3723 = vld [vmem:[%s4 + $0x58] sm:$0xf]
    %v3724 = vld [vmem:[%s4 + $0x5c] sm:$0xf]
    %v3725 = vld [vmem:[%s4 + $0x60] sm:$0xf]
    %v3726 = vld [vmem:[%s4 + $0x64] sm:$0xf]
    %v3727 = vld [vmem:[%s4 + $0x68] sm:$0xf]
    %v3728 = vld [vmem:[%s4 + $0x6c] sm:$0xf]
    %v3729 = vld [vmem:[%s4 + $0x70] sm:$0xf]
    %v3730 = vld [vmem:[%s4 + $0x74] sm:$0xf]
    %v3731 = vld [vmem:[%s4 + $0x78] sm:$0xf]
    %v3732 = vld [vmem:[%s4 + $0x7c] sm:$0xf]
    %v3749 = vunpack.c.l.b16 %v3717
    %v3750 = vunpack.c.l.b16 %v3718
    %v3751 = vunpack.c.l.b16 %v3719
    %v3752 = vunpack.c.l.b16 %v3720
    %v3753 = vunpack.c.l.b16 %v3721
    %v3754 = vunpack.c.l.b16 %v3722
    %v3755 = vunpack.c.l.b16 %v3723
    %v3756 = vunpack.c.l.b16 %v3724
    %v3757 = vunpack.c.l.b16 %v3725
    %v3758 = vunpack.c.l.b16 %v3726
    %v3759 = vunpack.c.l.b16 %v3727
    %v3760 = vunpack.c.l.b16 %v3728
    %v3761 = vunpack.c.l.b16 %v3729
    %v3762 = vunpack.c.l.b16 %v3730
    %v3763 = vunpack.c.l.b16 %v3731
    %v3764 = vunpack.c.l.b16 %v3732
    %v3765 = vpack.c.b16 %v3750, %v3749
    %v3766 = vpack.c.b16 %v3752, %v3751
    %v3767 = vpack.c.b16 %v3754, %v3753
    %v3768 = vpack.c.b16 %v3756, %v3755
    %v3769 = vpack.c.b16 %v3758, %v3757
    %v3770 = vpack.c.b16 %v3760, %v3759
    %v3771 = vpack.c.b16 %v3762, %v3761
    %v3772 = vpack.c.b16 %v3764, %v3763
    %3781 = vmatprep.subr.bf16.mxu0 0
    %3782 = vmatpush1.bf16.msra.mxu0 %v3765
    %3783 = vmatprep.subr.bf16.mxu0 0
    %3784 = vmatpush1.bf16.msra.mxu0 %v3766
    %3785 = vmatprep.subr.bf16.mxu0 0
    %3786 = vmatpush1.bf16.msra.mxu0 %v3767
    %3787 = vmatprep.subr.bf16.mxu0 0
    %3788 = vmatpush1.bf16.msra.mxu0 %v3768
    %3789 = vmatprep.subr.bf16.mxu0 0
    %3790 = vmatpush1.bf16.msra.mxu0 %v3769
    %3791 = vmatprep.subr.bf16.mxu0 0
    %3792 = vmatpush1.bf16.msra.mxu0 %v3770
    %3793 = vmatprep.subr.bf16.mxu0 0
    %3794 = vmatpush1.bf16.msra.mxu0 %v3771
    %3795 = vmatprep.subr.bf16.mxu0 0
    %3796 = vmatpush1.bf16.msra.mxu0 %v3772
    %3797 = vmatprep.subr.bf16.mxu0 0
    %3798 = vmatpush1.bf16.msra.mxu0 0
    %3799 = vmatprep.subr.bf16.mxu0 0
    %3800 = vmatpush1.bf16.msra.mxu0 0
    %3801 = vmatprep.subr.bf16.mxu0 0
    %3802 = vmatpush1.bf16.msra.mxu0 0
    %3803 = vmatprep.subr.bf16.mxu0 0
    %3804 = vmatpush1.bf16.msra.mxu0 0
    %3805 = vmatprep.subr.bf16.mxu0 0
    %3806 = vmatpush1.bf16.msra.mxu0 0
    %3807 = vmatprep.subr.bf16.mxu0 0
    %3808 = vmatpush1.bf16.msra.mxu0 0
    %3809 = vmatprep.subr.bf16.mxu0 0
    %3810 = vmatpush1.bf16.msra.mxu0 0
    %3811 = vmatprep.subr.bf16.mxu0 0
    %3812 = vmatpush1.bf16.msra.mxu0 0
    %3813 = vmatprep.mubr.bf16.mxu0 0
    %3814 = vmatmul.mubr.bf16.gmra.mrb[0].mxu0 %v3568
    %v3815 = vpop.f32.mrb[0].mxu0
    %v3816 = vadd.f32 0.0, %v3815
    %v3817 = vpop.f32.mrb[0].mxu0
    %v3818 = vpop.f32.mrb[0].mxu0
    %v3819 = vadd.f32 0.0, %v3818
    %v3820 = vpop.f32.mrb[0].mxu0
    %3821 = vmatprep.mubr.bf16.mxu0 0
    %3822 = vmatmul.mubr.bf16.gmra.mrb[0].mxu0 %v3569
    %v3823 = vpop.f32.mrb[0].mxu0
    %v3824 = vadd.f32 0.0, %v3823
    %v3825 = vpop.f32.mrb[0].mxu0
    %v3826 = vpop.f32.mrb[0].mxu0
    %v3827 = vadd.f32 0.0, %v3826
    %v3828 = vpop.f32.mrb[0].mxu0
    %3829 = vmatprep.mubr.bf16.mxu0 0
    %3830 = vmatmul.mubr.bf16.gmra.mrb[0].mxu0 %v3570
    %v3831 = vpop.f32.mrb[0].mxu0
    %v3832 = vadd.f32 0.0, %v3831
    %v3833 = vpop.f32.mrb[0].mxu0
    %v3834 = vpop.f32.mrb[0].mxu0
    %v3835 = vadd.f32 0.0, %v3834
    %v3836 = vpop.f32.mrb[0].mxu0
    %3837 = vmatprep.mubr.bf16.mxu0 0
    %3838 = vmatmul.mubr.bf16.gmra.mrb[0].mxu0 %v3571
    %v3839 = vpop.f32.mrb[0].mxu0
    %v3840 = vadd.f32 0.0, %v3839
    %v3841 = vpop.f32.mrb[0].mxu0
    %v3842 = vpop.f32.mrb[0].mxu0
    %v3843 = vadd.f32 0.0, %v3842
    %v3844 = vpop.f32.mrb[0].mxu0
    %3845 = vmatprep.mubr.bf16.mxu0 0
    %3846 = vmatmul.mubr.bf16.gmra.mrb[0].mxu0 %v3572
    %v3847 = vpop.f32.mrb[0].mxu0
    %v3848 = vadd.f32 0.0, %v3847
    %v3849 = vpop.f32.mrb[0].mxu0
    %v3850 = vpop.f32.mrb[0].mxu0
    %v3851 = vadd.f32 0.0, %v3850
    %v3852 = vpop.f32.mrb[0].mxu0
    %3853 = vmatprep.mubr.bf16.mxu0 0
    %3854 = vmatmul.mubr.bf16.gmra.mrb[0].mxu0 %v3573
    %v3855 = vpop.f32.mrb[0].mxu0
    %v3856 = vadd.f32 0.0, %v3855
    %v3857 = vpop.f32.mrb[0].mxu0
    %v3858 = vpop.f32.mrb[0].mxu0
    %v3859 = vadd.f32 0.0, %v3858
    %v3860 = vpop.f32.mrb[0].mxu0
    %3861 = vmatprep.mubr.bf16.mxu0 0
    %3862 = vmatmul.mubr.bf16.gmra.mrb[0].mxu0 %v3574
    %v3863 = vpop.f32.mrb[0].mxu0
    %v3864 = vadd.f32 0.0, %v3863
    %v3865 = vpop.f32.mrb[0].mxu0
    %v3866 = vpop.f32.mrb[0].mxu0
    %v3867 = vadd.f32 0.0, %v3866
    %v3868 = vpop.f32.mrb[0].mxu0
    %3869 = vmatprep.mubr.bf16.mxu0 0
    %3870 = vmatmul.mubr.bf16.gmra.mrb[0].mxu0 %v3575
    %v3871 = vpop.f32.mrb[0].mxu0
    %v3872 = vadd.f32 0.0, %v3871
    %v3873 = vpop.f32.mrb[0].mxu0
    %v3874 = vpop.f32.mrb[0].mxu0
    %v3875 = vadd.f32 0.0, %v3874
    %v3876 = vpop.f32.mrb[0].mxu0
    %3877 = vmatprep.mubr.bf16.mxu0 0
    %3878 = vmatmul.mubr.bf16.gmra.mrb[0].mxu0 %v3576
    %v3879 = vpop.f32.mrb[0].mxu0
    %v3880 = vadd.f32 0.0, %v3879
    %v3881 = vpop.f32.mrb[0].mxu0
    %v3882 = vpop.f32.mrb[0].mxu0
    %v3883 = vadd.f32 0.0, %v3882
    %v3884 = vpop.f32.mrb[0].mxu0
    %3885 = vmatprep.mubr.bf16.mxu0 0
    %3886 = vmatmul.mubr.bf16.gmra.mrb[0].mxu0 %v3577
    %v3887 = vpop.f32.mrb[0].mxu0
    %v3888 = vadd.f32 0.0, %v3887
    %v3889 = vpop.f32.mrb[0].mxu0
    %v3890 = vpop.f32.mrb[0].mxu0
    %v3891 = vadd.f32 0.0, %v3890
    %v3892 = vpop.f32.mrb[0].mxu0
    %3893 = vmatprep.mubr.bf16.mxu0 0
    %3894 = vmatmul.mubr.bf16.gmra.mrb[0].mxu0 %v3578
    %v3895 = vpop.f32.mrb[0].mxu0
    %v3896 = vadd.f32 0.0, %v3895
    %v3897 = vpop.f32.mrb[0].mxu0
    %v3898 = vpop.f32.mrb[0].mxu0
    %v3899 = vadd.f32 0.0, %v3898
    %v3900 = vpop.f32.mrb[0].mxu0
    %3901 = vmatprep.mubr.bf16.mxu0 0
    %3902 = vmatmul.mubr.bf16.gmra.mrb[0].mxu0 %v3579
    %v3903 = vpop.f32.mrb[0].mxu0
    %v3904 = vadd.f32 0.0, %v3903
    %v3905 = vpop.f32.mrb[0].mxu0
    %v3906 = vpop.f32.mrb[0].mxu0
    %v3907 = vadd.f32 0.0, %v3906
    %v3908 = vpop.f32.mrb[0].mxu0
    %3909 = vmatprep.mubr.bf16.mxu0 0
    %3910 = vmatmul.mubr.bf16.gmra.mrb[0].mxu0 %v3580
    %v3911 = vpop.f32.mrb[0].mxu0
    %v3912 = vadd.f32 0.0, %v3911
    %v3913 = vpop.f32.mrb[0].mxu0
    %v3914 = vpop.f32.mrb[0].mxu0
    %v3915 = vadd.f32 0.0, %v3914
    %v3916 = vpop.f32.mrb[0].mxu0
    %3917 = vmatprep.mubr.bf16.mxu0 0
    %3918 = vmatmul.mubr.bf16.gmra.mrb[0].mxu0 %v3581
    %v3919 = vpop.f32.mrb[0].mxu0
    %v3920 = vadd.f32 0.0, %v3919
    %v3921 = vpop.f32.mrb[0].mxu0
    %v3922 = vpop.f32.mrb[0].mxu0
    %v3923 = vadd.f32 0.0, %v3922
    %v3924 = vpop.f32.mrb[0].mxu0
    %3925 = vmatprep.mubr.bf16.mxu0 0
    %3926 = vmatmul.mubr.bf16.gmra.mrb[0].mxu0 %v3582
    %v3927 = vpop.f32.mrb[0].mxu0
    %v3928 = vadd.f32 0.0, %v3927
    %v3929 = vpop.f32.mrb[0].mxu0
    %v3930 = vpop.f32.mrb[0].mxu0
    %v3931 = vadd.f32 0.0, %v3930
    %v3932 = vpop.f32.mrb[0].mxu0
    %3933 = vmatprep.mubr.bf16.mxu0 0
    %3934 = vmatmul.mubr.bf16.gmra.mrb[0].mxu0 %v3583
    %v3935 = vpop.f32.mrb[0].mxu0
    %v3936 = vadd.f32 0.0, %v3935
    %v3937 = vpop.f32.mrb[0].mxu0
    %v3938 = vpop.f32.mrb[0].mxu0
    %v3939 = vadd.f32 0.0, %v3938
    %v3940 = vpop.f32.mrb[0].mxu0
    %3941 = vdwg.mxu0
    %v3958 = vunpack.c.l.b16 %v3701
    %v3959 = vunpack.c.l.b16 %v3702
    %v3960 = vunpack.c.l.b16 %v3703
    %v3961 = vunpack.c.l.b16 %v3704
    %v3962 = vunpack.c.l.b16 %v3705
    %v3963 = vunpack.c.l.b16 %v3706
    %v3964 = vunpack.c.l.b16 %v3707
    %v3965 = vunpack.c.l.b16 %v3708
    %v3966 = vunpack.c.l.b16 %v3709
    %v3967 = vunpack.c.l.b16 %v3710
    %v3968 = vunpack.c.l.b16 %v3711
    %v3969 = vunpack.c.l.b16 %v3712
    %v3970 = vunpack.c.l.b16 %v3713
    %v3971 = vunpack.c.l.b16 %v3714
    %v3972 = vunpack.c.l.b16 %v3715
    %v3973 = vunpack.c.l.b16 %v3716
    %v3974 = vpack.c.b16 %v3959, %v3958
    %v3975 = vpack.c.b16 %v3961, %v3960
    %v3976 = vpack.c.b16 %v3963, %v3962
    %v3977 = vpack.c.b16 %v3965, %v3964
    %v3978 = vpack.c.b16 %v3967, %v3966
    %v3979 = vpack.c.b16 %v3969, %v3968
    %v3980 = vpack.c.b16 %v3971, %v3970
    %v3981 = vpack.c.b16 %v3973, %v3972
    %3990 = vmatprep.subr.bf16.mxu0 0
    %3991 = vmatpush1.bf16.msra.mxu0 %v3974
    %3992 = vmatprep.subr.bf16.mxu0 0
    %3993 = vmatpush1.bf16.msra.mxu0 %v3975
    %3994 = vmatprep.subr.bf16.mxu0 0
    %3995 = vmatpush1.bf16.msra.mxu0 %v3976
    %3996 = vmatprep.subr.bf16.mxu0 0
    %3997 = vmatpush1.bf16.msra.mxu0 %v3977
    %3998 = vmatprep.subr.bf16.mxu0 0
    %3999 = vmatpush1.bf16.msra.mxu0 %v3978
    %4000 = vmatprep.subr.bf16.mxu0 0
    %4001 = vmatpush1.bf16.msra.mxu0 %v3979
    %4002 = vmatprep.subr.bf16.mxu0 0
    %4003 = vmatpush1.bf16.msra.mxu0 %v3980
    %4004 = vmatprep.subr.bf16.mxu0 0
    %4005 = vmatpush1.bf16.msra.mxu0 %v3981
    %4006 = vmatprep.subr.bf16.mxu0 0
    %4007 = vmatpush1.bf16.msra.mxu0 0
    %4008 = vmatprep.subr.bf16.mxu0 0
    %4009 = vmatpush1.bf16.msra.mxu0 0
    %4010 = vmatprep.subr.bf16.mxu0 0
    %4011 = vmatpush1.bf16.msra.mxu0 0
    %4012 = vmatprep.subr.bf16.mxu0 0
    %4013 = vmatpush1.bf16.msra.mxu0 0
    %4014 = vmatprep.subr.bf16.mxu0 0
    %4015 = vmatpush1.bf16.msra.mxu0 0
    %4016 = vmatprep.subr.bf16.mxu0 0
    %4017 = vmatpush1.bf16.msra.mxu0 0
    %4018 = vmatprep.subr.bf16.mxu0 0
    %4019 = vmatpush1.bf16.msra.mxu0 0
    %4020 = vmatprep.subr.bf16.mxu0 0
    %4021 = vmatpush1.bf16.msra.mxu0 0
    %4022 = vmatprep.mubr.bf16.mxu0 0
    %4023 = vmatmul.mubr.bf16.gmra.mrb[0].mxu0 %v3520
    %v4024 = vpop.f32.mrb[0].mxu0
    %v4025 = vadd.f32 %v3816, %v4024
    %v4026 = vpop.f32.mrb[0].mxu0
    %v4027 = vpop.f32.mrb[0].mxu0
    %v4028 = vadd.f32 %v3819, %v4027
    %v4029 = vpop.f32.mrb[0].mxu0
    %4030 = vmatprep.mubr.bf16.mxu0 0
    %4031 = vmatmul.mubr.bf16.gmra.mrb[0].mxu0 %v3521
    %v4032 = vpop.f32.mrb[0].mxu0
    %v4033 = vadd.f32 %v3824, %v4032
    %v4034 = vpop.f32.mrb[0].mxu0
    %v4035 = vpop.f32.mrb[0].mxu0
    %v4036 = vadd.f32 %v3827, %v4035
    %v4037 = vpop.f32.mrb[0].mxu0
    %4038 = vmatprep.mubr.bf16.mxu0 0
    %4039 = vmatmul.mubr.bf16.gmra.mrb[0].mxu0 %v3522
    %v4040 = vpop.f32.mrb[0].mxu0
    %v4041 = vadd.f32 %v3832, %v4040
    %v4042 = vpop.f32.mrb[0].mxu0
    %v4043 = vpop.f32.mrb[0].mxu0
    %v4044 = vadd.f32 %v3835, %v4043
    %v4045 = vpop.f32.mrb[0].mxu0
    %4046 = vmatprep.mubr.bf16.mxu0 0
    %4047 = vmatmul.mubr.bf16.gmra.mrb[0].mxu0 %v3523
    %v4048 = vpop.f32.mrb[0].mxu0
    %v4049 = vadd.f32 %v3840, %v4048
    %v4050 = vpop.f32.mrb[0].mxu0
    %v4051 = vpop.f32.mrb[0].mxu0
    %v4052 = vadd.f32 %v3843, %v4051
    %v4053 = vpop.f32.mrb[0].mxu0
    %4054 = vmatprep.mubr.bf16.mxu0 0
    %4055 = vmatmul.mubr.bf16.gmra.mrb[0].mxu0 %v3524
    %v4056 = vpop.f32.mrb[0].mxu0
    %v4057 = vadd.f32 %v3848, %v4056
    %v4058 = vpop.f32.mrb[0].mxu0
    %v4059 = vpop.f32.mrb[0].mxu0
    %v4060 = vadd.f32 %v3851, %v4059
    %v4061 = vpop.f32.mrb[0].mxu0
    %4062 = vmatprep.mubr.bf16.mxu0 0
    %4063 = vmatmul.mubr.bf16.gmra.mrb[0].mxu0 %v3525
    %v4064 = vpop.f32.mrb[0].mxu0
    %v4065 = vadd.f32 %v3856, %v4064
    %v4066 = vpop.f32.mrb[0].mxu0
    %v4067 = vpop.f32.mrb[0].mxu0
    %v4068 = vadd.f32 %v3859, %v4067
    %v4069 = vpop.f32.mrb[0].mxu0
    %4070 = vmatprep.mubr.bf16.mxu0 0
    %4071 = vmatmul.mubr.bf16.gmra.mrb[0].mxu0 %v3526
    %v4072 = vpop.f32.mrb[0].mxu0
    %v4073 = vadd.f32 %v3864, %v4072
    %v4074 = vpop.f32.mrb[0].mxu0
    %v4075 = vpop.f32.mrb[0].mxu0
    %v4076 = vadd.f32 %v3867, %v4075
    %v4077 = vpop.f32.mrb[0].mxu0
    %4078 = vmatprep.mubr.bf16.mxu0 0
    %4079 = vmatmul.mubr.bf16.gmra.mrb[0].mxu0 %v3527
    %v4080 = vpop.f32.mrb[0].mxu0
    %v4081 = vadd.f32 %v3872, %v4080
    %v4082 = vpop.f32.mrb[0].mxu0
    %v4083 = vpop.f32.mrb[0].mxu0
    %v4084 = vadd.f32 %v3875, %v4083
    %v4085 = vpop.f32.mrb[0].mxu0
    %4086 = vmatprep.mubr.bf16.mxu0 0
    %4087 = vmatmul.mubr.bf16.gmra.mrb[0].mxu0 %v3528
    %v4088 = vpop.f32.mrb[0].mxu0
    %v4089 = vadd.f32 %v3880, %v4088
    %v4090 = vpop.f32.mrb[0].mxu0
    %v4091 = vpop.f32.mrb[0].mxu0
    %v4092 = vadd.f32 %v3883, %v4091
    %v4093 = vpop.f32.mrb[0].mxu0
    %4094 = vmatprep.mubr.bf16.mxu0 0
    %4095 = vmatmul.mubr.bf16.gmra.mrb[0].mxu0 %v3529
    %v4096 = vpop.f32.mrb[0].mxu0
    %v4097 = vadd.f32 %v3888, %v4096
    %v4098 = vpop.f32.mrb[0].mxu0
    %v4099 = vpop.f32.mrb[0].mxu0
    %v4100 = vadd.f32 %v3891, %v4099
    %v4101 = vpop.f32.mrb[0].mxu0
    %4102 = vmatprep.mubr.bf16.mxu0 0
    %4103 = vmatmul.mubr.bf16.gmra.mrb[0].mxu0 %v3530
    %v4104 = vpop.f32.mrb[0].mxu0
    %v4105 = vadd.f32 %v3896, %v4104
    %v4106 = vpop.f32.mrb[0].mxu0
    %v4107 = vpop.f32.mrb[0].mxu0
    %v4108 = vadd.f32 %v3899, %v4107
    %v4109 = vpop.f32.mrb[0].mxu0
    %4110 = vmatprep.mubr.bf16.mxu0 0
    %4111 = vmatmul.mubr.bf16.gmra.mrb[0].mxu0 %v3531
    %v4112 = vpop.f32.mrb[0].mxu0
    %v4113 = vadd.f32 %v3904, %v4112
    %v4114 = vpop.f32.mrb[0].mxu0
    %v4115 = vpop.f32.mrb[0].mxu0
    %v4116 = vadd.f32 %v3907, %v4115
    %v4117 = vpop.f32.mrb[0].mxu0
    %4118 = vmatprep.mubr.bf16.mxu0 0
    %4119 = vmatmul.mubr.bf16.gmra.mrb[0].mxu0 %v3532
    %v4120 = vpop.f32.mrb[0].mxu0
    %v4121 = vadd.f32 %v3912, %v4120
    %v4122 = vpop.f32.mrb[0].mxu0
    %v4123 = vpop.f32.mrb[0].mxu0
    %v4124 = vadd.f32 %v3915, %v4123
    %v4125 = vpop.f32.mrb[0].mxu0
    %4126 = vmatprep.mubr.bf16.mxu0 0
    %4127 = vmatmul.mubr.bf16.gmra.mrb[0].mxu0 %v3533
    %v4128 = vpop.f32.mrb[0].mxu0
    %v4129 = vadd.f32 %v3920, %v4128
    %v4130 = vpop.f32.mrb[0].mxu0
    %v4131 = vpop.f32.mrb[0].mxu0
    %v4132 = vadd.f32 %v3923, %v4131
    %v4133 = vpop.f32.mrb[0].mxu0
    %4134 = vmatprep.mubr.bf16.mxu0 0
    %4135 = vmatmul.mubr.bf16.gmra.mrb[0].mxu0 %v3534
    %v4136 = vpop.f32.mrb[0].mxu0
    %v4137 = vadd.f32 %v3928, %v4136
    %v4138 = vpop.f32.mrb[0].mxu0
    %v4139 = vpop.f32.mrb[0].mxu0
    %v4140 = vadd.f32 %v3931, %v4139
    %v4141 = vpop.f32.mrb[0].mxu0
    %4142 = vmatprep.mubr.bf16.mxu0 0
    %4143 = vmatmul.mubr.bf16.gmra.mrb[0].mxu0 %v3535
    %v4144 = vpop.f32.mrb[0].mxu0
    %v4145 = vadd.f32 %v3936, %v4144
    %v4146 = vpop.f32.mrb[0].mxu0
    %v4147 = vpop.f32.mrb[0].mxu0
    %v4148 = vadd.f32 %v3939, %v4147
    %v4149 = vpop.f32.mrb[0].mxu0
    %4150 = vdwg.mxu0
    %v4151 = vld [vmem:[%s4 + $0x80] sm:$0xf]
    %v4152 = vld [vmem:[%s4 + $0x84] sm:$0xf]
    %v4153 = vld [vmem:[%s4 + $0x88] sm:$0xf]
    %v4154 = vld [vmem:[%s4 + $0x8c] sm:$0xf]
    %v4155 = vld [vmem:[%s4 + $0x90] sm:$0xf]
    %v4156 = vld [vmem:[%s4 + $0x94] sm:$0xf]
    %v4157 = vld [vmem:[%s4 + $0x98] sm:$0xf]
    %v4158 = vld [vmem:[%s4 + $0x9c] sm:$0xf]
    %v4159 = vld [vmem:[%s4 + $0xa0] sm:$0xf]
    %v4160 = vld [vmem:[%s4 + $0xa4] sm:$0xf]
    %v4161 = vld [vmem:[%s4 + $0xa8] sm:$0xf]
    %v4162 = vld [vmem:[%s4 + $0xac] sm:$0xf]
    %v4163 = vld [vmem:[%s4 + $0xb0] sm:$0xf]
    %v4164 = vld [vmem:[%s4 + $0xb4] sm:$0xf]
    %v4165 = vld [vmem:[%s4 + $0xb8] sm:$0xf]
    %v4166 = vld [vmem:[%s4 + $0xbc] sm:$0xf]
    %v4183 = vunpack.c.l.b16 %v4151
    %v4184 = vunpack.c.l.b16 %v4152
    %v4185 = vunpack.c.l.b16 %v4153
    %v4186 = vunpack.c.l.b16 %v4154
    %v4187 = vunpack.c.l.b16 %v4155
    %v4188 = vunpack.c.l.b16 %v4156
    %v4189 = vunpack.c.l.b16 %v4157
    %v4190 = vunpack.c.l.b16 %v4158
    %v4191 = vunpack.c.l.b16 %v4159
    %v4192 = vunpack.c.l.b16 %v4160
    %v4193 = vunpack.c.l.b16 %v4161
    %v4194 = vunpack.c.l.b16 %v4162
    %v4195 = vunpack.c.l.b16 %v4163
    %v4196 = vunpack.c.l.b16 %v4164
    %v4197 = vunpack.c.l.b16 %v4165
    %v4198 = vunpack.c.l.b16 %v4166
    %v4199 = vpack.c.b16 %v4184, %v4183
    %v4200 = vpack.c.b16 %v4186, %v4185
    %v4201 = vpack.c.b16 %v4188, %v4187
    %v4202 = vpack.c.b16 %v4190, %v4189
    %v4203 = vpack.c.b16 %v4192, %v4191
    %v4204 = vpack.c.b16 %v4194, %v4193
    %v4205 = vpack.c.b16 %v4196, %v4195
    %v4206 = vpack.c.b16 %v4198, %v4197
    %4215 = vmatprep.subr.bf16.mxu0 0
    %4216 = vmatpush1.bf16.msra.mxu0 %v4199
    %4217 = vmatprep.subr.bf16.mxu0 0
    %4218 = vmatpush1.bf16.msra.mxu0 %v4200
    %4219 = vmatprep.subr.bf16.mxu0 0
    %4220 = vmatpush1.bf16.msra.mxu0 %v4201
    %4221 = vmatprep.subr.bf16.mxu0 0
    %4222 = vmatpush1.bf16.msra.mxu0 %v4202
    %4223 = vmatprep.subr.bf16.mxu0 0
    %4224 = vmatpush1.bf16.msra.mxu0 %v4203
    %4225 = vmatprep.subr.bf16.mxu0 0
    %4226 = vmatpush1.bf16.msra.mxu0 %v4204
    %4227 = vmatprep.subr.bf16.mxu0 0
    %4228 = vmatpush1.bf16.msra.mxu0 %v4205
    %4229 = vmatprep.subr.bf16.mxu0 0
    %4230 = vmatpush1.bf16.msra.mxu0 %v4206
    %4231 = vmatprep.subr.bf16.mxu0 0
    %4232 = vmatpush1.bf16.msra.mxu0 0
    %4233 = vmatprep.subr.bf16.mxu0 0
    %4234 = vmatpush1.bf16.msra.mxu0 0
    %4235 = vmatprep.subr.bf16.mxu0 0
    %4236 = vmatpush1.bf16.msra.mxu0 0
    %4237 = vmatprep.subr.bf16.mxu0 0
    %4238 = vmatpush1.bf16.msra.mxu0 0
    %4239 = vmatprep.subr.bf16.mxu0 0
    %4240 = vmatpush1.bf16.msra.mxu0 0
    %4241 = vmatprep.subr.bf16.mxu0 0
    %4242 = vmatpush1.bf16.msra.mxu0 0
    %4243 = vmatprep.subr.bf16.mxu0 0
    %4244 = vmatpush1.bf16.msra.mxu0 0
    %4245 = vmatprep.subr.bf16.mxu0 0
    %4246 = vmatpush1.bf16.msra.mxu0 0
    %4247 = vmatprep.mubr.bf16.mxu0 0
    %4248 = vmatmul.mubr.bf16.gmra.mrb[0].mxu0 %v3685
    %v4249 = vpop.f32.mrb[0].mxu0
    %v4250 = vadd.f32 0.0, %v4249
    %v4251 = vpop.f32.mrb[0].mxu0
    %v4252 = vpop.f32.mrb[0].mxu0
    %v4253 = vadd.f32 0.0, %v4252
    %v4254 = vpop.f32.mrb[0].mxu0
    %4255 = vmatprep.mubr.bf16.mxu0 0
    %4256 = vmatmul.mubr.bf16.gmra.mrb[0].mxu0 %v3686
    %v4257 = vpop.f32.mrb[0].mxu0
    %v4258 = vadd.f32 0.0, %v4257
    %v4259 = vpop.f32.mrb[0].mxu0
    %v4260 = vpop.f32.mrb[0].mxu0
    %v4261 = vadd.f32 0.0, %v4260
    %v4262 = vpop.f32.mrb[0].mxu0
    %4263 = vmatprep.mubr.bf16.mxu0 0
    %4264 = vmatmul.mubr.bf16.gmra.mrb[0].mxu0 %v3687
    %v4265 = vpop.f32.mrb[0].mxu0
    %v4266 = vadd.f32 0.0, %v4265
    %v4267 = vpop.f32.mrb[0].mxu0
    %v4268 = vpop.f32.mrb[0].mxu0
    %v4269 = vadd.f32 0.0, %v4268
    %v4270 = vpop.f32.mrb[0].mxu0
    %4271 = vmatprep.mubr.bf16.mxu0 0
    %4272 = vmatmul.mubr.bf16.gmra.mrb[0].mxu0 %v3688
    %v4273 = vpop.f32.mrb[0].mxu0
    %v4274 = vadd.f32 0.0, %v4273
    %v4275 = vpop.f32.mrb[0].mxu0
    %v4276 = vpop.f32.mrb[0].mxu0
    %v4277 = vadd.f32 0.0, %v4276
    %v4278 = vpop.f32.mrb[0].mxu0
    %4279 = vmatprep.mubr.bf16.mxu0 0
    %4280 = vmatmul.mubr.bf16.gmra.mrb[0].mxu0 %v3689
    %v4281 = vpop.f32.mrb[0].mxu0
    %v4282 = vadd.f32 0.0, %v4281
    %v4283 = vpop.f32.mrb[0].mxu0
    %v4284 = vpop.f32.mrb[0].mxu0
    %v4285 = vadd.f32 0.0, %v4284
    %v4286 = vpop.f32.mrb[0].mxu0
    %4287 = vmatprep.mubr.bf16.mxu0 0
    %4288 = vmatmul.mubr.bf16.gmra.mrb[0].mxu0 %v3690
    %v4289 = vpop.f32.mrb[0].mxu0
    %v4290 = vadd.f32 0.0, %v4289
    %v4291 = vpop.f32.mrb[0].mxu0
    %v4292 = vpop.f32.mrb[0].mxu0
    %v4293 = vadd.f32 0.0, %v4292
    %v4294 = vpop.f32.mrb[0].mxu0
    %4295 = vmatprep.mubr.bf16.mxu0 0
    %4296 = vmatmul.mubr.bf16.gmra.mrb[0].mxu0 %v3691
    %v4297 = vpop.f32.mrb[0].mxu0
    %v4298 = vadd.f32 0.0, %v4297
    %v4299 = vpop.f32.mrb[0].mxu0
    %v4300 = vpop.f32.mrb[0].mxu0
    %v4301 = vadd.f32 0.0, %v4300
    %v4302 = vpop.f32.mrb[0].mxu0
    %4303 = vmatprep.mubr.bf16.mxu0 0
    %4304 = vmatmul.mubr.bf16.gmra.mrb[0].mxu0 %v3692
    %v4305 = vpop.f32.mrb[0].mxu0
    %v4306 = vadd.f32 0.0, %v4305
    %v4307 = vpop.f32.mrb[0].mxu0
    %v4308 = vpop.f32.mrb[0].mxu0
    %v4309 = vadd.f32 0.0, %v4308
    %v4310 = vpop.f32.mrb[0].mxu0
    %4311 = vmatprep.mubr.bf16.mxu0 0
    %4312 = vmatmul.mubr.bf16.gmra.mrb[0].mxu0 %v3693
    %v4313 = vpop.f32.mrb[0].mxu0
    %v4314 = vadd.f32 0.0, %v4313
    %v4315 = vpop.f32.mrb[0].mxu0
    %v4316 = vpop.f32.mrb[0].mxu0
    %v4317 = vadd.f32 0.0, %v4316
    %v4318 = vpop.f32.mrb[0].mxu0
    %4319 = vmatprep.mubr.bf16.mxu0 0
    %4320 = vmatmul.mubr.bf16.gmra.mrb[0].mxu0 %v3694
    %v4321 = vpop.f32.mrb[0].mxu0
    %v4322 = vadd.f32 0.0, %v4321
    %v4323 = vpop.f32.mrb[0].mxu0
    %v4324 = vpop.f32.mrb[0].mxu0
    %v4325 = vadd.f32 0.0, %v4324
    %v4326 = vpop.f32.mrb[0].mxu0
    %4327 = vmatprep.mubr.bf16.mxu0 0
    %4328 = vmatmul.mubr.bf16.gmra.mrb[0].mxu0 %v3695
    %v4329 = vpop.f32.mrb[0].mxu0
    %v4330 = vadd.f32 0.0, %v4329
    %v4331 = vpop.f32.mrb[0].mxu0
    %v4332 = vpop.f32.mrb[0].mxu0
    %v4333 = vadd.f32 0.0, %v4332
    %v4334 = vpop.f32.mrb[0].mxu0
    %4335 = vmatprep.mubr.bf16.mxu0 0
    %4336 = vmatmul.mubr.bf16.gmra.mrb[0].mxu0 %v3696
    %v4337 = vpop.f32.mrb[0].mxu0
    %v4338 = vadd.f32 0.0, %v4337
    %v4339 = vpop.f32.mrb[0].mxu0
    %v4340 = vpop.f32.mrb[0].mxu0
    %v4341 = vadd.f32 0.0, %v4340
    %v4342 = vpop.f32.mrb[0].mxu0
    %4343 = vmatprep.mubr.bf16.mxu0 0
    %4344 = vmatmul.mubr.bf16.gmra.mrb[0].mxu0 %v3697
    %v4345 = vpop.f32.mrb[0].mxu0
    %v4346 = vadd.f32 0.0, %v4345
    %v4347 = vpop.f32.mrb[0].mxu0
    %v4348 = vpop.f32.mrb[0].mxu0
    %v4349 = vadd.f32 0.0, %v4348
    %v4350 = vpop.f32.mrb[0].mxu0
    %4351 = vmatprep.mubr.bf16.mxu0 0
    %4352 = vmatmul.mubr.bf16.gmra.mrb[0].mxu0 %v3698
    %v4353 = vpop.f32.mrb[0].mxu0
    %v4354 = vadd.f32 0.0, %v4353
    %v4355 = vpop.f32.mrb[0].mxu0
    %v4356 = vpop.f32.mrb[0].mxu0
    %v4357 = vadd.f32 0.0, %v4356
    %v4358 = vpop.f32.mrb[0].mxu0
    %4359 = vmatprep.mubr.bf16.mxu0 0
    %4360 = vmatmul.mubr.bf16.gmra.mrb[0].mxu0 %v3699
    %v4361 = vpop.f32.mrb[0].mxu0
    %v4362 = vadd.f32 0.0, %v4361
    %v4363 = vpop.f32.mrb[0].mxu0
    %v4364 = vpop.f32.mrb[0].mxu0
    %v4365 = vadd.f32 0.0, %v4364
    %v4366 = vpop.f32.mrb[0].mxu0
    %4367 = vmatprep.mubr.bf16.mxu0 0
    %4368 = vmatmul.mubr.bf16.gmra.mrb[0].mxu0 %v3700
    %v4369 = vpop.f32.mrb[0].mxu0
    %v4370 = vadd.f32 0.0, %v4369
    %v4371 = vpop.f32.mrb[0].mxu0
    %v4372 = vpop.f32.mrb[0].mxu0
    %v4373 = vadd.f32 0.0, %v4372
    %v4374 = vpop.f32.mrb[0].mxu0
    %4375 = vdwg.mxu0
    %v4376 = vadd.f32 %v4025, %v4250
    %v4377 = vadd.f32 %v4028, %v4253
    %v4378 = vadd.f32 %v4033, %v4258
    %v4379 = vadd.f32 %v4036, %v4261
    %v4380 = vadd.f32 %v4041, %v4266
    %v4381 = vadd.f32 %v4044, %v4269
    %v4382 = vadd.f32 %v4049, %v4274
    %v4383 = vadd.f32 %v4052, %v4277
    %v4384 = vadd.f32 %v4057, %v4282
    %v4385 = vadd.f32 %v4060, %v4285
    %v4386 = vadd.f32 %v4065, %v4290
    %v4387 = vadd.f32 %v4068, %v4293
    %v4388 = vadd.f32 %v4073, %v4298
    %v4389 = vadd.f32 %v4076, %v4301
    %v4390 = vadd.f32 %v4081, %v4306
    %v4391 = vadd.f32 %v4084, %v4309
    %v4392 = vadd.f32 %v4089, %v4314
    %v4393 = vadd.f32 %v4092, %v4317
    %v4394 = vadd.f32 %v4097, %v4322
    %v4395 = vadd.f32 %v4100, %v4325
    %v4396 = vadd.f32 %v4105, %v4330
    %v4397 = vadd.f32 %v4108, %v4333
    %v4398 = vadd.f32 %v4113, %v4338
    %v4399 = vadd.f32 %v4116, %v4341
    %v4400 = vadd.f32 %v4121, %v4346
    %v4401 = vadd.f32 %v4124, %v4349
    %v4402 = vadd.f32 %v4129, %v4354
    %v4403 = vadd.f32 %v4132, %v4357
    %v4404 = vadd.f32 %v4137, %v4362
    %v4405 = vadd.f32 %v4140, %v4365
    %v4406 = vadd.f32 %v4145, %v4370
    %v4407 = vadd.f32 %v4148, %v4373
    %v4408 = vmul.f32 %v4376, 0.33333334
    %v4409 = vmul.f32 %v4377, 0.33333334
    %v4410 = vmul.f32 %v4378, 0.33333334
    %v4411 = vmul.f32 %v4379, 0.33333334
    %v4412 = vmul.f32 %v4380, 0.33333334
    %v4413 = vmul.f32 %v4381, 0.33333334
    %v4414 = vmul.f32 %v4382, 0.33333334
    %v4415 = vmul.f32 %v4383, 0.33333334
    %v4416 = vmul.f32 %v4384, 0.33333334
    %v4417 = vmul.f32 %v4385, 0.33333334
    %v4418 = vmul.f32 %v4386, 0.33333334
    %v4419 = vmul.f32 %v4387, 0.33333334
    %v4420 = vmul.f32 %v4388, 0.33333334
    %v4421 = vmul.f32 %v4389, 0.33333334
    %v4422 = vmul.f32 %v4390, 0.33333334
    %v4423 = vmul.f32 %v4391, 0.33333334
    %v4424 = vmul.f32 %v4392, 0.33333334
    %v4425 = vmul.f32 %v4393, 0.33333334
    %v4426 = vmul.f32 %v4394, 0.33333334
    %v4427 = vmul.f32 %v4395, 0.33333334
    %v4428 = vmul.f32 %v4396, 0.33333334
    %v4429 = vmul.f32 %v4397, 0.33333334
    %v4430 = vmul.f32 %v4398, 0.33333334
    %v4431 = vmul.f32 %v4399, 0.33333334
    %v4432 = vmul.f32 %v4400, 0.33333334
    %v4433 = vmul.f32 %v4401, 0.33333334
    %v4434 = vmul.f32 %v4402, 0.33333334
    %v4435 = vmul.f32 %v4403, 0.33333334
    %v4436 = vmul.f32 %v4404, 0.33333334
    %v4437 = vmul.f32 %v4405, 0.33333334
    %v4438 = vmul.f32 %v4406, 0.33333334
    %v4439 = vmul.f32 %v4407, 0.33333334
    %v4440 = vtanh.pop %v4408
    %v4441 = vtanh.pop %v4409
    %v4442 = vtanh.pop %v4410
    %v4443 = vtanh.pop %v4411
    %v4444 = vtanh.pop %v4412
    %v4445 = vtanh.pop %v4413
    %v4446 = vtanh.pop %v4414
    %v4447 = vtanh.pop %v4415
    %v4448 = vtanh.pop %v4416
    %v4449 = vtanh.pop %v4417
    %v4450 = vtanh.pop %v4418
    %v4451 = vtanh.pop %v4419
    %v4452 = vtanh.pop %v4420
    %v4453 = vtanh.pop %v4421
    %v4454 = vtanh.pop %v4422
    %v4455 = vtanh.pop %v4423
    %v4456 = vtanh.pop %v4424
    %v4457 = vtanh.pop %v4425
    %v4458 = vtanh.pop %v4426
    %v4459 = vtanh.pop %v4427
    %v4460 = vtanh.pop %v4428
    %v4461 = vtanh.pop %v4429
    %v4462 = vtanh.pop %v4430
    %v4463 = vtanh.pop %v4431
    %v4464 = vtanh.pop %v4432
    %v4465 = vtanh.pop %v4433
    %v4466 = vtanh.pop %v4434
    %v4467 = vtanh.pop %v4435
    %v4468 = vtanh.pop %v4436
    %v4469 = vtanh.pop %v4437
    %v4470 = vtanh.pop %v4438
    %v4471 = vtanh.pop %v4439
    %4472 = vst [vmem:[%s5] sm:$0xff] %v4440
    %4473 = vst [vmem:[%s5 + $0x8] sm:$0xff] %v4441
    %4474 = vst [vmem:[%s5 + $0x10] sm:$0xff] %v4442
    %4475 = vst [vmem:[%s5 + $0x18] sm:$0xff] %v4443
    %4476 = vst [vmem:[%s5 + $0x20] sm:$0xff] %v4444
    %4477 = vst [vmem:[%s5 + $0x28] sm:$0xff] %v4445
    %4478 = vst [vmem:[%s5 + $0x30] sm:$0xff] %v4446
    %4479 = vst [vmem:[%s5 + $0x38] sm:$0xff] %v4447
    %4480 = vst [vmem:[%s5 + $0x40] sm:$0xff] %v4448
    %4481 = vst [vmem:[%s5 + $0x48] sm:$0xff] %v4449
    %4482 = vst [vmem:[%s5 + $0x50] sm:$0xff] %v4450
    %4483 = vst [vmem:[%s5 + $0x58] sm:$0xff] %v4451
    %4484 = vst [vmem:[%s5 + $0x60] sm:$0xff] %v4452
    %4485 = vst [vmem:[%s5 + $0x68] sm:$0xff] %v4453
    %4486 = vst [vmem:[%s5 + $0x70] sm:$0xff] %v4454
    %4487 = vst [vmem:[%s5 + $0x78] sm:$0xff] %v4455
    %4488 = vst [vmem:[%s5 + $0x80] sm:$0xff] %v4456
    %4489 = vst [vmem:[%s5 + $0x88] sm:$0xff] %v4457
    %4490 = vst [vmem:[%s5 + $0x90] sm:$0xff] %v4458
    %4491 = vst [vmem:[%s5 + $0x98] sm:$0xff] %v4459
    %4492 = vst [vmem:[%s5 + $0xa0] sm:$0xff] %v4460
    %4493 = vst [vmem:[%s5 + $0xa8] sm:$0xff] %v4461
    %4494 = vst [vmem:[%s5 + $0xb0] sm:$0xff] %v4462
    %4495 = vst [vmem:[%s5 + $0xb8] sm:$0xff] %v4463
    %4496 = vst [vmem:[%s5 + $0xc0] sm:$0xff] %v4464
    %4497 = vst [vmem:[%s5 + $0xc8] sm:$0xff] %v4465
    %4498 = vst [vmem:[%s5 + $0xd0] sm:$0xff] %v4466
    %4499 = vst [vmem:[%s5 + $0xd8] sm:$0xff] %v4467
    %4500 = vst [vmem:[%s5 + $0xe0] sm:$0xff] %v4468
    %4501 = vst [vmem:[%s5 + $0xe8] sm:$0xff] %v4469
    %4502 = vst [vmem:[%s5 + $0xf0] sm:$0xff] %v4470
    %4503 = vst [vmem:[%s5 + $0xf8] sm:$0xff] %v4471
  $region29: #{feature_conv_forward.1} parent=0 // pred_fallthru
    _
  // Predicated region
  $region30: #{feature_conv_forward.1} parent=0 // pred_check
    _
  $region31: #{feature_conv_forward.1} parent=0 // pred_check_branch
    %4505 = sbr.rel (0) target = $region33
  $region32: #{feature_conv_forward.1} parent=0 // pred_region
    _
  $region33: #{feature_conv_forward.1} parent=0 // pred_fallthru
    _
  // Predicated region
  $region34: #{feature_conv_forward.1} parent=0 // pred_check
    _
  $region35: #{feature_conv_forward.1} parent=0 // pred_check_branch
    %4507 = sbr.rel (0) target = $region37
  $region36: #{feature_conv_forward.1} parent=0 // pred_region
    _
  $region37: #{feature_conv_forward.1} parent=0 // pred_fallthru
    _

</llo_original>
